<compile_context>
chip_gen: v6e
topology: v6e:2x2x1
jax: 0.10.0
libtpu: 0.0.40
codegen_flags: <defaults>
</compile_context>

<pallas_src>
import functools

import jax
import jax.numpy as jnp
from jax import lax
from jax.experimental import pallas as pl
from jax.experimental.pallas import tpu as pltpu


def _round_up(x, m):
    return (x + m - 1) // m * m


def _pad2d(x, rows, cols):
    """Zero-pad a 2-D array up to (rows, cols); no-op if already that shape."""
    r, c = x.shape
    if r == rows and c == cols:
        return x
    return jnp.pad(x, ((0, rows - r), (0, cols - c)))


# --------------------------------------------------------------------------------------
# Fused (pre-act) -> matmul -> (+bias) -> (post-act) Pallas kernel
# --------------------------------------------------------------------------------------
def _fused_mm_kernel(*refs, pre_act, post_act, has_bias):
    if has_bias:
        a_ref, b_ref, bias_ref, o_ref, acc_ref = refs
    else:
        a_ref, b_ref, o_ref, acc_ref = refs
        bias_ref = None

    k = pl.program_id(2)

    @pl.when(k == 0)
    def _():
        acc_ref[...] = jnp.zeros_like(acc_ref)

    a = a_ref[...]
    if pre_act == "leaky":
        a = jnp.where(a > 0, a, 0.2 * a)          # LeakyReLU(0.2); act(0)=0 so zero pads stay 0
    elif pre_act == "relu":
        a = jnp.maximum(a, 0.0)

    acc_ref[...] += jnp.dot(a, b_ref[...], preferred_element_type=jnp.float32)

    @pl.when(k == pl.num_programs(2) - 1)
    def _():
        y = acc_ref[...]
        if has_bias:
            y = y + bias_ref[...]
        if post_act == "tanh":
            y = jnp.tanh(y)
        elif post_act == "relu":
            y = jnp.maximum(y, 0.0)
        elif post_act == "leaky":
            y = jnp.where(y > 0, y, 0.2 * y)
        o_ref[...] = y.astype(o_ref.dtype)


def fused_matmul(a, b, bias=None, pre_act=None, post_act=None):
    """a: [M, K], b: [K, N], bias: [N] or None -> [M, N] f32.

    Tiled over (M, N, K); bf16 operands with f32 accumulation; K/N zero-padded to
    multiples of 128 (lane-dense), M padded to a multiple of 8.
    """
    M, K = a.shape
    Kb, N = b.shape
    assert K == Kb

    tk = min(512, _round_up(K, 128))
    tn = min(256, _round_up(N, 128))
    tm = min(256, _round_up(M, 8))
    Kp = _round_up(K, tk)
    Np = _round_up(N, tn)
    Mp = _round_up(M, tm)

    a_p = _pad2d(a.astype(jnp.bfloat16), Mp, Kp)
    b_p = _pad2d(b.astype(jnp.bfloat16), Kp, Np)

    has_bias = bias is not None
    operands = [a_p, b_p]
    in_specs = [
        pl.BlockSpec((tm, tk), lambda i, j, k: (i, k)),
        pl.BlockSpec((tk, tn), lambda i, j, k: (k, j)),
    ]
    if has_bias:
        bias_p = _pad2d(bias.reshape(1, N).astype(jnp.float32), 1, Np)
        operands.append(bias_p)
        in_specs.append(pl.BlockSpec((1, tn), lambda i, j, k: (0, j)))

    grid = (Mp // tm, Np // tn, Kp // tk)
    kernel = functools.partial(_fused_mm_kernel, pre_act=pre_act,
                               post_act=post_act, has_bias=has_bias)
    out = pl.pallas_call(
        kernel,
        out_shape=jax.ShapeDtypeStruct((Mp, Np), jnp.float32),
        grid_spec=pltpu.PrefetchScalarGridSpec(
            num_scalar_prefetch=0,
            grid=grid,
            in_specs=in_specs,
            out_specs=pl.BlockSpec((tm, tn), lambda i, j, k: (i, j)),
            scratch_shapes=[pltpu.VMEM((tm, tn), jnp.float32)],
        ),
        compiler_params=pltpu.CompilerParams(
            dimension_semantics=("parallel", "parallel", "arbitrary")),
    )(*operands)
    return out[:M, :N]


# --------------------------------------------------------------------------------------
# BatchNorm2d (training-mode batch statistics, eps=1e-5)
# --------------------------------------------------------------------------------------
def _bn_fused_kernel(x_ref, g_ref, b_ref, o_ref, *, m_true, eps):
    # Padded rows are zero -> do not perturb the sums; normalize with the true row count.
    x = x_ref[...]
    s = jnp.sum(x, axis=0, keepdims=True)
    sq = jnp.sum(x * x, axis=0, keepdims=True)
    inv_m = 1.0 / m_true
    mean = s * inv_m
    var = sq * inv_m - mean * mean                 # biased variance (PyTorch BN forward)
    scale = g_ref[...] * lax.rsqrt(var + eps)
    shift = b_ref[...] - mean * scale
    o_ref[...] = x * scale + shift


def _bn_stats_kernel(x_ref, sum_ref, sq_ref):
    @pl.when(pl.program_id(0) == 0)
    def _():
        sum_ref[...] = jnp.zeros_like(sum_ref)
        sq_ref[...] = jnp.zeros_like(sq_ref)
    x = x_ref[...]
    sum_ref[...] += jnp.sum(x, axis=0, keepdims=True)
    sq_ref[...] += jnp.sum(x * x, axis=0, keepdims=True)


def _bn_apply_kernel(x_ref, scale_ref, shift_ref, o_ref):
    o_ref[...] = x_ref[...] * scale_ref[...] + shift_ref[...]


def batchnorm2d(x2d, gamma, beta, eps=1e-5):
    M, C = x2d.shape

    if M * C <= 1024:
        # Sub-vreg workload: per-pallas_call overhead dominates; let XLA fuse it.
        mean = jnp.mean(x2d, axis=0, keepdims=True)
        var = jnp.mean(jnp.square(x2d - mean), axis=0, keepdims=True)
        return (x2d - mean) * lax.rsqrt(var + eps) * gamma.reshape(1, C) + beta.reshape(1, C)

    if M * C * 4 <= (2 << 20):
        # Fits comfortably in VMEM: single fused pass (one pallas_call, one HBM read of x).
        Mp = _round_up(M, 8)
        xp = _pad2d(x2d, Mp, C)
        out = pl.pallas_call(
            functools.partial(_bn_fused_kernel, m_true=float(M), eps=eps),
            out_shape=jax.ShapeDtypeStruct((Mp, C), jnp.float32),
            grid_spec=pltpu.PrefetchScalarGridSpec(
                num_scalar_prefetch=0,
                grid=(1,),
                in_specs=[pl.BlockSpec((Mp, C), lambda i: (0, 0)),
                          pl.BlockSpec((1, C), lambda i: (0, 0)),
                          pl.BlockSpec((1, C), lambda i: (0, 0))],
                out_specs=pl.BlockSpec((Mp, C), lambda i: (0, 0)),
            ),
        )(xp, gamma.reshape(1, C), beta.reshape(1, C))
        return out[:M]

    # Large: tiled two-pass (partial sums accumulated over an "arbitrary" grid axis).
    tm = min(512, _round_up(M, 8))
    Mp = _round_up(M, tm)
    xp = _pad2d(x2d, Mp, C)                        # zero rows do not perturb the sums
    grid = (Mp // tm,)

    s, sq = pl.pallas_call(
        _bn_stats_kernel,
        out_shape=(jax.ShapeDtypeStruct((1, C), jnp.float32),
                   jax.ShapeDtypeStruct((1, C), jnp.float32)),
        grid_spec=pltpu.PrefetchScalarGridSpec(
            num_scalar_prefetch=0,
            grid=grid,
            in_specs=[pl.BlockSpec((tm, C), lambda i: (i, 0))],
            out_specs=(pl.BlockSpec((1, C), lambda i: (0, 0)),
                       pl.BlockSpec((1, C), lambda i: (0, 0))),
        ),
        compiler_params=pltpu.CompilerParams(dimension_semantics=("arbitrary",)),
    )(xp)

    mean = s / M
    var = sq / M - jnp.square(mean)                # biased variance (PyTorch BN forward)
    scale = gamma.reshape(1, C) * lax.rsqrt(var + eps)
    shift = beta.reshape(1, C) - mean * scale

    out = pl.pallas_call(
        _bn_apply_kernel,
        out_shape=jax.ShapeDtypeStruct((Mp, C), jnp.float32),
        grid_spec=pltpu.PrefetchScalarGridSpec(
            num_scalar_prefetch=0,
            grid=grid,
            in_specs=[pl.BlockSpec((tm, C), lambda i: (i, 0)),
                      pl.BlockSpec((1, C), lambda i: (0, 0)),
                      pl.BlockSpec((1, C), lambda i: (0, 0))],
            out_specs=pl.BlockSpec((tm, C), lambda i: (i, 0)),
        ),
        compiler_params=pltpu.CompilerParams(dimension_semantics=("parallel",)),
    )(xp, scale, shift)
    return out[:M]


def bn_nhwc(x, gamma, beta):
    N, H, W, C = x.shape
    return batchnorm2d(x.reshape(N * H * W, C), gamma, beta).reshape(N, H, W, C)


# --------------------------------------------------------------------------------------
# Conv / ConvTranspose built on the fused Pallas matmul kernel
# --------------------------------------------------------------------------------------
def conv2d_s2(x, w, bias=None, pre_act=None, post_act=None):
    """Conv2d(kernel=4, stride=2, padding=1). x: [N,H,W,Cin], w: PyTorch [Cout,Cin,4,4].
    `pre_act` is applied in-kernel to the patches (act(0)=0 so zero padding is preserved)."""
    N, H, W, Cin = x.shape
    Cout = w.shape[0]
    Ho, Wo = H // 2, W // 2
    xp = jnp.pad(x, ((0, 0), (1, 1), (1, 1), (0, 0)))
    cols = [xp[:, kh:kh + 2 * Ho:2, kw:kw + 2 * Wo:2, :]
            for kh in range(4) for kw in range(4)]
    patches = jnp.stack(cols, axis=3)                       # [N,Ho,Wo,16,Cin], K order (kh,kw,cin)
    a = patches.reshape(N * Ho * Wo, 16 * Cin)
    b = jnp.transpose(w, (2, 3, 1, 0)).reshape(16 * Cin, Cout)
    y = fused_matmul(a, b, bias, pre_act=pre_act, post_act=post_act)
    return y.reshape(N, Ho, Wo, Cout)


def convT2d_s2(x, w, bias=None, pre_act=None, post_act=None):
    """ConvTranspose2d(kernel=4, stride=2, padding=1) via sub-pixel decomposition:
    each output parity (rh, rw) is a 2x2 stride-1 conv -> 4x less MXU work than
    zero-dilated im2col. x: [N,H,W,Cin], w: PyTorch [Cin,Cout,4,4]."""
    N, H, W, Cin = x.shape
    Cout = w.shape[1]
    xp = jnp.pad(x, ((0, 0), (1, 1), (1, 1), (0, 0)))
    outs = []
    for rh in range(2):
        row = []
        for rw in range(2):
            taps = [xp[:, rh + da:rh + da + H, rw + db:rw + db + W, :]
                    for da in range(2) for db in range(2)]
            patches = jnp.stack(taps, axis=3)                # [N,H,W,4,Cin], K order (da,db,cin)
            a_mat = patches.reshape(N * H * W, 4 * Cin)
            # output[2p+rh] uses input row p-1+rh+da with kernel tap kh = 3-rh-2*da (same in W)
            wsub = jnp.stack(
                [jnp.stack([w[:, :, 3 - rh - 2 * da, 3 - rw - 2 * db]
                            for db in range(2)], axis=0)
                 for da in range(2)], axis=0)                # [2(da),2(db),Cin,Cout]
            b_mat = wsub.reshape(4 * Cin, Cout)
            y = fused_matmul(a_mat, b_mat, bias, pre_act=pre_act, post_act=post_act)
            row.append(y.reshape(N, H, W, Cout))
        outs.append(row)
    y = jnp.stack([jnp.stack(r, axis=0) for r in outs], axis=0)   # [2(rh),2(rw),N,H,W,C]
    y = jnp.transpose(y, (2, 3, 0, 4, 1, 5))                      # [N,H,rh,W,rw,C]
    return y.reshape(N, 2 * H, 2 * W, Cout)


# --------------------------------------------------------------------------------------
# U-Net parameter construction + forward (mirrors UnetSkipConnectionBlock exactly)
# --------------------------------------------------------------------------------------
def _make_block(key, outer_nc, inner_nc, input_nc=None, submodule=None,
                outermost=False, innermost=False):
    # norm_layer = BatchNorm2d  =>  use_bias = False for downconv / inner upconvs.
    if input_nc is None:
        input_nc = outer_nc
    k = jax.random.split(key, 4)
    blk = {"outermost": outermost, "innermost": innermost, "submodule": submodule}
    # downconv: Conv2d(input_nc, inner_nc, 4, 2, 1, bias=False)
    blk["down_w"] = 0.05 * jax.random.normal(k[0], (inner_nc, input_nc, 4, 4), jnp.float32)
    # downnorm only in intermediate blocks
    if (not outermost) and (not innermost):
        blk["down_bn"] = (jnp.ones((inner_nc,), jnp.float32), jnp.zeros((inner_nc,), jnp.float32))
    else:
        blk["down_bn"] = None
    # upconv
    up_in = inner_nc if innermost else inner_nc * 2
    blk["up_w"] = 0.05 * jax.random.normal(k[1], (up_in, outer_nc, 4, 4), jnp.float32)
    blk["up_bias"] = (0.05 * jax.random.normal(k[2], (outer_nc,), jnp.float32)
                      if outermost else None)                 # bias only for outermost upconv
    # upnorm applied in all but the outermost block
    if not outermost:
        blk["up_bn"] = (jnp.ones((outer_nc,), jnp.float32), jnp.zeros((outer_nc,), jnp.float32))
    else:
        blk["up_bn"] = None
    return blk


def init_unet_params(key, in_channels=3, out_channels=3, num_downs=5, ngf=8):
    keys = iter(jax.random.split(key, num_downs + 2))
    blk = _make_block(next(keys), ngf * 8, ngf * 8, innermost=True)
    for _ in range(num_downs - 5):
        blk = _make_block(next(keys), ngf * 8, ngf * 8, submodule=blk)
    blk = _make_block(next(keys), ngf * 4, ngf * 8, submodule=blk)
    blk = _make_block(next(keys), ngf * 2, ngf * 4, submodule=blk)
    blk = _make_block(next(keys), ngf, ngf * 2, submodule=blk)
    blk = _make_block(next(keys), out_channels, ngf, input_nc=in_channels,
                      submodule=blk, outermost=True)
    return blk


def unet_block_forward(x, blk):
    # downrelu fused into the downconv A-read (not applied for the outermost block)
    pre = None if blk["outermost"] else "leaky"
    h = conv2d_s2(x, blk["down_w"], bias=None, pre_act=pre)          # downconv (bias=False)
    if blk["down_bn"] is not None:
        h = bn_nhwc(h, *blk["down_bn"])                              # downnorm
    if blk["submodule"] is not None:
        h = unet_block_forward(h, blk["submodule"])
    # uprelu fused into the upconv A-read; Tanh fused into the outermost epilogue
    post = "tanh" if blk["outermost"] else None
    h = convT2d_s2(h, blk["up_w"], bias=blk["up_bias"], pre_act="relu", post_act=post)
    if blk["outermost"]:
        return h
    h = bn_nhwc(h, *blk["up_bn"])                                    # upnorm
    return jnp.concatenate([x, h], axis=-1)                          # skip: cat([x, model(x)], C)


def unet_generator(x_nchw, params):
    x = jnp.transpose(x_nchw.astype(jnp.float32), (0, 2, 3, 1))      # NCHW -> NHWC
    y = unet_block_forward(x, params)
    return jnp.transpose(y, (0, 3, 1, 2))                            # NHWC -> NCHW


if __name__ == "__main__":
    key = jax.random.PRNGKey(0)
    kx, kp = jax.random.split(key)

    # Small config consistent with the module: num_downs=5 => 32x32 input reaches 1x1 bottleneck.
    batch, in_ch, out_ch, spatial, ngf, num_downs = 2, 3, 3, 32, 8, 5
    x = jax.random.normal(kx, (batch, in_ch, spatial, spatial), jnp.float32)
    params = init_unet_params(kp, in_channels=in_ch, out_channels=out_ch,
                              num_downs=num_downs, ngf=ngf)

    fwd = jax.jit(lambda inp: unet_generator(inp, params))
    y = jax.block_until_ready(fwd(x))

    assert y.shape == (batch, out_ch, spatial, spatial), y.shape
    assert bool(jnp.all(jnp.isfinite(y)))
    print("KERNEL_OK")
</pallas_src>

<mosaic_0001>
module attributes {stable_mosaic.version = 11 : i64} {
  func.func @_fused_mm_kernel(%arg0: i32, %arg1: i32, %arg2: i32, %arg3: memref<256x128xbf16, #tpu.memory_space<vmem>>, %arg4: memref<128x128xbf16, #tpu.memory_space<vmem>>, %arg5: memref<256x128xf32, #tpu.memory_space<vmem>>, %arg6: memref<256x128xf32, #tpu.memory_space<vmem>>) attributes {dimension_semantics = [#tpu.dimension_semantics<parallel>, #tpu.dimension_semantics<parallel>, #tpu.dimension_semantics<arbitrary>], iteration_bounds = array<i64: 2, 1, 1>, scalar_prefetch = 0 : i64, scratch_operands = 1 : i64, tpu.core_type = #tpu.core_type<tc>, window_params = [{transform_indices = @transform_0, window_bounds = array<i64: 256, 128>}, {transform_indices = @transform_1, window_bounds = array<i64: 128, 128>}, {transform_indices = @transform_2, window_bounds = array<i64: 256, 128>}]} {
    %c0_i32 = arith.constant 0 : i32
    %0 = arith.cmpi eq, %arg2, %c0_i32 : i32
    %1 = arith.extui %0 : i1 to i32
    %c0_i32_0 = arith.constant 0 : i32
    %2 = arith.cmpi ne, %1, %c0_i32_0 : i32
    scf.if %2 {
      %cst_10 = arith.constant 0.000000e+00 : f32
      %12 = vector.broadcast %cst_10 : f32 to vector<256x128xf32>
      %c0_11 = arith.constant 0 : index
      %c0_12 = arith.constant 0 : index
      %13 = vector.load %arg6[%c0_11, %c0_12] : memref<256x128xf32, #tpu.memory_space<vmem>>, vector<256x128xf32>
      tpu.vector_store %arg6[%c0_11, %c0_12], %12 {strides = array<i32>} : memref<256x128xf32, #tpu.memory_space<vmem>>, vector<256x128xf32>,
    } else {
    }
    %c0 = arith.constant 0 : index
    %c0_1 = arith.constant 0 : index
    %3 = vector.load %arg3[%c0, %c0_1] : memref<256x128xbf16, #tpu.memory_space<vmem>>, vector<256x128xbf16>
    %c0_2 = arith.constant 0 : index
    %c0_3 = arith.constant 0 : index
    %4 = vector.load %arg6[%c0_2, %c0_3] : memref<256x128xf32, #tpu.memory_space<vmem>>, vector<256x128xf32>
    %c0_4 = arith.constant 0 : index
    %c0_5 = arith.constant 0 : index
    %5 = vector.load %arg4[%c0_4, %c0_5] : memref<128x128xbf16, #tpu.memory_space<vmem>>, vector<128x128xbf16>
    %cst = arith.constant dense<0.000000e+00> : vector<256x128xf32>
    %6 = tpu.matmul %3, %5, %cst {dimension_numbers = #tpu.dot_dimension_numbers<[1], [0], [0], [1], [0, 0, 1, 1], [], []>} : vector<256x128xbf16>, vector<128x128xbf16>, vector<256x128xf32> -> vector<256x128xf32>
    %7 = arith.addf %4, %6 : vector<256x128xf32>
    %c0_6 = arith.constant 0 : index
    %c0_7 = arith.constant 0 : index
    %8 = vector.load %arg6[%c0_6, %c0_7] : memref<256x128xf32, #tpu.memory_space<vmem>>, vector<256x128xf32>
    tpu.vector_store %arg6[%c0_6, %c0_7], %7 {strides = array<i32>} : memref<256x128xf32, #tpu.memory_space<vmem>>, vector<256x128xf32>,
    %c0_i32_8 = arith.constant 0 : i32
    %9 = arith.cmpi eq, %arg2, %c0_i32_8 : i32
    %10 = arith.extui %9 : i1 to i32
    %c0_i32_9 = arith.constant 0 : i32
    %11 = arith.cmpi ne, %10, %c0_i32_9 : i32
    scf.if %11 {
      %c0_10 = arith.constant 0 : index
      %c0_11 = arith.constant 0 : index
      %12 = vector.load %arg6[%c0_10, %c0_11] : memref<256x128xf32, #tpu.memory_space<vmem>>, vector<256x128xf32>
      %c0_12 = arith.constant 0 : index
      %c0_13 = arith.constant 0 : index
      %13 = vector.load %arg5[%c0_12, %c0_13] : memref<256x128xf32, #tpu.memory_space<vmem>>, vector<256x128xf32>
      tpu.vector_store %arg5[%c0_12, %c0_13], %12 {strides = array<i32>} : memref<256x128xf32, #tpu.memory_space<vmem>>, vector<256x128xf32>,
    } else {
    }
    return
  }
  func.func @transform_0(%arg0: i32, %arg1: i32, %arg2: i32) -> (i32, i32) {
    %c0_i32 = arith.constant 0 : i32
    return %arg0, %arg2 : i32, i32
  }
  func.func @transform_1(%arg0: i32, %arg1: i32, %arg2: i32) -> (i32, i32) {
    %c0_i32 = arith.constant 0 : i32
    return %arg2, %arg1 : i32, i32
  }
  func.func @transform_2(%arg0: i32, %arg1: i32, %arg2: i32) -> (i32, i32) {
    %c0_i32 = arith.constant 0 : i32
    return %arg0, %arg1 : i32, i32
  }
}

module attributes {stable_mosaic.version = 11 : i64} {
  func.func @_fused_mm_kernel(%arg0: i32, %arg1: i32, %arg2: i32, %arg3: memref<128x128xbf16, #tpu.memory_space<vmem>>, %arg4: memref<128x128xbf16, #tpu.memory_space<vmem>>, %arg5: memref<128x128xf32, #tpu.memory_space<vmem>>, %arg6: memref<128x128xf32, #tpu.memory_space<vmem>>) attributes {dimension_semantics = [#tpu.dimension_semantics<parallel>, #tpu.dimension_semantics<parallel>, #tpu.dimension_semantics<arbitrary>], iteration_bounds = array<i64: 1, 1, 1>, scalar_prefetch = 0 : i64, scratch_operands = 1 : i64, tpu.core_type = #tpu.core_type<tc>, window_params = [{transform_indices = @transform_0, window_bounds = array<i64: 128, 128>}, {transform_indices = @transform_1, window_bounds = array<i64: 128, 128>}, {transform_indices = @transform_2, window_bounds = array<i64: 128, 128>}]} {
    %c0_i32 = arith.constant 0 : i32
    %0 = arith.cmpi eq, %arg2, %c0_i32 : i32
    %1 = arith.extui %0 : i1 to i32
    %c0_i32_0 = arith.constant 0 : i32
    %2 = arith.cmpi ne, %1, %c0_i32_0 : i32
    scf.if %2 {
      %cst_12 = arith.constant 0.000000e+00 : f32
      %17 = vector.broadcast %cst_12 : f32 to vector<128x128xf32>
      %c0_13 = arith.constant 0 : index
      %c0_14 = arith.constant 0 : index
      %18 = vector.load %arg6[%c0_13, %c0_14] : memref<128x128xf32, #tpu.memory_space<vmem>>, vector<128x128xf32>
      tpu.vector_store %arg6[%c0_13, %c0_14], %17 {strides = array<i32>} : memref<128x128xf32, #tpu.memory_space<vmem>>, vector<128x128xf32>,
    } else {
    }
    %c0 = arith.constant 0 : index
    %c0_1 = arith.constant 0 : index
    %3 = vector.load %arg3[%c0, %c0_1] : memref<128x128xbf16, #tpu.memory_space<vmem>>, vector<128x128xbf16>
    %cst = arith.constant 0.000000e+00 : bf16
    %4 = vector.broadcast %cst : bf16 to vector<128x128xbf16>
    %5 = arith.cmpf ogt, %3, %4 : vector<128x128xbf16>
    %cst_2 = arith.constant 2.001950e-01 : bf16
    %6 = vector.broadcast %cst_2 : bf16 to vector<128x128xbf16>
    %7 = arith.mulf %6, %3 : vector<128x128xbf16>
    %8 = arith.select %5, %3, %7 : vector<128x128xi1>, vector<128x128xbf16>
    %c0_3 = arith.constant 0 : index
    %c0_4 = arith.constant 0 : index
    %9 = vector.load %arg6[%c0_3, %c0_4] : memref<128x128xf32, #tpu.memory_space<vmem>>, vector<128x128xf32>
    %c0_5 = arith.constant 0 : index
    %c0_6 = arith.constant 0 : index
    %10 = vector.load %arg4[%c0_5, %c0_6] : memref<128x128xbf16, #tpu.memory_space<vmem>>, vector<128x128xbf16>
    %cst_7 = arith.constant dense<0.000000e+00> : vector<128x128xf32>
    %11 = tpu.matmul %8, %10, %cst_7 {dimension_numbers = #tpu.dot_dimension_numbers<[1], [0], [0], [1], [0, 0, 1, 1], [], []>} : vector<128x128xbf16>, vector<128x128xbf16>, vector<128x128xf32> -> vector<128x128xf32>
    %12 = arith.addf %9, %11 : vector<128x128xf32>
    %c0_8 = arith.constant 0 : index
    %c0_9 = arith.constant 0 : index
    %13 = vector.load %arg6[%c0_8, %c0_9] : memref<128x128xf32, #tpu.memory_space<vmem>>, vector<128x128xf32>
    tpu.vector_store %arg6[%c0_8, %c0_9], %12 {strides = array<i32>} : memref<128x128xf32, #tpu.memory_space<vmem>>, vector<128x128xf32>,
    %c0_i32_10 = arith.constant 0 : i32
    %14 = arith.cmpi eq, %arg2, %c0_i32_10 : i32
    %15 = arith.extui %14 : i1 to i32
    %c0_i32_11 = arith.constant 0 : i32
    %16 = arith.cmpi ne, %15, %c0_i32_11 : i32
    scf.if %16 {
      %c0_12 = arith.constant 0 : index
      %c0_13 = arith.constant 0 : index
      %17 = vector.load %arg6[%c0_12, %c0_13] : memref<128x128xf32, #tpu.memory_space<vmem>>, vector<128x128xf32>
      %c0_14 = arith.constant 0 : index
      %c0_15 = arith.constant 0 : index
      %18 = vector.load %arg5[%c0_14, %c0_15] : memref<128x128xf32, #tpu.memory_space<vmem>>, vector<128x128xf32>
      tpu.vector_store %arg5[%c0_14, %c0_15], %17 {strides = array<i32>} : memref<128x128xf32, #tpu.memory_space<vmem>>, vector<128x128xf32>,
    } else {
    }
    return
  }
  func.func @transform_0(%arg0: i32, %arg1: i32, %arg2: i32) -> (i32, i32) {
    %c0_i32 = arith.constant 0 : i32
    return %arg0, %arg2 : i32, i32
  }
  func.func @transform_1(%arg0: i32, %arg1: i32, %arg2: i32) -> (i32, i32) {
    %c0_i32 = arith.constant 0 : i32
    return %arg2, %arg1 : i32, i32
  }
  func.func @transform_2(%arg0: i32, %arg1: i32, %arg2: i32) -> (i32, i32) {
    %c0_i32 = arith.constant 0 : i32
    return %arg0, %arg1 : i32, i32
  }
}

module attributes {stable_mosaic.version = 11 : i64} {
  func.func @_bn_fused_kernel(%arg0: i32, %arg1: memref<128x16xf32, #tpu.memory_space<vmem>>, %arg2: memref<1x16xf32, #tpu.memory_space<vmem>>, %arg3: memref<1x16xf32, #tpu.memory_space<vmem>>, %arg4: memref<128x16xf32, #tpu.memory_space<vmem>>) attributes {dimension_semantics = [#tpu.dimension_semantics<arbitrary>], iteration_bounds = array<i64: 1>, scalar_prefetch = 0 : i64, scratch_operands = 0 : i64, tpu.core_type = #tpu.core_type<tc>, window_params = [{pipeline_mode = #tpu.pipeline_mode<synchronous>, transform_indices = @transform_0, window_bounds = array<i64: 128, 16>}, {pipeline_mode = #tpu.pipeline_mode<synchronous>, transform_indices = @transform_1, window_bounds = array<i64: 1, 16>}, {pipeline_mode = #tpu.pipeline_mode<synchronous>, transform_indices = @transform_2, window_bounds = array<i64: 1, 16>}, {pipeline_mode = #tpu.pipeline_mode<synchronous>, transform_indices = @transform_3, window_bounds = array<i64: 128, 16>}]} {
    %c0 = arith.constant 0 : index
    %c0_0 = arith.constant 0 : index
    %0 = vector.load %arg1[%c0, %c0_0] : memref<128x16xf32, #tpu.memory_space<vmem>>, vector<128x16xf32>
    %cst = arith.constant dense<0.000000e+00> : vector<16xf32>
    %1 = vector.multi_reduction <add>, %0, %cst [0] : vector<128x16xf32> to vector<16xf32>
    %2 = vector.shape_cast %1 : vector<16xf32> to vector<1x16xf32>
    %3 = arith.mulf %0, %0 : vector<128x16xf32>
    %cst_1 = arith.constant dense<0.000000e+00> : vector<16xf32>
    %4 = vector.multi_reduction <add>, %3, %cst_1 [0] : vector<128x16xf32> to vector<16xf32>
    %5 = vector.shape_cast %4 : vector<16xf32> to vector<1x16xf32>
    %cst_2 = arith.constant 7.812500e-03 : f32
    %6 = vector.broadcast %cst_2 : f32 to vector<1x16xf32>
    %7 = arith.mulf %2, %6 : vector<1x16xf32>
    %cst_3 = arith.constant 7.812500e-03 : f32
    %8 = vector.broadcast %cst_3 : f32 to vector<1x16xf32>
    %9 = arith.mulf %5, %8 : vector<1x16xf32>
    %10 = arith.mulf %7, %7 : vector<1x16xf32>
    %11 = arith.subf %9, %10 : vector<1x16xf32>
    %c0_4 = arith.constant 0 : index
    %c0_5 = arith.constant 0 : index
    %12 = vector.load %arg2[%c0_4, %c0_5] : memref<1x16xf32, #tpu.memory_space<vmem>>, vector<1x16xf32>
    %cst_6 = arith.constant 9.99999974E-6 : f32
    %13 = vector.broadcast %cst_6 : f32 to vector<1x16xf32>
    %14 = arith.addf %11, %13 : vector<1x16xf32>
    %15 = math.rsqrt %14 : vector<1x16xf32>
    %16 = arith.mulf %12, %15 : vector<1x16xf32>
    %c0_7 = arith.constant 0 : index
    %c0_8 = arith.constant 0 : index
    %17 = vector.load %arg3[%c0_7, %c0_8] : memref<1x16xf32, #tpu.memory_space<vmem>>, vector<1x16xf32>
    %18 = arith.mulf %7, %16 : vector<1x16xf32>
    %19 = arith.subf %17, %18 : vector<1x16xf32>
    %20 = vector.broadcast %16 : vector<1x16xf32> to vector<128x16xf32>
    %21 = arith.mulf %0, %20 : vector<128x16xf32>
    %22 = vector.broadcast %19 : vector<1x16xf32> to vector<128x16xf32>
    %23 = arith.addf %21, %22 : vector<128x16xf32>
    %c0_9 = arith.constant 0 : index
    %c0_10 = arith.constant 0 : index
    %24 = vector.load %arg4[%c0_9, %c0_10] : memref<128x16xf32, #tpu.memory_space<vmem>>, vector<128x16xf32>
    tpu.vector_store %arg4[%c0_9, %c0_10], %23 {strides = array<i32>} : memref<128x16xf32, #tpu.memory_space<vmem>>, vector<128x16xf32>,
    return
  }
  func.func @transform_0(%arg0: i32) -> (i32, i32) {
    %c0_i32 = arith.constant 0 : i32
    %c0_i32_0 = arith.constant 0 : i32
    %c0_i32_1 = arith.constant 0 : i32
    return %c0_i32, %c0_i32_0 : i32, i32
  }
  func.func @transform_1(%arg0: i32) -> (i32, i32) {
    %c0_i32 = arith.constant 0 : i32
    %c0_i32_0 = arith.constant 0 : i32
    %c0_i32_1 = arith.constant 0 : i32
    return %c0_i32, %c0_i32_0 : i32, i32
  }
  func.func @transform_2(%arg0: i32) -> (i32, i32) {
    %c0_i32 = arith.constant 0 : i32
    %c0_i32_0 = arith.constant 0 : i32
    %c0_i32_1 = arith.constant 0 : i32
    return %c0_i32, %c0_i32_0 : i32, i32
  }
  func.func @transform_3(%arg0: i32) -> (i32, i32) {
    %c0_i32 = arith.constant 0 : i32
    %c0_i32_0 = arith.constant 0 : i32
    %c0_i32_1 = arith.constant 0 : i32
    return %c0_i32, %c0_i32_0 : i32, i32
  }
}

module attributes {stable_mosaic.version = 11 : i64} {
  func.func @_fused_mm_kernel(%arg0: i32, %arg1: i32, %arg2: i32, %arg3: memref<32x256xbf16, #tpu.memory_space<vmem>>, %arg4: memref<256x128xbf16, #tpu.memory_space<vmem>>, %arg5: memref<32x128xf32, #tpu.memory_space<vmem>>, %arg6: memref<32x128xf32, #tpu.memory_space<vmem>>) attributes {dimension_semantics = [#tpu.dimension_semantics<parallel>, #tpu.dimension_semantics<parallel>, #tpu.dimension_semantics<arbitrary>], iteration_bounds = array<i64: 1, 1, 1>, scalar_prefetch = 0 : i64, scratch_operands = 1 : i64, tpu.core_type = #tpu.core_type<tc>, window_params = [{transform_indices = @transform_0, window_bounds = array<i64: 32, 256>}, {transform_indices = @transform_1, window_bounds = array<i64: 256, 128>}, {transform_indices = @transform_2, window_bounds = array<i64: 32, 128>}]} {
    %c0_i32 = arith.constant 0 : i32
    %0 = arith.cmpi eq, %arg2, %c0_i32 : i32
    %1 = arith.extui %0 : i1 to i32
    %c0_i32_0 = arith.constant 0 : i32
    %2 = arith.cmpi ne, %1, %c0_i32_0 : i32
    scf.if %2 {
      %cst_12 = arith.constant 0.000000e+00 : f32
      %17 = vector.broadcast %cst_12 : f32 to vector<32x128xf32>
      %c0_13 = arith.constant 0 : index
      %c0_14 = arith.constant 0 : index
      %18 = vector.load %arg6[%c0_13, %c0_14] : memref<32x128xf32, #tpu.memory_space<vmem>>, vector<32x128xf32>
      tpu.vector_store %arg6[%c0_13, %c0_14], %17 {strides = array<i32>} : memref<32x128xf32, #tpu.memory_space<vmem>>, vector<32x128xf32>,
    } else {
    }
    %c0 = arith.constant 0 : index
    %c0_1 = arith.constant 0 : index
    %3 = vector.load %arg3[%c0, %c0_1] : memref<32x256xbf16, #tpu.memory_space<vmem>>, vector<32x256xbf16>
    %cst = arith.constant 0.000000e+00 : bf16
    %4 = vector.broadcast %cst : bf16 to vector<32x256xbf16>
    %5 = arith.cmpf ogt, %3, %4 : vector<32x256xbf16>
    %cst_2 = arith.constant 2.001950e-01 : bf16
    %6 = vector.broadcast %cst_2 : bf16 to vector<32x256xbf16>
    %7 = arith.mulf %6, %3 : vector<32x256xbf16>
    %8 = arith.select %5, %3, %7 : vector<32x256xi1>, vector<32x256xbf16>
    %c0_3 = arith.constant 0 : index
    %c0_4 = arith.constant 0 : index
    %9 = vector.load %arg6[%c0_3, %c0_4] : memref<32x128xf32, #tpu.memory_space<vmem>>, vector<32x128xf32>
    %c0_5 = arith.constant 0 : index
    %c0_6 = arith.constant 0 : index
    %10 = vector.load %arg4[%c0_5, %c0_6] : memref<256x128xbf16, #tpu.memory_space<vmem>>, vector<256x128xbf16>
    %cst_7 = arith.constant dense<0.000000e+00> : vector<32x128xf32>
    %11 = tpu.matmul %8, %10, %cst_7 {dimension_numbers = #tpu.dot_dimension_numbers<[1], [0], [0], [1], [0, 0, 1, 1], [], []>} : vector<32x256xbf16>, vector<256x128xbf16>, vector<32x128xf32> -> vector<32x128xf32>
    %12 = arith.addf %9, %11 : vector<32x128xf32>
    %c0_8 = arith.constant 0 : index
    %c0_9 = arith.constant 0 : index
    %13 = vector.load %arg6[%c0_8, %c0_9] : memref<32x128xf32, #tpu.memory_space<vmem>>, vector<32x128xf32>
    tpu.vector_store %arg6[%c0_8, %c0_9], %12 {strides = array<i32>} : memref<32x128xf32, #tpu.memory_space<vmem>>, vector<32x128xf32>,
    %c0_i32_10 = arith.constant 0 : i32
    %14 = arith.cmpi eq, %arg2, %c0_i32_10 : i32
    %15 = arith.extui %14 : i1 to i32
    %c0_i32_11 = arith.constant 0 : i32
    %16 = arith.cmpi ne, %15, %c0_i32_11 : i32
    scf.if %16 {
      %c0_12 = arith.constant 0 : index
      %c0_13 = arith.constant 0 : index
      %17 = vector.load %arg6[%c0_12, %c0_13] : memref<32x128xf32, #tpu.memory_space<vmem>>, vector<32x128xf32>
      %c0_14 = arith.constant 0 : index
      %c0_15 = arith.constant 0 : index
      %18 = vector.load %arg5[%c0_14, %c0_15] : memref<32x128xf32, #tpu.memory_space<vmem>>, vector<32x128xf32>
      tpu.vector_store %arg5[%c0_14, %c0_15], %17 {strides = array<i32>} : memref<32x128xf32, #tpu.memory_space<vmem>>, vector<32x128xf32>,
    } else {
    }
    return
  }
  func.func @transform_0(%arg0: i32, %arg1: i32, %arg2: i32) -> (i32, i32) {
    %c0_i32 = arith.constant 0 : i32
    return %arg0, %arg2 : i32, i32
  }
  func.func @transform_1(%arg0: i32, %arg1: i32, %arg2: i32) -> (i32, i32) {
    %c0_i32 = arith.constant 0 : i32
    return %arg2, %arg1 : i32, i32
  }
  func.func @transform_2(%arg0: i32, %arg1: i32, %arg2: i32) -> (i32, i32) {
    %c0_i32 = arith.constant 0 : i32
    return %arg0, %arg1 : i32, i32
  }
}

module attributes {stable_mosaic.version = 11 : i64} {
  func.func @_fused_mm_kernel(%arg0: i32, %arg1: i32, %arg2: i32, %arg3: memref<8x512xbf16, #tpu.memory_space<vmem>>, %arg4: memref<512x128xbf16, #tpu.memory_space<vmem>>, %arg5: memref<8x128xf32, #tpu.memory_space<vmem>>, %arg6: memref<8x128xf32, #tpu.memory_space<vmem>>) attributes {dimension_semantics = [#tpu.dimension_semantics<parallel>, #tpu.dimension_semantics<parallel>, #tpu.dimension_semantics<arbitrary>], iteration_bounds = array<i64: 1, 1, 1>, scalar_prefetch = 0 : i64, scratch_operands = 1 : i64, tpu.core_type = #tpu.core_type<tc>, window_params = [{transform_indices = @transform_0, window_bounds = array<i64: 8, 512>}, {transform_indices = @transform_1, window_bounds = array<i64: 512, 128>}, {transform_indices = @transform_2, window_bounds = array<i64: 8, 128>}]} {
    %c0_i32 = arith.constant 0 : i32
    %0 = arith.cmpi eq, %arg2, %c0_i32 : i32
    %1 = arith.extui %0 : i1 to i32
    %c0_i32_0 = arith.constant 0 : i32
    %2 = arith.cmpi ne, %1, %c0_i32_0 : i32
    scf.if %2 {
      %cst_12 = arith.constant 0.000000e+00 : f32
      %17 = vector.broadcast %cst_12 : f32 to vector<8x128xf32>
      %c0_13 = arith.constant 0 : index
      %c0_14 = arith.constant 0 : index
      %18 = vector.load %arg6[%c0_13, %c0_14] : memref<8x128xf32, #tpu.memory_space<vmem>>, vector<8x128xf32>
      tpu.vector_store %arg6[%c0_13, %c0_14], %17 {strides = array<i32>} : memref<8x128xf32, #tpu.memory_space<vmem>>, vector<8x128xf32>,
    } else {
    }
    %c0 = arith.constant 0 : index
    %c0_1 = arith.constant 0 : index
    %3 = vector.load %arg3[%c0, %c0_1] : memref<8x512xbf16, #tpu.memory_space<vmem>>, vector<8x512xbf16>
    %cst = arith.constant 0.000000e+00 : bf16
    %4 = vector.broadcast %cst : bf16 to vector<8x512xbf16>
    %5 = arith.cmpf ogt, %3, %4 : vector<8x512xbf16>
    %cst_2 = arith.constant 2.001950e-01 : bf16
    %6 = vector.broadcast %cst_2 : bf16 to vector<8x512xbf16>
    %7 = arith.mulf %6, %3 : vector<8x512xbf16>
    %8 = arith.select %5, %3, %7 : vector<8x512xi1>, vector<8x512xbf16>
    %c0_3 = arith.constant 0 : index
    %c0_4 = arith.constant 0 : index
    %9 = vector.load %arg6[%c0_3, %c0_4] : memref<8x128xf32, #tpu.memory_space<vmem>>, vector<8x128xf32>
    %c0_5 = arith.constant 0 : index
    %c0_6 = arith.constant 0 : index
    %10 = vector.load %arg4[%c0_5, %c0_6] : memref<512x128xbf16, #tpu.memory_space<vmem>>, vector<512x128xbf16>
    %cst_7 = arith.constant dense<0.000000e+00> : vector<8x128xf32>
    %11 = tpu.matmul %8, %10, %cst_7 {dimension_numbers = #tpu.dot_dimension_numbers<[1], [0], [0], [1], [0, 0, 1, 1], [], []>} : vector<8x512xbf16>, vector<512x128xbf16>, vector<8x128xf32> -> vector<8x128xf32>
    %12 = arith.addf %9, %11 : vector<8x128xf32>
    %c0_8 = arith.constant 0 : index
    %c0_9 = arith.constant 0 : index
    %13 = vector.load %arg6[%c0_8, %c0_9] : memref<8x128xf32, #tpu.memory_space<vmem>>, vector<8x128xf32>
    tpu.vector_store %arg6[%c0_8, %c0_9], %12 {strides = array<i32>} : memref<8x128xf32, #tpu.memory_space<vmem>>, vector<8x128xf32>,
    %c0_i32_10 = arith.constant 0 : i32
    %14 = arith.cmpi eq, %arg2, %c0_i32_10 : i32
    %15 = arith.extui %14 : i1 to i32
    %c0_i32_11 = arith.constant 0 : i32
    %16 = arith.cmpi ne, %15, %c0_i32_11 : i32
    scf.if %16 {
      %c0_12 = arith.constant 0 : index
      %c0_13 = arith.constant 0 : index
      %17 = vector.load %arg6[%c0_12, %c0_13] : memref<8x128xf32, #tpu.memory_space<vmem>>, vector<8x128xf32>
      %c0_14 = arith.constant 0 : index
      %c0_15 = arith.constant 0 : index
      %18 = vector.load %arg5[%c0_14, %c0_15] : memref<8x128xf32, #tpu.memory_space<vmem>>, vector<8x128xf32>
      tpu.vector_store %arg5[%c0_14, %c0_15], %17 {strides = array<i32>} : memref<8x128xf32, #tpu.memory_space<vmem>>, vector<8x128xf32>,
    } else {
    }
    return
  }
  func.func @transform_0(%arg0: i32, %arg1: i32, %arg2: i32) -> (i32, i32) {
    %c0_i32 = arith.constant 0 : i32
    return %arg0, %arg2 : i32, i32
  }
  func.func @transform_1(%arg0: i32, %arg1: i32, %arg2: i32) -> (i32, i32) {
    %c0_i32 = arith.constant 0 : i32
    return %arg2, %arg1 : i32, i32
  }
  func.func @transform_2(%arg0: i32, %arg1: i32, %arg2: i32) -> (i32, i32) {
    %c0_i32 = arith.constant 0 : i32
    return %arg0, %arg1 : i32, i32
  }
}

module attributes {stable_mosaic.version = 11 : i64} {
  func.func @_fused_mm_kernel(%arg0: i32, %arg1: i32, %arg2: i32, %arg3: memref<8x512xbf16, #tpu.memory_space<vmem>>, %arg4: memref<512x128xbf16, #tpu.memory_space<vmem>>, %arg5: memref<8x128xf32, #tpu.memory_space<vmem>>, %arg6: memref<8x128xf32, #tpu.memory_space<vmem>>) attributes {dimension_semantics = [#tpu.dimension_semantics<parallel>, #tpu.dimension_semantics<parallel>, #tpu.dimension_semantics<arbitrary>], iteration_bounds = array<i64: 1, 1, 2>, scalar_prefetch = 0 : i64, scratch_operands = 1 : i64, tpu.core_type = #tpu.core_type<tc>, window_params = [{transform_indices = @transform_0, window_bounds = array<i64: 8, 512>}, {transform_indices = @transform_1, window_bounds = array<i64: 512, 128>}, {transform_indices = @transform_2, window_bounds = array<i64: 8, 128>}]} {
    %c0_i32 = arith.constant 0 : i32
    %0 = arith.cmpi eq, %arg2, %c0_i32 : i32
    %1 = arith.extui %0 : i1 to i32
    %c0_i32_0 = arith.constant 0 : i32
    %2 = arith.cmpi ne, %1, %c0_i32_0 : i32
    scf.if %2 {
      %cst_11 = arith.constant 0.000000e+00 : f32
      %17 = vector.broadcast %cst_11 : f32 to vector<8x128xf32>
      %c0_12 = arith.constant 0 : index
      %c0_13 = arith.constant 0 : index
      %18 = vector.load %arg6[%c0_12, %c0_13] : memref<8x128xf32, #tpu.memory_space<vmem>>, vector<8x128xf32>
      tpu.vector_store %arg6[%c0_12, %c0_13], %17 {strides = array<i32>} : memref<8x128xf32, #tpu.memory_space<vmem>>, vector<8x128xf32>,
    } else {
    }
    %c0 = arith.constant 0 : index
    %c0_1 = arith.constant 0 : index
    %3 = vector.load %arg3[%c0, %c0_1] : memref<8x512xbf16, #tpu.memory_space<vmem>>, vector<8x512xbf16>
    %cst = arith.constant 0.000000e+00 : bf16
    %4 = vector.broadcast %cst : bf16 to vector<8x512xbf16>
    %5 = arith.cmpf ogt, %3, %4 : vector<8x512xbf16>
    %cst_2 = arith.constant 2.001950e-01 : bf16
    %6 = vector.broadcast %cst_2 : bf16 to vector<8x512xbf16>
    %7 = arith.mulf %6, %3 : vector<8x512xbf16>
    %8 = arith.select %5, %3, %7 : vector<8x512xi1>, vector<8x512xbf16>
    %c0_3 = arith.constant 0 : index
    %c0_4 = arith.constant 0 : index
    %9 = vector.load %arg6[%c0_3, %c0_4] : memref<8x128xf32, #tpu.memory_space<vmem>>, vector<8x128xf32>
    %c0_5 = arith.constant 0 : index
    %c0_6 = arith.constant 0 : index
    %10 = vector.load %arg4[%c0_5, %c0_6] : memref<512x128xbf16, #tpu.memory_space<vmem>>, vector<512x128xbf16>
    %cst_7 = arith.constant dense<0.000000e+00> : vector<8x128xf32>
    %11 = tpu.matmul %8, %10, %cst_7 {dimension_numbers = #tpu.dot_dimension_numbers<[1], [0], [0], [1], [0, 0, 1, 1], [], []>} : vector<8x512xbf16>, vector<512x128xbf16>, vector<8x128xf32> -> vector<8x128xf32>
    %12 = arith.addf %9, %11 : vector<8x128xf32>
    %c0_8 = arith.constant 0 : index
    %c0_9 = arith.constant 0 : index
    %13 = vector.load %arg6[%c0_8, %c0_9] : memref<8x128xf32, #tpu.memory_space<vmem>>, vector<8x128xf32>
    tpu.vector_store %arg6[%c0_8, %c0_9], %12 {strides = array<i32>} : memref<8x128xf32, #tpu.memory_space<vmem>>, vector<8x128xf32>,
    %c1_i32 = arith.constant 1 : i32
    %14 = arith.cmpi eq, %arg2, %c1_i32 : i32
    %15 = arith.extui %14 : i1 to i32
    %c0_i32_10 = arith.constant 0 : i32
    %16 = arith.cmpi ne, %15, %c0_i32_10 : i32
    scf.if %16 {
      %c0_11 = arith.constant 0 : index
      %c0_12 = arith.constant 0 : index
      %17 = vector.load %arg6[%c0_11, %c0_12] : memref<8x128xf32, #tpu.memory_space<vmem>>, vector<8x128xf32>
      %c0_13 = arith.constant 0 : index
      %c0_14 = arith.constant 0 : index
      %18 = vector.load %arg5[%c0_13, %c0_14] : memref<8x128xf32, #tpu.memory_space<vmem>>, vector<8x128xf32>
      tpu.vector_store %arg5[%c0_13, %c0_14], %17 {strides = array<i32>} : memref<8x128xf32, #tpu.memory_space<vmem>>, vector<8x128xf32>,
    } else {
    }
    return
  }
  func.func @transform_0(%arg0: i32, %arg1: i32, %arg2: i32) -> (i32, i32) {
    %c0_i32 = arith.constant 0 : i32
    return %arg0, %arg2 : i32, i32
  }
  func.func @transform_1(%arg0: i32, %arg1: i32, %arg2: i32) -> (i32, i32) {
    %c0_i32 = arith.constant 0 : i32
    return %arg2, %arg1 : i32, i32
  }
  func.func @transform_2(%arg0: i32, %arg1: i32, %arg2: i32) -> (i32, i32) {
    %c0_i32 = arith.constant 0 : i32
    return %arg0, %arg1 : i32, i32
  }
}

module attributes {stable_mosaic.version = 11 : i64} {
  func.func @_fused_mm_kernel(%arg0: i32, %arg1: i32, %arg2: i32, %arg3: memref<8x256xbf16, #tpu.memory_space<vmem>>, %arg4: memref<256x128xbf16, #tpu.memory_space<vmem>>, %arg5: memref<8x128xf32, #tpu.memory_space<vmem>>, %arg6: memref<8x128xf32, #tpu.memory_space<vmem>>) attributes {dimension_semantics = [#tpu.dimension_semantics<parallel>, #tpu.dimension_semantics<parallel>, #tpu.dimension_semantics<arbitrary>], iteration_bounds = array<i64: 1, 1, 1>, scalar_prefetch = 0 : i64, scratch_operands = 1 : i64, tpu.core_type = #tpu.core_type<tc>, window_params = [{transform_indices = @transform_0, window_bounds = array<i64: 8, 256>}, {transform_indices = @transform_1, window_bounds = array<i64: 256, 128>}, {transform_indices = @transform_2, window_bounds = array<i64: 8, 128>}]} {
    %c0_i32 = arith.constant 0 : i32
    %0 = arith.cmpi eq, %arg2, %c0_i32 : i32
    %1 = arith.extui %0 : i1 to i32
    %c0_i32_0 = arith.constant 0 : i32
    %2 = arith.cmpi ne, %1, %c0_i32_0 : i32
    scf.if %2 {
      %cst_11 = arith.constant 0.000000e+00 : f32
      %14 = vector.broadcast %cst_11 : f32 to vector<8x128xf32>
      %c0_12 = arith.constant 0 : index
      %c0_13 = arith.constant 0 : index
      %15 = vector.load %arg6[%c0_12, %c0_13] : memref<8x128xf32, #tpu.memory_space<vmem>>, vector<8x128xf32>
      tpu.vector_store %arg6[%c0_12, %c0_13], %14 {strides = array<i32>} : memref<8x128xf32, #tpu.memory_space<vmem>>, vector<8x128xf32>,
    } else {
    }
    %c0 = arith.constant 0 : index
    %c0_1 = arith.constant 0 : index
    %3 = vector.load %arg3[%c0, %c0_1] : memref<8x256xbf16, #tpu.memory_space<vmem>>, vector<8x256xbf16>
    %cst = arith.constant 0.000000e+00 : bf16
    %4 = vector.broadcast %cst : bf16 to vector<8x256xbf16>
    %5 = arith.maximumf %3, %4 : vector<8x256xbf16>
    %c0_2 = arith.constant 0 : index
    %c0_3 = arith.constant 0 : index
    %6 = vector.load %arg6[%c0_2, %c0_3] : memref<8x128xf32, #tpu.memory_space<vmem>>, vector<8x128xf32>
    %c0_4 = arith.constant 0 : index
    %c0_5 = arith.constant 0 : index
    %7 = vector.load %arg4[%c0_4, %c0_5] : memref<256x128xbf16, #tpu.memory_space<vmem>>, vector<256x128xbf16>
    %cst_6 = arith.constant dense<0.000000e+00> : vector<8x128xf32>
    %8 = tpu.matmul %5, %7, %cst_6 {dimension_numbers = #tpu.dot_dimension_numbers<[1], [0], [0], [1], [0, 0, 1, 1], [], []>} : vector<8x256xbf16>, vector<256x128xbf16>, vector<8x128xf32> -> vector<8x128xf32>
    %9 = arith.addf %6, %8 : vector<8x128xf32>
    %c0_7 = arith.constant 0 : index
    %c0_8 = arith.constant 0 : index
    %10 = vector.load %arg6[%c0_7, %c0_8] : memref<8x128xf32, #tpu.memory_space<vmem>>, vector<8x128xf32>
    tpu.vector_store %arg6[%c0_7, %c0_8], %9 {strides = array<i32>} : memref<8x128xf32, #tpu.memory_space<vmem>>, vector<8x128xf32>,
    %c0_i32_9 = arith.constant 0 : i32
    %11 = arith.cmpi eq, %arg2, %c0_i32_9 : i32
    %12 = arith.extui %11 : i1 to i32
    %c0_i32_10 = arith.constant 0 : i32
    %13 = arith.cmpi ne, %12, %c0_i32_10 : i32
    scf.if %13 {
      %c0_11 = arith.constant 0 : index
      %c0_12 = arith.constant 0 : index
      %14 = vector.load %arg6[%c0_11, %c0_12] : memref<8x128xf32, #tpu.memory_space<vmem>>, vector<8x128xf32>
      %c0_13 = arith.constant 0 : index
      %c0_14 = arith.constant 0 : index
      %15 = vector.load %arg5[%c0_13, %c0_14] : memref<8x128xf32, #tpu.memory_space<vmem>>, vector<8x128xf32>
      tpu.vector_store %arg5[%c0_13, %c0_14], %14 {strides = array<i32>} : memref<8x128xf32, #tpu.memory_space<vmem>>, vector<8x128xf32>,
    } else {
    }
    return
  }
  func.func @transform_0(%arg0: i32, %arg1: i32, %arg2: i32) -> (i32, i32) {
    %c0_i32 = arith.constant 0 : i32
    return %arg0, %arg2 : i32, i32
  }
  func.func @transform_1(%arg0: i32, %arg1: i32, %arg2: i32) -> (i32, i32) {
    %c0_i32 = arith.constant 0 : i32
    return %arg2, %arg1 : i32, i32
  }
  func.func @transform_2(%arg0: i32, %arg1: i32, %arg2: i32) -> (i32, i32) {
    %c0_i32 = arith.constant 0 : i32
    return %arg0, %arg1 : i32, i32
  }
}

module attributes {stable_mosaic.version = 11 : i64} {
  func.func @_fused_mm_kernel(%arg0: i32, %arg1: i32, %arg2: i32, %arg3: memref<8x512xbf16, #tpu.memory_space<vmem>>, %arg4: memref<512x128xbf16, #tpu.memory_space<vmem>>, %arg5: memref<8x128xf32, #tpu.memory_space<vmem>>, %arg6: memref<8x128xf32, #tpu.memory_space<vmem>>) attributes {dimension_semantics = [#tpu.dimension_semantics<parallel>, #tpu.dimension_semantics<parallel>, #tpu.dimension_semantics<arbitrary>], iteration_bounds = array<i64: 1, 1, 1>, scalar_prefetch = 0 : i64, scratch_operands = 1 : i64, tpu.core_type = #tpu.core_type<tc>, window_params = [{transform_indices = @transform_0, window_bounds = array<i64: 8, 512>}, {transform_indices = @transform_1, window_bounds = array<i64: 512, 128>}, {transform_indices = @transform_2, window_bounds = array<i64: 8, 128>}]} {
    %c0_i32 = arith.constant 0 : i32
    %0 = arith.cmpi eq, %arg2, %c0_i32 : i32
    %1 = arith.extui %0 : i1 to i32
    %c0_i32_0 = arith.constant 0 : i32
    %2 = arith.cmpi ne, %1, %c0_i32_0 : i32
    scf.if %2 {
      %cst_11 = arith.constant 0.000000e+00 : f32
      %14 = vector.broadcast %cst_11 : f32 to vector<8x128xf32>
      %c0_12 = arith.constant 0 : index
      %c0_13 = arith.constant 0 : index
      %15 = vector.load %arg6[%c0_12, %c0_13] : memref<8x128xf32, #tpu.memory_space<vmem>>, vector<8x128xf32>
      tpu.vector_store %arg6[%c0_12, %c0_13], %14 {strides = array<i32>} : memref<8x128xf32, #tpu.memory_space<vmem>>, vector<8x128xf32>,
    } else {
    }
    %c0 = arith.constant 0 : index
    %c0_1 = arith.constant 0 : index
    %3 = vector.load %arg3[%c0, %c0_1] : memref<8x512xbf16, #tpu.memory_space<vmem>>, vector<8x512xbf16>
    %cst = arith.constant 0.000000e+00 : bf16
    %4 = vector.broadcast %cst : bf16 to vector<8x512xbf16>
    %5 = arith.maximumf %3, %4 : vector<8x512xbf16>
    %c0_2 = arith.constant 0 : index
    %c0_3 = arith.constant 0 : index
    %6 = vector.load %arg6[%c0_2, %c0_3] : memref<8x128xf32, #tpu.memory_space<vmem>>, vector<8x128xf32>
    %c0_4 = arith.constant 0 : index
    %c0_5 = arith.constant 0 : index
    %7 = vector.load %arg4[%c0_4, %c0_5] : memref<512x128xbf16, #tpu.memory_space<vmem>>, vector<512x128xbf16>
    %cst_6 = arith.constant dense<0.000000e+00> : vector<8x128xf32>
    %8 = tpu.matmul %5, %7, %cst_6 {dimension_numbers = #tpu.dot_dimension_numbers<[1], [0], [0], [1], [0, 0, 1, 1], [], []>} : vector<8x512xbf16>, vector<512x128xbf16>, vector<8x128xf32> -> vector<8x128xf32>
    %9 = arith.addf %6, %8 : vector<8x128xf32>
    %c0_7 = arith.constant 0 : index
    %c0_8 = arith.constant 0 : index
    %10 = vector.load %arg6[%c0_7, %c0_8] : memref<8x128xf32, #tpu.memory_space<vmem>>, vector<8x128xf32>
    tpu.vector_store %arg6[%c0_7, %c0_8], %9 {strides = array<i32>} : memref<8x128xf32, #tpu.memory_space<vmem>>, vector<8x128xf32>,
    %c0_i32_9 = arith.constant 0 : i32
    %11 = arith.cmpi eq, %arg2, %c0_i32_9 : i32
    %12 = arith.extui %11 : i1 to i32
    %c0_i32_10 = arith.constant 0 : i32
    %13 = arith.cmpi ne, %12, %c0_i32_10 : i32
    scf.if %13 {
      %c0_11 = arith.constant 0 : index
      %c0_12 = arith.constant 0 : index
      %14 = vector.load %arg6[%c0_11, %c0_12] : memref<8x128xf32, #tpu.memory_space<vmem>>, vector<8x128xf32>
      %c0_13 = arith.constant 0 : index
      %c0_14 = arith.constant 0 : index
      %15 = vector.load %arg5[%c0_13, %c0_14] : memref<8x128xf32, #tpu.memory_space<vmem>>, vector<8x128xf32>
      tpu.vector_store %arg5[%c0_13, %c0_14], %14 {strides = array<i32>} : memref<8x128xf32, #tpu.memory_space<vmem>>, vector<8x128xf32>,
    } else {
    }
    return
  }
  func.func @transform_0(%arg0: i32, %arg1: i32, %arg2: i32) -> (i32, i32) {
    %c0_i32 = arith.constant 0 : i32
    return %arg0, %arg2 : i32, i32
  }
  func.func @transform_1(%arg0: i32, %arg1: i32, %arg2: i32) -> (i32, i32) {
    %c0_i32 = arith.constant 0 : i32
    return %arg2, %arg1 : i32, i32
  }
  func.func @transform_2(%arg0: i32, %arg1: i32, %arg2: i32) -> (i32, i32) {
    %c0_i32 = arith.constant 0 : i32
    return %arg0, %arg1 : i32, i32
  }
}

module attributes {stable_mosaic.version = 11 : i64} {
  func.func @_fused_mm_kernel(%arg0: i32, %arg1: i32, %arg2: i32, %arg3: memref<32x256xbf16, #tpu.memory_space<vmem>>, %arg4: memref<256x128xbf16, #tpu.memory_space<vmem>>, %arg5: memref<32x128xf32, #tpu.memory_space<vmem>>, %arg6: memref<32x128xf32, #tpu.memory_space<vmem>>) attributes {dimension_semantics = [#tpu.dimension_semantics<parallel>, #tpu.dimension_semantics<parallel>, #tpu.dimension_semantics<arbitrary>], iteration_bounds = array<i64: 1, 1, 1>, scalar_prefetch = 0 : i64, scratch_operands = 1 : i64, tpu.core_type = #tpu.core_type<tc>, window_params = [{transform_indices = @transform_0, window_bounds = array<i64: 32, 256>}, {transform_indices = @transform_1, window_bounds = array<i64: 256, 128>}, {transform_indices = @transform_2, window_bounds = array<i64: 32, 128>}]} {
    %c0_i32 = arith.constant 0 : i32
    %0 = arith.cmpi eq, %arg2, %c0_i32 : i32
    %1 = arith.extui %0 : i1 to i32
    %c0_i32_0 = arith.constant 0 : i32
    %2 = arith.cmpi ne, %1, %c0_i32_0 : i32
    scf.if %2 {
      %cst_11 = arith.constant 0.000000e+00 : f32
      %14 = vector.broadcast %cst_11 : f32 to vector<32x128xf32>
      %c0_12 = arith.constant 0 : index
      %c0_13 = arith.constant 0 : index
      %15 = vector.load %arg6[%c0_12, %c0_13] : memref<32x128xf32, #tpu.memory_space<vmem>>, vector<32x128xf32>
      tpu.vector_store %arg6[%c0_12, %c0_13], %14 {strides = array<i32>} : memref<32x128xf32, #tpu.memory_space<vmem>>, vector<32x128xf32>,
    } else {
    }
    %c0 = arith.constant 0 : index
    %c0_1 = arith.constant 0 : index
    %3 = vector.load %arg3[%c0, %c0_1] : memref<32x256xbf16, #tpu.memory_space<vmem>>, vector<32x256xbf16>
    %cst = arith.constant 0.000000e+00 : bf16
    %4 = vector.broadcast %cst : bf16 to vector<32x256xbf16>
    %5 = arith.maximumf %3, %4 : vector<32x256xbf16>
    %c0_2 = arith.constant 0 : index
    %c0_3 = arith.constant 0 : index
    %6 = vector.load %arg6[%c0_2, %c0_3] : memref<32x128xf32, #tpu.memory_space<vmem>>, vector<32x128xf32>
    %c0_4 = arith.constant 0 : index
    %c0_5 = arith.constant 0 : index
    %7 = vector.load %arg4[%c0_4, %c0_5] : memref<256x128xbf16, #tpu.memory_space<vmem>>, vector<256x128xbf16>
    %cst_6 = arith.constant dense<0.000000e+00> : vector<32x128xf32>
    %8 = tpu.matmul %5, %7, %cst_6 {dimension_numbers = #tpu.dot_dimension_numbers<[1], [0], [0], [1], [0, 0, 1, 1], [], []>} : vector<32x256xbf16>, vector<256x128xbf16>, vector<32x128xf32> -> vector<32x128xf32>
    %9 = arith.addf %6, %8 : vector<32x128xf32>
    %c0_7 = arith.constant 0 : index
    %c0_8 = arith.constant 0 : index
    %10 = vector.load %arg6[%c0_7, %c0_8] : memref<32x128xf32, #tpu.memory_space<vmem>>, vector<32x128xf32>
    tpu.vector_store %arg6[%c0_7, %c0_8], %9 {strides = array<i32>} : memref<32x128xf32, #tpu.memory_space<vmem>>, vector<32x128xf32>,
    %c0_i32_9 = arith.constant 0 : i32
    %11 = arith.cmpi eq, %arg2, %c0_i32_9 : i32
    %12 = arith.extui %11 : i1 to i32
    %c0_i32_10 = arith.constant 0 : i32
    %13 = arith.cmpi ne, %12, %c0_i32_10 : i32
    scf.if %13 {
      %c0_11 = arith.constant 0 : index
      %c0_12 = arith.constant 0 : index
      %14 = vector.load %arg6[%c0_11, %c0_12] : memref<32x128xf32, #tpu.memory_space<vmem>>, vector<32x128xf32>
      %c0_13 = arith.constant 0 : index
      %c0_14 = arith.constant 0 : index
      %15 = vector.load %arg5[%c0_13, %c0_14] : memref<32x128xf32, #tpu.memory_space<vmem>>, vector<32x128xf32>
      tpu.vector_store %arg5[%c0_13, %c0_14], %14 {strides = array<i32>} : memref<32x128xf32, #tpu.memory_space<vmem>>, vector<32x128xf32>,
    } else {
    }
    return
  }
  func.func @transform_0(%arg0: i32, %arg1: i32, %arg2: i32) -> (i32, i32) {
    %c0_i32 = arith.constant 0 : i32
    return %arg0, %arg2 : i32, i32
  }
  func.func @transform_1(%arg0: i32, %arg1: i32, %arg2: i32) -> (i32, i32) {
    %c0_i32 = arith.constant 0 : i32
    return %arg2, %arg1 : i32, i32
  }
  func.func @transform_2(%arg0: i32, %arg1: i32, %arg2: i32) -> (i32, i32) {
    %c0_i32 = arith.constant 0 : i32
    return %arg0, %arg1 : i32, i32
  }
}

module attributes {stable_mosaic.version = 11 : i64} {
  func.func @_fused_mm_kernel(%arg0: i32, %arg1: i32, %arg2: i32, %arg3: memref<128x128xbf16, #tpu.memory_space<vmem>>, %arg4: memref<128x128xbf16, #tpu.memory_space<vmem>>, %arg5: memref<128x128xf32, #tpu.memory_space<vmem>>, %arg6: memref<128x128xf32, #tpu.memory_space<vmem>>) attributes {dimension_semantics = [#tpu.dimension_semantics<parallel>, #tpu.dimension_semantics<parallel>, #tpu.dimension_semantics<arbitrary>], iteration_bounds = array<i64: 1, 1, 1>, scalar_prefetch = 0 : i64, scratch_operands = 1 : i64, tpu.core_type = #tpu.core_type<tc>, window_params = [{transform_indices = @transform_0, window_bounds = array<i64: 128, 128>}, {transform_indices = @transform_1, window_bounds = array<i64: 128, 128>}, {transform_indices = @transform_2, window_bounds = array<i64: 128, 128>}]} {
    %c0_i32 = arith.constant 0 : i32
    %0 = arith.cmpi eq, %arg2, %c0_i32 : i32
    %1 = arith.extui %0 : i1 to i32
    %c0_i32_0 = arith.constant 0 : i32
    %2 = arith.cmpi ne, %1, %c0_i32_0 : i32
    scf.if %2 {
      %cst_11 = arith.constant 0.000000e+00 : f32
      %14 = vector.broadcast %cst_11 : f32 to vector<128x128xf32>
      %c0_12 = arith.constant 0 : index
      %c0_13 = arith.constant 0 : index
      %15 = vector.load %arg6[%c0_12, %c0_13] : memref<128x128xf32, #tpu.memory_space<vmem>>, vector<128x128xf32>
      tpu.vector_store %arg6[%c0_12, %c0_13], %14 {strides = array<i32>} : memref<128x128xf32, #tpu.memory_space<vmem>>, vector<128x128xf32>,
    } else {
    }
    %c0 = arith.constant 0 : index
    %c0_1 = arith.constant 0 : index
    %3 = vector.load %arg3[%c0, %c0_1] : memref<128x128xbf16, #tpu.memory_space<vmem>>, vector<128x128xbf16>
    %cst = arith.constant 0.000000e+00 : bf16
    %4 = vector.broadcast %cst : bf16 to vector<128x128xbf16>
    %5 = arith.maximumf %3, %4 : vector<128x128xbf16>
    %c0_2 = arith.constant 0 : index
    %c0_3 = arith.constant 0 : index
    %6 = vector.load %arg6[%c0_2, %c0_3] : memref<128x128xf32, #tpu.memory_space<vmem>>, vector<128x128xf32>
    %c0_4 = arith.constant 0 : index
    %c0_5 = arith.constant 0 : index
    %7 = vector.load %arg4[%c0_4, %c0_5] : memref<128x128xbf16, #tpu.memory_space<vmem>>, vector<128x128xbf16>
    %cst_6 = arith.constant dense<0.000000e+00> : vector<128x128xf32>
    %8 = tpu.matmul %5, %7, %cst_6 {dimension_numbers = #tpu.dot_dimension_numbers<[1], [0], [0], [1], [0, 0, 1, 1], [], []>} : vector<128x128xbf16>, vector<128x128xbf16>, vector<128x128xf32> -> vector<128x128xf32>
    %9 = arith.addf %6, %8 : vector<128x128xf32>
    %c0_7 = arith.constant 0 : index
    %c0_8 = arith.constant 0 : index
    %10 = vector.load %arg6[%c0_7, %c0_8] : memref<128x128xf32, #tpu.memory_space<vmem>>, vector<128x128xf32>
    tpu.vector_store %arg6[%c0_7, %c0_8], %9 {strides = array<i32>} : memref<128x128xf32, #tpu.memory_space<vmem>>, vector<128x128xf32>,
    %c0_i32_9 = arith.constant 0 : i32
    %11 = arith.cmpi eq, %arg2, %c0_i32_9 : i32
    %12 = arith.extui %11 : i1 to i32
    %c0_i32_10 = arith.constant 0 : i32
    %13 = arith.cmpi ne, %12, %c0_i32_10 : i32
    scf.if %13 {
      %c0_11 = arith.constant 0 : index
      %c0_12 = arith.constant 0 : index
      %14 = vector.load %arg6[%c0_11, %c0_12] : memref<128x128xf32, #tpu.memory_space<vmem>>, vector<128x128xf32>
      %c0_13 = arith.constant 0 : index
      %c0_14 = arith.constant 0 : index
      %15 = vector.load %arg5[%c0_13, %c0_14] : memref<128x128xf32, #tpu.memory_space<vmem>>, vector<128x128xf32>
      tpu.vector_store %arg5[%c0_13, %c0_14], %14 {strides = array<i32>} : memref<128x128xf32, #tpu.memory_space<vmem>>, vector<128x128xf32>,
    } else {
    }
    return
  }
  func.func @transform_0(%arg0: i32, %arg1: i32, %arg2: i32) -> (i32, i32) {
    %c0_i32 = arith.constant 0 : i32
    return %arg0, %arg2 : i32, i32
  }
  func.func @transform_1(%arg0: i32, %arg1: i32, %arg2: i32) -> (i32, i32) {
    %c0_i32 = arith.constant 0 : i32
    return %arg2, %arg1 : i32, i32
  }
  func.func @transform_2(%arg0: i32, %arg1: i32, %arg2: i32) -> (i32, i32) {
    %c0_i32 = arith.constant 0 : i32
    return %arg0, %arg1 : i32, i32
  }
}

module attributes {stable_mosaic.version = 11 : i64} {
  func.func @_bn_fused_kernel(%arg0: i32, %arg1: memref<512x8xf32, #tpu.memory_space<vmem>>, %arg2: memref<1x8xf32, #tpu.memory_space<vmem>>, %arg3: memref<1x8xf32, #tpu.memory_space<vmem>>, %arg4: memref<512x8xf32, #tpu.memory_space<vmem>>) attributes {dimension_semantics = [#tpu.dimension_semantics<arbitrary>], iteration_bounds = array<i64: 1>, scalar_prefetch = 0 : i64, scratch_operands = 0 : i64, tpu.core_type = #tpu.core_type<tc>, window_params = [{pipeline_mode = #tpu.pipeline_mode<synchronous>, transform_indices = @transform_0, window_bounds = array<i64: 512, 8>}, {pipeline_mode = #tpu.pipeline_mode<synchronous>, transform_indices = @transform_1, window_bounds = array<i64: 1, 8>}, {pipeline_mode = #tpu.pipeline_mode<synchronous>, transform_indices = @transform_2, window_bounds = array<i64: 1, 8>}, {pipeline_mode = #tpu.pipeline_mode<synchronous>, transform_indices = @transform_3, window_bounds = array<i64: 512, 8>}]} {
    %c0 = arith.constant 0 : index
    %c0_0 = arith.constant 0 : index
    %0 = vector.load %arg1[%c0, %c0_0] : memref<512x8xf32, #tpu.memory_space<vmem>>, vector<512x8xf32>
    %cst = arith.constant dense<0.000000e+00> : vector<8xf32>
    %1 = vector.multi_reduction <add>, %0, %cst [0] : vector<512x8xf32> to vector<8xf32>
    %2 = vector.shape_cast %1 : vector<8xf32> to vector<1x8xf32>
    %3 = arith.mulf %0, %0 : vector<512x8xf32>
    %cst_1 = arith.constant dense<0.000000e+00> : vector<8xf32>
    %4 = vector.multi_reduction <add>, %3, %cst_1 [0] : vector<512x8xf32> to vector<8xf32>
    %5 = vector.shape_cast %4 : vector<8xf32> to vector<1x8xf32>
    %cst_2 = arith.constant 0.001953125 : f32
    %6 = vector.broadcast %cst_2 : f32 to vector<1x8xf32>
    %7 = arith.mulf %2, %6 : vector<1x8xf32>
    %cst_3 = arith.constant 0.001953125 : f32
    %8 = vector.broadcast %cst_3 : f32 to vector<1x8xf32>
    %9 = arith.mulf %5, %8 : vector<1x8xf32>
    %10 = arith.mulf %7, %7 : vector<1x8xf32>
    %11 = arith.subf %9, %10 : vector<1x8xf32>
    %c0_4 = arith.constant 0 : index
    %c0_5 = arith.constant 0 : index
    %12 = vector.load %arg2[%c0_4, %c0_5] : memref<1x8xf32, #tpu.memory_space<vmem>>, vector<1x8xf32>
    %cst_6 = arith.constant 9.99999974E-6 : f32
    %13 = vector.broadcast %cst_6 : f32 to vector<1x8xf32>
    %14 = arith.addf %11, %13 : vector<1x8xf32>
    %15 = math.rsqrt %14 : vector<1x8xf32>
    %16 = arith.mulf %12, %15 : vector<1x8xf32>
    %c0_7 = arith.constant 0 : index
    %c0_8 = arith.constant 0 : index
    %17 = vector.load %arg3[%c0_7, %c0_8] : memref<1x8xf32, #tpu.memory_space<vmem>>, vector<1x8xf32>
    %18 = arith.mulf %7, %16 : vector<1x8xf32>
    %19 = arith.subf %17, %18 : vector<1x8xf32>
    %20 = vector.broadcast %16 : vector<1x8xf32> to vector<512x8xf32>
    %21 = arith.mulf %0, %20 : vector<512x8xf32>
    %22 = vector.broadcast %19 : vector<1x8xf32> to vector<512x8xf32>
    %23 = arith.addf %21, %22 : vector<512x8xf32>
    %c0_9 = arith.constant 0 : index
    %c0_10 = arith.constant 0 : index
    %24 = vector.load %arg4[%c0_9, %c0_10] : memref<512x8xf32, #tpu.memory_space<vmem>>, vector<512x8xf32>
    tpu.vector_store %arg4[%c0_9, %c0_10], %23 {strides = array<i32>} : memref<512x8xf32, #tpu.memory_space<vmem>>, vector<512x8xf32>,
    return
  }
  func.func @transform_0(%arg0: i32) -> (i32, i32) {
    %c0_i32 = arith.constant 0 : i32
    %c0_i32_0 = arith.constant 0 : i32
    %c0_i32_1 = arith.constant 0 : i32
    return %c0_i32, %c0_i32_0 : i32, i32
  }
  func.func @transform_1(%arg0: i32) -> (i32, i32) {
    %c0_i32 = arith.constant 0 : i32
    %c0_i32_0 = arith.constant 0 : i32
    %c0_i32_1 = arith.constant 0 : i32
    return %c0_i32, %c0_i32_0 : i32, i32
  }
  func.func @transform_2(%arg0: i32) -> (i32, i32) {
    %c0_i32 = arith.constant 0 : i32
    %c0_i32_0 = arith.constant 0 : i32
    %c0_i32_1 = arith.constant 0 : i32
    return %c0_i32, %c0_i32_0 : i32, i32
  }
  func.func @transform_3(%arg0: i32) -> (i32, i32) {
    %c0_i32 = arith.constant 0 : i32
    %c0_i32_0 = arith.constant 0 : i32
    %c0_i32_1 = arith.constant 0 : i32
    return %c0_i32, %c0_i32_0 : i32, i32
  }
}

module attributes {stable_mosaic.version = 11 : i64} {
  func.func @_fused_mm_kernel(%arg0: i32, %arg1: i32, %arg2: i32, %arg3: memref<256x128xbf16, #tpu.memory_space<vmem>>, %arg4: memref<128x128xbf16, #tpu.memory_space<vmem>>, %arg5: memref<1x128xf32, #tpu.memory_space<vmem>>, %arg6: memref<256x128xf32, #tpu.memory_space<vmem>>, %arg7: memref<256x128xf32, #tpu.memory_space<vmem>>) attributes {dimension_semantics = [#tpu.dimension_semantics<parallel>, #tpu.dimension_semantics<parallel>, #tpu.dimension_semantics<arbitrary>], iteration_bounds = array<i64: 2, 1, 1>, scalar_prefetch = 0 : i64, scratch_operands = 1 : i64, tpu.core_type = #tpu.core_type<tc>, window_params = [{transform_indices = @transform_0, window_bounds = array<i64: 256, 128>}, {transform_indices = @transform_1, window_bounds = array<i64: 128, 128>}, {transform_indices = @transform_2, window_bounds = array<i64: 1, 128>}, {transform_indices = @transform_3, window_bounds = array<i64: 256, 128>}]} {
    %c0_i32 = arith.constant 0 : i32
    %0 = arith.cmpi eq, %arg2, %c0_i32 : i32
    %1 = arith.extui %0 : i1 to i32
    %c0_i32_0 = arith.constant 0 : i32
    %2 = arith.cmpi ne, %1, %c0_i32_0 : i32
    scf.if %2 {
      %cst_11 = arith.constant 0.000000e+00 : f32
      %14 = vector.broadcast %cst_11 : f32 to vector<256x128xf32>
      %c0_12 = arith.constant 0 : index
      %c0_13 = arith.constant 0 : index
      %15 = vector.load %arg7[%c0_12, %c0_13] : memref<256x128xf32, #tpu.memory_space<vmem>>, vector<256x128xf32>
      tpu.vector_store %arg7[%c0_12, %c0_13], %14 {strides = array<i32>} : memref<256x128xf32, #tpu.memory_space<vmem>>, vector<256x128xf32>,
    } else {
    }
    %c0 = arith.constant 0 : index
    %c0_1 = arith.constant 0 : index
    %3 = vector.load %arg3[%c0, %c0_1] : memref<256x128xbf16, #tpu.memory_space<vmem>>, vector<256x128xbf16>
    %cst = arith.constant 0.000000e+00 : bf16
    %4 = vector.broadcast %cst : bf16 to vector<256x128xbf16>
    %5 = arith.maximumf %3, %4 : vector<256x128xbf16>
    %c0_2 = arith.constant 0 : index
    %c0_3 = arith.constant 0 : index
    %6 = vector.load %arg7[%c0_2, %c0_3] : memref<256x128xf32, #tpu.memory_space<vmem>>, vector<256x128xf32>
    %c0_4 = arith.constant 0 : index
    %c0_5 = arith.constant 0 : index
    %7 = vector.load %arg4[%c0_4, %c0_5] : memref<128x128xbf16, #tpu.memory_space<vmem>>, vector<128x128xbf16>
    %cst_6 = arith.constant dense<0.000000e+00> : vector<256x128xf32>
    %8 = tpu.matmul %5, %7, %cst_6 {dimension_numbers = #tpu.dot_dimension_numbers<[1], [0], [0], [1], [0, 0, 1, 1], [], []>} : vector<256x128xbf16>, vector<128x128xbf16>, vector<256x128xf32> -> vector<256x128xf32>
    %9 = arith.addf %6, %8 : vector<256x128xf32>
    %c0_7 = arith.constant 0 : index
    %c0_8 = arith.constant 0 : index
    %10 = vector.load %arg7[%c0_7, %c0_8] : memref<256x128xf32, #tpu.memory_space<vmem>>, vector<256x128xf32>
    tpu.vector_store %arg7[%c0_7, %c0_8], %9 {strides = array<i32>} : memref<256x128xf32, #tpu.memory_space<vmem>>, vector<256x128xf32>,
    %c0_i32_9 = arith.constant 0 : i32
    %11 = arith.cmpi eq, %arg2, %c0_i32_9 : i32
    %12 = arith.extui %11 : i1 to i32
    %c0_i32_10 = arith.constant 0 : i32
    %13 = arith.cmpi ne, %12, %c0_i32_10 : i32
    scf.if %13 {
      %c0_11 = arith.constant 0 : index
      %c0_12 = arith.constant 0 : index
      %14 = vector.load %arg7[%c0_11, %c0_12] : memref<256x128xf32, #tpu.memory_space<vmem>>, vector<256x128xf32>
      %c0_13 = arith.constant 0 : index
      %c0_14 = arith.constant 0 : index
      %15 = vector.load %arg5[%c0_13, %c0_14] : memref<1x128xf32, #tpu.memory_space<vmem>>, vector<1x128xf32>
      %16 = vector.broadcast %15 : vector<1x128xf32> to vector<256x128xf32>
      %17 = arith.addf %14, %16 : vector<256x128xf32>
      %18 = math.tanh %17 : vector<256x128xf32>
      %c0_15 = arith.constant 0 : index
      %c0_16 = arith.constant 0 : index
      %19 = vector.load %arg6[%c0_15, %c0_16] : memref<256x128xf32, #tpu.memory_space<vmem>>, vector<256x128xf32>
      tpu.vector_store %arg6[%c0_15, %c0_16], %18 {strides = array<i32>} : memref<256x128xf32, #tpu.memory_space<vmem>>, vector<256x128xf32>,
    } else {
    }
    return
  }
  func.func @transform_0(%arg0: i32, %arg1: i32, %arg2: i32) -> (i32, i32) {
    %c0_i32 = arith.constant 0 : i32
    return %arg0, %arg2 : i32, i32
  }
  func.func @transform_1(%arg0: i32, %arg1: i32, %arg2: i32) -> (i32, i32) {
    %c0_i32 = arith.constant 0 : i32
    return %arg2, %arg1 : i32, i32
  }
  func.func @transform_2(%arg0: i32, %arg1: i32, %arg2: i32) -> (i32, i32) {
    %c0_i32 = arith.constant 0 : i32
    %c0_i32_0 = arith.constant 0 : i32
    return %c0_i32, %arg1 : i32, i32
  }
  func.func @transform_3(%arg0: i32, %arg1: i32, %arg2: i32) -> (i32, i32) {
    %c0_i32 = arith.constant 0 : i32
    return %arg0, %arg1 : i32, i32
  }
}

</mosaic_0001>

<llo_original>
// kernel: _lambda_.28
$region0: #{_lambda_.28}
  #allocation0 [shape = 'u32[]', space=smem, size = 0x4, offset = 0x4, fixed_abs, tag = 'smem constant byte address 0x4 - core index']
  #allocation1 [shape = 'u32[144,128]{1,0:T(1,128)}', space=vmem, size = 0x12000, scoped, tag = 'internal scratch']
  #allocation2 [shape = 'f32[256,128]{1,0:T(8,128)}', space=vmem, size = 0x20000, scoped, tag = 'scratch operand']
  %s0 = inlined_call_operand.vmem [shape: bf16[512,128], index: 0, kind: input, shape index: {}]
  %s1 = inlined_call_operand.vmem [shape: bf16[128,128], index: 1, kind: input, shape index: {}]
  %s2 = inlined_call_operand.vmem [shape: f32[512,128], index: 2, kind: output, shape index: {}]
  %s3 = sld [smem:[#allocation0]]
  $region49: #{_lambda_.28} parent=0
    _
  %s5 = ssub.s32 1, %s3
  %s6 = scalar_select 0, %s5, %s3
  loop: start=0, step=1, limit=4
  $region2: #{_lambda_.28} parent=0 // loop_pre_header
    _
  $region3: #{_lambda_.28} parent=0 // loop_header
    %s8 = sphi 0, %s12
    %p9 = scmp.ge.s32.totalorder %s8, 4
    %s15 = sphi 0, %s34
    %s16 = sphi 0, %s30
    %s17 = sphi 0, %s26
    %s18 = sphi 0, %s15
    %s19 = sphi 0, %s16
    %s20 = sphi 0, %s17
    %s21 = sphi 0, %s18
    %s22 = sphi 0, %s19
    %s23 = sphi 0, %s20
    %s39 = sphi 0, %s41
    %s42 = sphi 0, %s39
    %s43 = sphi 0, %s42
    %s59 = sphi 0, %s43
    %s67 = sphi 0, %s69
    %s70 = sphi 0, %s67
    %s71 = sphi 0, %s70
    %s87 = sphi 0, %s71
    %s95 = sphi 0, %s97
    %s98 = sphi 0, %s95
    %s99 = sphi 0, %s98
    %s115 = sphi 0, %s99
  $region4: #{_lambda_.28} parent=0 // loop_header_branch
    %11 = sbr.rel (%p9) target = $region8
  $region5: #{_lambda_.28} parent=0 // loop_body
    %s13 = ssub.s32 %s8, 1
    %s14 = ssub.s32 %s8, 2
    %s24 = sadd.s32 1, %s17
    %p25 = scmp.ge.s32.totalorder %s24, 1
    %s26 = scalar_select %p25, 0, %s24
    %s27 = sadd.s32 1, %s16
    %s28 = scalar_select %p25, %s27, %s16
    %p29 = scmp.ge.s32.totalorder %s28, 1
    %s30 = scalar_select %p29, 0, %s28
    %s31 = sadd.s32 1, %s15
    %s32 = scalar_select %p29, %s31, %s15
    %p33 = scmp.ge.s32.totalorder %s32, 2
    %s34 = scalar_select %p33, 0, %s32
    %s35 = ssub.s32 %s15, %s34
    %s36 = ssub.s32 %s17, %s26
    %s37 = sor.u32 %s35, %s36
    %p38 = scmp.eq.s32.totalorder %s37, 0
    %s40 = sadd.s32 %s39, 1
    %s41 = scalar_select %p38, %s39, %s40
    %p44 = pneg %p38
    %p45 = scmp.eq.s32.totalorder %s8, 1
    %p46 = por %p44, %p45
    %p47 = scmp.ne.s32.totalorder %s39, %s42
    %p48 = scmp.eq.s32.totalorder %s8, 0
    %p49 = por %p47, %p48
    %p50 = scmp.ne.s32.totalorder %s39, %s42
    %p51 = scmp.eq.s32.totalorder %s13, 1
    %p52 = por %p50, %p51
    %p53 = scmp.ne.s32.totalorder %s42, %s43
    %p54 = scmp.eq.s32.totalorder %s13, 0
    %p55 = por %p53, %p54
    %p56 = scmp.ne.s32.totalorder %s42, %s43
    %p57 = scmp.eq.s32.totalorder %s14, 1
    %p58 = por %p56, %p57
    %p60 = scmp.ne.s32.totalorder %s43, %s59
    %p61 = scmp.eq.s32.totalorder %s14, 0
    %p62 = por %p60, %p61
    %s63 = ssub.s32 %s17, %s26
    %s64 = ssub.s32 %s16, %s30
    %s65 = sor.u32 %s63, %s64
    %p66 = scmp.eq.s32.totalorder %s65, 0
    %s68 = sadd.s32 %s67, 1
    %s69 = scalar_select %p66, %s67, %s68
    %p72 = pneg %p66
    %p73 = scmp.eq.s32.totalorder %s8, 1
    %p74 = por %p72, %p73
    %p75 = scmp.ne.s32.totalorder %s67, %s70
    %p76 = scmp.eq.s32.totalorder %s8, 0
    %p77 = por %p75, %p76
    %p78 = scmp.ne.s32.totalorder %s67, %s70
    %p79 = scmp.eq.s32.totalorder %s13, 1
    %p80 = por %p78, %p79
    %p81 = scmp.ne.s32.totalorder %s70, %s71
    %p82 = scmp.eq.s32.totalorder %s13, 0
    %p83 = por %p81, %p82
    %p84 = scmp.ne.s32.totalorder %s70, %s71
    %p85 = scmp.eq.s32.totalorder %s14, 1
    %p86 = por %p84, %p85
    %p88 = scmp.ne.s32.totalorder %s71, %s87
    %p89 = scmp.eq.s32.totalorder %s14, 0
    %p90 = por %p88, %p89
    %s91 = ssub.s32 %s15, %s34
    %s92 = ssub.s32 %s16, %s30
    %s93 = sor.u32 %s91, %s92
    %p94 = scmp.eq.s32.totalorder %s93, 0
    %s96 = sadd.s32 %s95, 1
    %s97 = scalar_select %p94, %s95, %s96
    %p100 = pneg %p94
    %p101 = scmp.eq.s32.totalorder %s8, 1
    %p102 = por %p100, %p101
    %p103 = scmp.ne.s32.totalorder %s95, %s98
    %p104 = scmp.eq.s32.totalorder %s8, 0
    %p105 = por %p103, %p104
    %p106 = scmp.ne.s32.totalorder %s95, %s98
    %p107 = scmp.eq.s32.totalorder %s13, 1
    %p108 = por %p106, %p107
    %p109 = scmp.ne.s32.totalorder %s98, %s99
    %p110 = scmp.eq.s32.totalorder %s13, 0
    %p111 = por %p109, %p110
    %p112 = scmp.ne.s32.totalorder %s98, %s99
    %p113 = scmp.eq.s32.totalorder %s14, 1
    %p114 = por %p112, %p113
    %p116 = scmp.ne.s32.totalorder %s99, %s115
    %p117 = scmp.eq.s32.totalorder %s14, 0
    %p118 = por %p116, %p117
    %p119 = scmp.le.s32.totalorder 1, %s8
    %p120 = scmp.lt.s32.totalorder %s8, 3
    %p121 = pnand %p119, %p120
    %p122 = pneg %p121
    // Predicated region
    $region9: #{_lambda_.28} parent=5 // pred_check
      _
    $region10: #{_lambda_.28} parent=5 // pred_check_branch
      %124 = sbr.rel (%p121) target = $region12
    $region11: #{_lambda_.28} parent=5 // pred_region
      %s125 = ssub.s32 %s8, 1
      // Predicated region
      $region13: #{_lambda_.28} parent=11 // pred_check
        %p126 = pneg %p83
      $region14: #{_lambda_.28} parent=11 // pred_check_branch
        %128 = sbr.rel (%p126) target = $region16
      $region15: #{_lambda_.28} parent=11 // pred_region
        %s129 = smul.u32 16, %s20
        %p130 = scmp.lt.s32.totalorder %s129, 15
        %s131 = scalar_select %p130, %s129, 15
        %p132 = scmp.lt.s32.totalorder %s19, 0
        %s133 = scalar_select %p132, %s19, 0
        %s134 = sadd.s32 %s133, %s131
        %s135 = smul.addr %s134, 4
        %s136 = scalar_lea.vmem %s1, %s135
        %s137 = smul.u32 16, %s20
      $region16: #{_lambda_.28} parent=11 // pred_fallthru
        _
    $region12: #{_lambda_.28} parent=5 // pred_fallthru
      _
    %p138 = scmp.lt.s32.totalorder %s8, 2
    // Predicated region
    $region17: #{_lambda_.28} parent=5 // pred_check
      %p139 = pneg %p138
    $region18: #{_lambda_.28} parent=5 // pred_check_branch
      %141 = sbr.rel (%p139) target = $region20
    $region19: #{_lambda_.28} parent=5 // pred_region
      // Predicated region
      $region21: #{_lambda_.28} parent=19 // pred_check
        %p142 = pneg %p49
      $region22: #{_lambda_.28} parent=19 // pred_check_branch
        %144 = sbr.rel (%p142) target = $region24
      $region23: #{_lambda_.28} parent=19 // pred_region
        %s145 = smul.u32 32, %s15
        %p146 = scmp.lt.s32.totalorder %s145, 63
        %s147 = scalar_select %p146, %s145, 63
        %p148 = scmp.lt.s32.totalorder %s17, 0
        %s149 = scalar_select %p148, %s17, 0
        %s150 = sadd.s32 %s149, %s147
        %s151 = smul.addr %s150, 4
        %s152 = scalar_lea.vmem %s0, %s151
        %s153 = smul.u32 32, %s15
      $region24: #{_lambda_.28} parent=19 // pred_fallthru
        _
    $region20: #{_lambda_.28} parent=5 // pred_fallthru
      _
    %p154 = scmp.le.s32.totalorder 1, %s8
    %p155 = scmp.lt.s32.totalorder %s8, 3
    %p156 = pnand %p154, %p155
    %p157 = pneg %p156
    // Predicated region
    $region25: #{_lambda_.28} parent=5 // pred_check
      _
    $region26: #{_lambda_.28} parent=5 // pred_check_branch
      %159 = sbr.rel (%p156) target = $region28
    $region27: #{_lambda_.28} parent=5 // pred_region
      %s160 = ssub.s32 %s8, 1
      %s161 = smul.u32 32, %s18
      %p162 = scmp.lt.s32.totalorder %s161, 63
      %s163 = scalar_select %p162, %s161, 63
      %p164 = scmp.lt.s32.totalorder %s20, 0
      %s165 = scalar_select %p164, %s20, 0
      %s166 = sadd.s32 %s165, %s163
      %s167 = smul.addr %s166, 4
      %s168 = scalar_lea.vmem %s0, %s167
      %p169 = pneg %p55
      %p170 = pneg %p52
      %s171 = smul.u32 16, %s20
      %p172 = scmp.lt.s32.totalorder %s171, 15
      %s173 = scalar_select %p172, %s171, 15
      %p174 = scmp.lt.s32.totalorder %s19, 0
      %s175 = scalar_select %p174, %s19, 0
      %s176 = sadd.s32 %s175, %s173
      %s177 = smul.addr %s176, 4
      %s178 = scalar_lea.vmem %s1, %s177
      %p179 = pneg %p83
      %p180 = pneg %p80
      %p181 = pneg %p111
      %p182 = pneg %p108
      %s183 = smul.u32 32, %s18
      %p184 = scmp.lt.s32.totalorder %s183, 63
      %s185 = scalar_select %p184, %s183, 63
      %p186 = scmp.lt.s32.totalorder %s19, 0
      %s187 = scalar_select %p186, %s19, 0
      %s188 = sadd.s32 %s187, %s185
      %s189 = smul.addr %s188, 8
      %s190 = scalar_lea.vmem %s2, %s189
      %s191 = smul.u32 32, %s18
      %p192 = scmp.lt.s32.totalorder %s191, 63
      %s193 = scalar_select %p192, %s191, 63
      %p194 = scmp.lt.s32.totalorder %s20, 0
      %s195 = scalar_select %p194, %s20, 0
      %s196 = sadd.s32 %s195, %s193
      %s197 = smul.addr %s196, 4
      %s198 = scalar_lea.vmem %s0, %s197
      %s199 = smul.u32 32, %s18
      %s200 = smul.u32 16, %s20
      %p201 = scmp.lt.s32.totalorder %s200, 15
      %s202 = scalar_select %p201, %s200, 15
      %p203 = scmp.lt.s32.totalorder %s19, 0
      %s204 = scalar_select %p203, %s19, 0
      %s205 = sadd.s32 %s204, %s202
      %s206 = smul.addr %s205, 4
      %s207 = scalar_lea.vmem %s1, %s206
      %s208 = smul.u32 16, %s20
      %s209 = smul.u32 32, %s18
      %p210 = scmp.lt.s32.totalorder %s209, 63
      %s211 = scalar_select %p210, %s209, 63
      %p212 = scmp.lt.s32.totalorder %s19, 0
      %s213 = scalar_select %p212, %s19, 0
      %s214 = sadd.s32 %s213, %s211
      %s215 = smul.addr %s214, 8
      %s216 = scalar_lea.vmem %s2, %s215
      %s217 = smul.u32 32, %s18
      %p219 = scmp.eq.s32.totalorder %s20, 0
      // Predicated region
      $region29: #{_lambda_.28} parent=27 // pred_check
        %p220 = pneg %p219
      $region30: #{_lambda_.28} parent=27 // pred_check_branch
        %222 = sbr.rel (%p220) target = $region32
      $region31: #{_lambda_.28} parent=27 // pred_region
        %223 = vst [vmem:[#allocation2] sm:$0xff] 0.0
        %224 = vst [vmem:[#allocation2 + $0x8] sm:$0xff] 0.0
        %225 = vst [vmem:[#allocation2 + $0x10] sm:$0xff] 0.0
        %226 = vst [vmem:[#allocation2 + $0x18] sm:$0xff] 0.0
        %227 = vst [vmem:[#allocation2 + $0x20] sm:$0xff] 0.0
        %228 = vst [vmem:[#allocation2 + $0x28] sm:$0xff] 0.0
        %229 = vst [vmem:[#allocation2 + $0x30] sm:$0xff] 0.0
        %230 = vst [vmem:[#allocation2 + $0x38] sm:$0xff] 0.0
        %231 = vst [vmem:[#allocation2 + $0x40] sm:$0xff] 0.0
        %232 = vst [vmem:[#allocation2 + $0x48] sm:$0xff] 0.0
        %233 = vst [vmem:[#allocation2 + $0x50] sm:$0xff] 0.0
        %234 = vst [vmem:[#allocation2 + $0x58] sm:$0xff] 0.0
        %235 = vst [vmem:[#allocation2 + $0x60] sm:$0xff] 0.0
        %236 = vst [vmem:[#allocation2 + $0x68] sm:$0xff] 0.0
        %237 = vst [vmem:[#allocation2 + $0x70] sm:$0xff] 0.0
        %238 = vst [vmem:[#allocation2 + $0x78] sm:$0xff] 0.0
        %239 = vst [vmem:[#allocation2 + $0x80] sm:$0xff] 0.0
        %240 = vst [vmem:[#allocation2 + $0x88] sm:$0xff] 0.0
        %241 = vst [vmem:[#allocation2 + $0x90] sm:$0xff] 0.0
        %242 = vst [vmem:[#allocation2 + $0x98] sm:$0xff] 0.0
        %243 = vst [vmem:[#allocation2 + $0xa0] sm:$0xff] 0.0
        %244 = vst [vmem:[#allocation2 + $0xa8] sm:$0xff] 0.0
        %245 = vst [vmem:[#allocation2 + $0xb0] sm:$0xff] 0.0
        %246 = vst [vmem:[#allocation2 + $0xb8] sm:$0xff] 0.0
        %247 = vst [vmem:[#allocation2 + $0xc0] sm:$0xff] 0.0
        %248 = vst [vmem:[#allocation2 + $0xc8] sm:$0xff] 0.0
        %249 = vst [vmem:[#allocation2 + $0xd0] sm:$0xff] 0.0
        %250 = vst [vmem:[#allocation2 + $0xd8] sm:$0xff] 0.0
        %251 = vst [vmem:[#allocation2 + $0xe0] sm:$0xff] 0.0
        %252 = vst [vmem:[#allocation2 + $0xe8] sm:$0xff] 0.0
        %253 = vst [vmem:[#allocation2 + $0xf0] sm:$0xff] 0.0
        %254 = vst [vmem:[#allocation2 + $0xf8] sm:$0xff] 0.0
      $region32: #{_lambda_.28} parent=27 // pred_fallthru
        _
      %v255 = vld [vmem:[%s198] sm:$0xf]
      %v256 = vld [vmem:[%s198 + $0x4] sm:$0xf]
      %v257 = vld [vmem:[%s198 + $0x8] sm:$0xf]
      %v258 = vld [vmem:[%s198 + $0xc] sm:$0xf]
      %v259 = vld [vmem:[%s198 + $0x10] sm:$0xf]
      %v260 = vld [vmem:[%s198 + $0x14] sm:$0xf]
      %v261 = vld [vmem:[%s198 + $0x18] sm:$0xf]
      %v262 = vld [vmem:[%s198 + $0x1c] sm:$0xf]
      %v263 = vld [vmem:[%s198 + $0x20] sm:$0xf]
      %v264 = vld [vmem:[%s198 + $0x24] sm:$0xf]
      %v265 = vld [vmem:[%s198 + $0x28] sm:$0xf]
      %v266 = vld [vmem:[%s198 + $0x2c] sm:$0xf]
      %v267 = vld [vmem:[%s198 + $0x30] sm:$0xf]
      %v268 = vld [vmem:[%s198 + $0x34] sm:$0xf]
      %v269 = vld [vmem:[%s198 + $0x38] sm:$0xf]
      %v270 = vld [vmem:[%s198 + $0x3c] sm:$0xf]
      %v271 = vld [vmem:[%s198 + $0x40] sm:$0xf]
      %v272 = vld [vmem:[%s198 + $0x44] sm:$0xf]
      %v273 = vld [vmem:[%s198 + $0x48] sm:$0xf]
      %v274 = vld [vmem:[%s198 + $0x4c] sm:$0xf]
      %v275 = vld [vmem:[%s198 + $0x50] sm:$0xf]
      %v276 = vld [vmem:[%s198 + $0x54] sm:$0xf]
      %v277 = vld [vmem:[%s198 + $0x58] sm:$0xf]
      %v278 = vld [vmem:[%s198 + $0x5c] sm:$0xf]
      %v279 = vld [vmem:[%s198 + $0x60] sm:$0xf]
      %v280 = vld [vmem:[%s198 + $0x64] sm:$0xf]
      %v281 = vld [vmem:[%s198 + $0x68] sm:$0xf]
      %v282 = vld [vmem:[%s198 + $0x6c] sm:$0xf]
      %v283 = vld [vmem:[%s198 + $0x70] sm:$0xf]
      %v284 = vld [vmem:[%s198 + $0x74] sm:$0xf]
      %v285 = vld [vmem:[%s198 + $0x78] sm:$0xf]
      %v286 = vld [vmem:[%s198 + $0x7c] sm:$0xf]
      %v287 = vld [vmem:[#allocation2] sm:$0xff]
      %v288 = vld [vmem:[#allocation2 + $0x8] sm:$0xff]
      %v289 = vld [vmem:[#allocation2 + $0x10] sm:$0xff]
      %v290 = vld [vmem:[#allocation2 + $0x18] sm:$0xff]
      %v291 = vld [vmem:[#allocation2 + $0x20] sm:$0xff]
      %v292 = vld [vmem:[#allocation2 + $0x28] sm:$0xff]
      %v293 = vld [vmem:[#allocation2 + $0x30] sm:$0xff]
      %v294 = vld [vmem:[#allocation2 + $0x38] sm:$0xff]
      %v295 = vld [vmem:[#allocation2 + $0x40] sm:$0xff]
      %v296 = vld [vmem:[#allocation2 + $0x48] sm:$0xff]
      %v297 = vld [vmem:[#allocation2 + $0x50] sm:$0xff]
      %v298 = vld [vmem:[#allocation2 + $0x58] sm:$0xff]
      %v299 = vld [vmem:[#allocation2 + $0x60] sm:$0xff]
      %v300 = vld [vmem:[#allocation2 + $0x68] sm:$0xff]
      %v301 = vld [vmem:[#allocation2 + $0x70] sm:$0xff]
      %v302 = vld [vmem:[#allocation2 + $0x78] sm:$0xff]
      %v303 = vld [vmem:[#allocation2 + $0x80] sm:$0xff]
      %v304 = vld [vmem:[#allocation2 + $0x88] sm:$0xff]
      %v305 = vld [vmem:[#allocation2 + $0x90] sm:$0xff]
      %v306 = vld [vmem:[#allocation2 + $0x98] sm:$0xff]
      %v307 = vld [vmem:[#allocation2 + $0xa0] sm:$0xff]
      %v308 = vld [vmem:[#allocation2 + $0xa8] sm:$0xff]
      %v309 = vld [vmem:[#allocation2 + $0xb0] sm:$0xff]
      %v310 = vld [vmem:[#allocation2 + $0xb8] sm:$0xff]
      %v311 = vld [vmem:[#allocation2 + $0xc0] sm:$0xff]
      %v312 = vld [vmem:[#allocation2 + $0xc8] sm:$0xff]
      %v313 = vld [vmem:[#allocation2 + $0xd0] sm:$0xff]
      %v314 = vld [vmem:[#allocation2 + $0xd8] sm:$0xff]
      %v315 = vld [vmem:[#allocation2 + $0xe0] sm:$0xff]
      %v316 = vld [vmem:[#allocation2 + $0xe8] sm:$0xff]
      %v317 = vld [vmem:[#allocation2 + $0xf0] sm:$0xff]
      %v318 = vld [vmem:[#allocation2 + $0xf8] sm:$0xff]
      %v319 = vld [vmem:[%s207] sm:$0xf]
      %v320 = vld [vmem:[%s207 + $0x4] sm:$0xf]
      %v321 = vld [vmem:[%s207 + $0x8] sm:$0xf]
      %v322 = vld [vmem:[%s207 + $0xc] sm:$0xf]
      %v323 = vld [vmem:[%s207 + $0x10] sm:$0xf]
      %v324 = vld [vmem:[%s207 + $0x14] sm:$0xf]
      %v325 = vld [vmem:[%s207 + $0x18] sm:$0xf]
      %v326 = vld [vmem:[%s207 + $0x1c] sm:$0xf]
      %v327 = vld [vmem:[%s207 + $0x20] sm:$0xf]
      %v328 = vld [vmem:[%s207 + $0x24] sm:$0xf]
      %v329 = vld [vmem:[%s207 + $0x28] sm:$0xf]
      %v330 = vld [vmem:[%s207 + $0x2c] sm:$0xf]
      %v331 = vld [vmem:[%s207 + $0x30] sm:$0xf]
      %v332 = vld [vmem:[%s207 + $0x34] sm:$0xf]
      %v333 = vld [vmem:[%s207 + $0x38] sm:$0xf]
      %v334 = vld [vmem:[%s207 + $0x3c] sm:$0xf]
      %v367 = vunpack.c.l.b16 %v255
      %v368 = vunpack.c.l.b16 %v256
      %v369 = vunpack.c.l.b16 %v257
      %v370 = vunpack.c.l.b16 %v258
      %v371 = vunpack.c.l.b16 %v259
      %v372 = vunpack.c.l.b16 %v260
      %v373 = vunpack.c.l.b16 %v261
      %v374 = vunpack.c.l.b16 %v262
      %v375 = vunpack.c.l.b16 %v263
      %v376 = vunpack.c.l.b16 %v264
      %v377 = vunpack.c.l.b16 %v265
      %v378 = vunpack.c.l.b16 %v266
      %v379 = vunpack.c.l.b16 %v267
      %v380 = vunpack.c.l.b16 %v268
      %v381 = vunpack.c.l.b16 %v269
      %v382 = vunpack.c.l.b16 %v270
      %v383 = vunpack.c.l.b16 %v271
      %v384 = vunpack.c.l.b16 %v272
      %v385 = vunpack.c.l.b16 %v273
      %v386 = vunpack.c.l.b16 %v274
      %v387 = vunpack.c.l.b16 %v275
      %v388 = vunpack.c.l.b16 %v276
      %v389 = vunpack.c.l.b16 %v277
      %v390 = vunpack.c.l.b16 %v278
      %v391 = vunpack.c.l.b16 %v279
      %v392 = vunpack.c.l.b16 %v280
      %v393 = vunpack.c.l.b16 %v281
      %v394 = vunpack.c.l.b16 %v282
      %v395 = vunpack.c.l.b16 %v283
      %v396 = vunpack.c.l.b16 %v284
      %v397 = vunpack.c.l.b16 %v285
      %v398 = vunpack.c.l.b16 %v286
      %v399 = vpack.c.b16 %v368, %v367
      %v400 = vpack.c.b16 %v370, %v369
      %v401 = vpack.c.b16 %v372, %v371
      %v402 = vpack.c.b16 %v374, %v373
      %v403 = vpack.c.b16 %v376, %v375
      %v404 = vpack.c.b16 %v378, %v377
      %v405 = vpack.c.b16 %v380, %v379
      %v406 = vpack.c.b16 %v382, %v381
      %v407 = vpack.c.b16 %v384, %v383
      %v408 = vpack.c.b16 %v386, %v385
      %v409 = vpack.c.b16 %v388, %v387
      %v410 = vpack.c.b16 %v390, %v389
      %v411 = vpack.c.b16 %v392, %v391
      %v412 = vpack.c.b16 %v394, %v393
      %v413 = vpack.c.b16 %v396, %v395
      %v414 = vpack.c.b16 %v398, %v397
      %v447 = vunpack.c.l.b16 %v319
      %v448 = vunpack.c.l.b16 %v320
      %v449 = vunpack.c.l.b16 %v321
      %v450 = vunpack.c.l.b16 %v322
      %v451 = vunpack.c.l.b16 %v323
      %v452 = vunpack.c.l.b16 %v324
      %v453 = vunpack.c.l.b16 %v325
      %v454 = vunpack.c.l.b16 %v326
      %v455 = vunpack.c.l.b16 %v327
      %v456 = vunpack.c.l.b16 %v328
      %v457 = vunpack.c.l.b16 %v329
      %v458 = vunpack.c.l.b16 %v330
      %v459 = vunpack.c.l.b16 %v331
      %v460 = vunpack.c.l.b16 %v332
      %v461 = vunpack.c.l.b16 %v333
      %v462 = vunpack.c.l.b16 %v334
      %v463 = vpack.c.b16 %v448, %v447
      %v464 = vpack.c.b16 %v450, %v449
      %v465 = vpack.c.b16 %v452, %v451
      %v466 = vpack.c.b16 %v454, %v453
      %v467 = vpack.c.b16 %v456, %v455
      %v468 = vpack.c.b16 %v458, %v457
      %v469 = vpack.c.b16 %v460, %v459
      %v470 = vpack.c.b16 %v462, %v461
      %479 = vmatprep.subr.bf16.mxu0 0
      %480 = vmatpush1.bf16.msra.mxu0 %v470
      %481 = vmatprep.subr.bf16.mxu0 0
      %482 = vmatpush1.bf16.msra.mxu0 %v469
      %483 = vmatprep.subr.bf16.mxu0 0
      %484 = vmatpush1.bf16.msra.mxu0 %v468
      %485 = vmatprep.subr.bf16.mxu0 0
      %486 = vmatpush1.bf16.msra.mxu0 %v467
      %487 = vmatprep.subr.bf16.mxu0 0
      %488 = vmatpush1.bf16.msra.mxu0 %v466
      %489 = vmatprep.subr.bf16.mxu0 0
      %490 = vmatpush1.bf16.msra.mxu0 %v465
      %491 = vmatprep.subr.bf16.mxu0 0
      %492 = vmatpush1.bf16.msra.mxu0 %v464
      %493 = vmatprep.subr.bf16.mxu0 0
      %494 = vmatpush1.bf16.msra.mxu0 %v463
      %495 = vmatprep.subr.bf16.mxu0 0
      %496 = vmatpush2.bf16.msra.mxu0 0
      %497 = vmatprep.subr.bf16.mxu0 0
      %498 = vmatpush2.bf16.msra.mxu0 0
      %499 = vmatprep.subr.bf16.mxu0 0
      %500 = vmatpush2.bf16.msra.mxu0 0
      %501 = vmatprep.subr.bf16.mxu0 0
      %502 = vmatpush2.bf16.msra.mxu0 0
      %503 = vmatprep.subr.bf16.mxu0 0
      %504 = vmatpush2.bf16.msra.mxu0 0
      %505 = vmatprep.subr.bf16.mxu0 0
      %506 = vmatpush2.bf16.msra.mxu0 0
      %507 = vmatprep.subr.bf16.mxu0 0
      %508 = vmatpush2.bf16.msra.mxu0 0
      %509 = vmatprep.subr.bf16.mxu0 0
      %510 = vmatpush2.bf16.msra.mxu0 0
      %511 = vmatprep.mubr.bf16.mxu0 0
      %512 = vmatmul.mubr.bf16.gmra.mxu0 %v399
      %v513 = vpop.f32.mrf.mxu0
      %v514 = vadd.f32 0.0, %v513
      %v515 = vpop.f32.mrf.mxu0
      %v516 = vpop.f32.mrf.mxu0
      %v517 = vadd.f32 0.0, %v516
      %v518 = vpop.f32.mrf.mxu0
      %519 = vmatprep.mubr.bf16.mxu0 0
      %520 = vmatmul.mubr.bf16.gmra.mxu0 %v400
      %v521 = vpop.f32.mrf.mxu0
      %v522 = vadd.f32 0.0, %v521
      %v523 = vpop.f32.mrf.mxu0
      %v524 = vpop.f32.mrf.mxu0
      %v525 = vadd.f32 0.0, %v524
      %v526 = vpop.f32.mrf.mxu0
      %527 = vmatprep.mubr.bf16.mxu0 0
      %528 = vmatmul.mubr.bf16.gmra.mxu0 %v401
      %v529 = vpop.f32.mrf.mxu0
      %v530 = vadd.f32 0.0, %v529
      %v531 = vpop.f32.mrf.mxu0
      %v532 = vpop.f32.mrf.mxu0
      %v533 = vadd.f32 0.0, %v532
      %v534 = vpop.f32.mrf.mxu0
      %535 = vmatprep.mubr.bf16.mxu0 0
      %536 = vmatmul.mubr.bf16.gmra.mxu0 %v402
      %v537 = vpop.f32.mrf.mxu0
      %v538 = vadd.f32 0.0, %v537
      %v539 = vpop.f32.mrf.mxu0
      %v540 = vpop.f32.mrf.mxu0
      %v541 = vadd.f32 0.0, %v540
      %v542 = vpop.f32.mrf.mxu0
      %543 = vmatprep.mubr.bf16.mxu0 0
      %544 = vmatmul.mubr.bf16.gmra.mxu0 %v403
      %v545 = vpop.f32.mrf.mxu0
      %v546 = vadd.f32 0.0, %v545
      %v547 = vpop.f32.mrf.mxu0
      %v548 = vpop.f32.mrf.mxu0
      %v549 = vadd.f32 0.0, %v548
      %v550 = vpop.f32.mrf.mxu0
      %551 = vmatprep.mubr.bf16.mxu0 0
      %552 = vmatmul.mubr.bf16.gmra.mxu0 %v404
      %v553 = vpop.f32.mrf.mxu0
      %v554 = vadd.f32 0.0, %v553
      %v555 = vpop.f32.mrf.mxu0
      %v556 = vpop.f32.mrf.mxu0
      %v557 = vadd.f32 0.0, %v556
      %v558 = vpop.f32.mrf.mxu0
      %559 = vmatprep.mubr.bf16.mxu0 0
      %560 = vmatmul.mubr.bf16.gmra.mxu0 %v405
      %v561 = vpop.f32.mrf.mxu0
      %v562 = vadd.f32 0.0, %v561
      %v563 = vpop.f32.mrf.mxu0
      %v564 = vpop.f32.mrf.mxu0
      %v565 = vadd.f32 0.0, %v564
      %v566 = vpop.f32.mrf.mxu0
      %567 = vmatprep.mubr.bf16.mxu0 0
      %568 = vmatmul.mubr.bf16.gmra.mxu0 %v406
      %v569 = vpop.f32.mrf.mxu0
      %v570 = vadd.f32 0.0, %v569
      %v571 = vpop.f32.mrf.mxu0
      %v572 = vpop.f32.mrf.mxu0
      %v573 = vadd.f32 0.0, %v572
      %v574 = vpop.f32.mrf.mxu0
      %575 = vmatprep.mubr.bf16.mxu0 0
      %576 = vmatmul.mubr.bf16.gmra.mxu0 %v407
      %v577 = vpop.f32.mrf.mxu0
      %v578 = vadd.f32 0.0, %v577
      %v579 = vpop.f32.mrf.mxu0
      %v580 = vpop.f32.mrf.mxu0
      %v581 = vadd.f32 0.0, %v580
      %v582 = vpop.f32.mrf.mxu0
      %583 = vmatprep.mubr.bf16.mxu0 0
      %584 = vmatmul.mubr.bf16.gmra.mxu0 %v408
      %v585 = vpop.f32.mrf.mxu0
      %v586 = vadd.f32 0.0, %v585
      %v587 = vpop.f32.mrf.mxu0
      %v588 = vpop.f32.mrf.mxu0
      %v589 = vadd.f32 0.0, %v588
      %v590 = vpop.f32.mrf.mxu0
      %591 = vmatprep.mubr.bf16.mxu0 0
      %592 = vmatmul.mubr.bf16.gmra.mxu0 %v409
      %v593 = vpop.f32.mrf.mxu0
      %v594 = vadd.f32 0.0, %v593
      %v595 = vpop.f32.mrf.mxu0
      %v596 = vpop.f32.mrf.mxu0
      %v597 = vadd.f32 0.0, %v596
      %v598 = vpop.f32.mrf.mxu0
      %599 = vmatprep.mubr.bf16.mxu0 0
      %600 = vmatmul.mubr.bf16.gmra.mxu0 %v410
      %v601 = vpop.f32.mrf.mxu0
      %v602 = vadd.f32 0.0, %v601
      %v603 = vpop.f32.mrf.mxu0
      %v604 = vpop.f32.mrf.mxu0
      %v605 = vadd.f32 0.0, %v604
      %v606 = vpop.f32.mrf.mxu0
      %607 = vmatprep.mubr.bf16.mxu0 0
      %608 = vmatmul.mubr.bf16.gmra.mxu0 %v411
      %v609 = vpop.f32.mrf.mxu0
      %v610 = vadd.f32 0.0, %v609
      %v611 = vpop.f32.mrf.mxu0
      %v612 = vpop.f32.mrf.mxu0
      %v613 = vadd.f32 0.0, %v612
      %v614 = vpop.f32.mrf.mxu0
      %615 = vmatprep.mubr.bf16.mxu0 0
      %616 = vmatmul.mubr.bf16.gmra.mxu0 %v412
      %v617 = vpop.f32.mrf.mxu0
      %v618 = vadd.f32 0.0, %v617
      %v619 = vpop.f32.mrf.mxu0
      %v620 = vpop.f32.mrf.mxu0
      %v621 = vadd.f32 0.0, %v620
      %v622 = vpop.f32.mrf.mxu0
      %623 = vmatprep.mubr.bf16.mxu0 0
      %624 = vmatmul.mubr.bf16.gmra.mxu0 %v413
      %v625 = vpop.f32.mrf.mxu0
      %v626 = vadd.f32 0.0, %v625
      %v627 = vpop.f32.mrf.mxu0
      %v628 = vpop.f32.mrf.mxu0
      %v629 = vadd.f32 0.0, %v628
      %v630 = vpop.f32.mrf.mxu0
      %631 = vmatprep.mubr.bf16.mxu0 0
      %632 = vmatmul.mubr.bf16.gmra.mxu0 %v414
      %v633 = vpop.f32.mrf.mxu0
      %v634 = vadd.f32 0.0, %v633
      %v635 = vpop.f32.mrf.mxu0
      %v636 = vpop.f32.mrf.mxu0
      %v637 = vadd.f32 0.0, %v636
      %v638 = vpop.f32.mrf.mxu0
      %639 = vdwg.mxu0
      %v640 = vadd.f32 %v287, %v514
      %v641 = vadd.f32 %v288, %v517
      %v642 = vadd.f32 %v289, %v522
      %v643 = vadd.f32 %v290, %v525
      %v644 = vadd.f32 %v291, %v530
      %v645 = vadd.f32 %v292, %v533
      %v646 = vadd.f32 %v293, %v538
      %v647 = vadd.f32 %v294, %v541
      %v648 = vadd.f32 %v295, %v546
      %v649 = vadd.f32 %v296, %v549
      %v650 = vadd.f32 %v297, %v554
      %v651 = vadd.f32 %v298, %v557
      %v652 = vadd.f32 %v299, %v562
      %v653 = vadd.f32 %v300, %v565
      %v654 = vadd.f32 %v301, %v570
      %v655 = vadd.f32 %v302, %v573
      %v656 = vadd.f32 %v303, %v578
      %v657 = vadd.f32 %v304, %v581
      %v658 = vadd.f32 %v305, %v586
      %v659 = vadd.f32 %v306, %v589
      %v660 = vadd.f32 %v307, %v594
      %v661 = vadd.f32 %v308, %v597
      %v662 = vadd.f32 %v309, %v602
      %v663 = vadd.f32 %v310, %v605
      %v664 = vadd.f32 %v311, %v610
      %v665 = vadd.f32 %v312, %v613
      %v666 = vadd.f32 %v313, %v618
      %v667 = vadd.f32 %v314, %v621
      %v668 = vadd.f32 %v315, %v626
      %v669 = vadd.f32 %v316, %v629
      %v670 = vadd.f32 %v317, %v634
      %v671 = vadd.f32 %v318, %v637
      %672 = vst [vmem:[#allocation2] sm:$0xff] %v640
      %673 = vst [vmem:[#allocation2 + $0x8] sm:$0xff] %v641
      %674 = vst [vmem:[#allocation2 + $0x10] sm:$0xff] %v642
      %675 = vst [vmem:[#allocation2 + $0x18] sm:$0xff] %v643
      %676 = vst [vmem:[#allocation2 + $0x20] sm:$0xff] %v644
      %677 = vst [vmem:[#allocation2 + $0x28] sm:$0xff] %v645
      %678 = vst [vmem:[#allocation2 + $0x30] sm:$0xff] %v646
      %679 = vst [vmem:[#allocation2 + $0x38] sm:$0xff] %v647
      %680 = vst [vmem:[#allocation2 + $0x40] sm:$0xff] %v648
      %681 = vst [vmem:[#allocation2 + $0x48] sm:$0xff] %v649
      %682 = vst [vmem:[#allocation2 + $0x50] sm:$0xff] %v650
      %683 = vst [vmem:[#allocation2 + $0x58] sm:$0xff] %v651
      %684 = vst [vmem:[#allocation2 + $0x60] sm:$0xff] %v652
      %685 = vst [vmem:[#allocation2 + $0x68] sm:$0xff] %v653
      %686 = vst [vmem:[#allocation2 + $0x70] sm:$0xff] %v654
      %687 = vst [vmem:[#allocation2 + $0x78] sm:$0xff] %v655
      %688 = vst [vmem:[#allocation2 + $0x80] sm:$0xff] %v656
      %689 = vst [vmem:[#allocation2 + $0x88] sm:$0xff] %v657
      %690 = vst [vmem:[#allocation2 + $0x90] sm:$0xff] %v658
      %691 = vst [vmem:[#allocation2 + $0x98] sm:$0xff] %v659
      %692 = vst [vmem:[#allocation2 + $0xa0] sm:$0xff] %v660
      %693 = vst [vmem:[#allocation2 + $0xa8] sm:$0xff] %v661
      %694 = vst [vmem:[#allocation2 + $0xb0] sm:$0xff] %v662
      %695 = vst [vmem:[#allocation2 + $0xb8] sm:$0xff] %v663
      %696 = vst [vmem:[#allocation2 + $0xc0] sm:$0xff] %v664
      %697 = vst [vmem:[#allocation2 + $0xc8] sm:$0xff] %v665
      %698 = vst [vmem:[#allocation2 + $0xd0] sm:$0xff] %v666
      %699 = vst [vmem:[#allocation2 + $0xd8] sm:$0xff] %v667
      %700 = vst [vmem:[#allocation2 + $0xe0] sm:$0xff] %v668
      %701 = vst [vmem:[#allocation2 + $0xe8] sm:$0xff] %v669
      %702 = vst [vmem:[#allocation2 + $0xf0] sm:$0xff] %v670
      %703 = vst [vmem:[#allocation2 + $0xf8] sm:$0xff] %v671
      // Predicated region
      $region33: #{_lambda_.28} parent=27 // pred_check
        %p704 = pneg %p219
      $region34: #{_lambda_.28} parent=27 // pred_check_branch
        %706 = sbr.rel (%p704) target = $region36
      $region35: #{_lambda_.28} parent=27 // pred_region
        %v707 = vld [vmem:[#allocation2] sm:$0xff]
        %v708 = vld [vmem:[#allocation2 + $0x8] sm:$0xff]
        %v709 = vld [vmem:[#allocation2 + $0x10] sm:$0xff]
        %v710 = vld [vmem:[#allocation2 + $0x18] sm:$0xff]
        %v711 = vld [vmem:[#allocation2 + $0x20] sm:$0xff]
        %v712 = vld [vmem:[#allocation2 + $0x28] sm:$0xff]
        %v713 = vld [vmem:[#allocation2 + $0x30] sm:$0xff]
        %v714 = vld [vmem:[#allocation2 + $0x38] sm:$0xff]
        %v715 = vld [vmem:[#allocation2 + $0x40] sm:$0xff]
        %v716 = vld [vmem:[#allocation2 + $0x48] sm:$0xff]
        %v717 = vld [vmem:[#allocation2 + $0x50] sm:$0xff]
        %v718 = vld [vmem:[#allocation2 + $0x58] sm:$0xff]
        %v719 = vld [vmem:[#allocation2 + $0x60] sm:$0xff]
        %v720 = vld [vmem:[#allocation2 + $0x68] sm:$0xff]
        %v721 = vld [vmem:[#allocation2 + $0x70] sm:$0xff]
        %v722 = vld [vmem:[#allocation2 + $0x78] sm:$0xff]
        %v723 = vld [vmem:[#allocation2 + $0x80] sm:$0xff]
        %v724 = vld [vmem:[#allocation2 + $0x88] sm:$0xff]
        %v725 = vld [vmem:[#allocation2 + $0x90] sm:$0xff]
        %v726 = vld [vmem:[#allocation2 + $0x98] sm:$0xff]
        %v727 = vld [vmem:[#allocation2 + $0xa0] sm:$0xff]
        %v728 = vld [vmem:[#allocation2 + $0xa8] sm:$0xff]
        %v729 = vld [vmem:[#allocation2 + $0xb0] sm:$0xff]
        %v730 = vld [vmem:[#allocation2 + $0xb8] sm:$0xff]
        %v731 = vld [vmem:[#allocation2 + $0xc0] sm:$0xff]
        %v732 = vld [vmem:[#allocation2 + $0xc8] sm:$0xff]
        %v733 = vld [vmem:[#allocation2 + $0xd0] sm:$0xff]
        %v734 = vld [vmem:[#allocation2 + $0xd8] sm:$0xff]
        %v735 = vld [vmem:[#allocation2 + $0xe0] sm:$0xff]
        %v736 = vld [vmem:[#allocation2 + $0xe8] sm:$0xff]
        %v737 = vld [vmem:[#allocation2 + $0xf0] sm:$0xff]
        %v738 = vld [vmem:[#allocation2 + $0xf8] sm:$0xff]
        %739 = vst [vmem:[%s216] sm:$0xff] %v707
        %740 = vst [vmem:[%s216 + $0x8] sm:$0xff] %v708
        %741 = vst [vmem:[%s216 + $0x10] sm:$0xff] %v709
        %742 = vst [vmem:[%s216 + $0x18] sm:$0xff] %v710
        %743 = vst [vmem:[%s216 + $0x20] sm:$0xff] %v711
        %744 = vst [vmem:[%s216 + $0x28] sm:$0xff] %v712
        %745 = vst [vmem:[%s216 + $0x30] sm:$0xff] %v713
        %746 = vst [vmem:[%s216 + $0x38] sm:$0xff] %v714
        %747 = vst [vmem:[%s216 + $0x40] sm:$0xff] %v715
        %748 = vst [vmem:[%s216 + $0x48] sm:$0xff] %v716
        %749 = vst [vmem:[%s216 + $0x50] sm:$0xff] %v717
        %750 = vst [vmem:[%s216 + $0x58] sm:$0xff] %v718
        %751 = vst [vmem:[%s216 + $0x60] sm:$0xff] %v719
        %752 = vst [vmem:[%s216 + $0x68] sm:$0xff] %v720
        %753 = vst [vmem:[%s216 + $0x70] sm:$0xff] %v721
        %754 = vst [vmem:[%s216 + $0x78] sm:$0xff] %v722
        %755 = vst [vmem:[%s216 + $0x80] sm:$0xff] %v723
        %756 = vst [vmem:[%s216 + $0x88] sm:$0xff] %v724
        %757 = vst [vmem:[%s216 + $0x90] sm:$0xff] %v725
        %758 = vst [vmem:[%s216 + $0x98] sm:$0xff] %v726
        %759 = vst [vmem:[%s216 + $0xa0] sm:$0xff] %v727
        %760 = vst [vmem:[%s216 + $0xa8] sm:$0xff] %v728
        %761 = vst [vmem:[%s216 + $0xb0] sm:$0xff] %v729
        %762 = vst [vmem:[%s216 + $0xb8] sm:$0xff] %v730
        %763 = vst [vmem:[%s216 + $0xc0] sm:$0xff] %v731
        %764 = vst [vmem:[%s216 + $0xc8] sm:$0xff] %v732
        %765 = vst [vmem:[%s216 + $0xd0] sm:$0xff] %v733
        %766 = vst [vmem:[%s216 + $0xd8] sm:$0xff] %v734
        %767 = vst [vmem:[%s216 + $0xe0] sm:$0xff] %v735
        %768 = vst [vmem:[%s216 + $0xe8] sm:$0xff] %v736
        %769 = vst [vmem:[%s216 + $0xf0] sm:$0xff] %v737
        %770 = vst [vmem:[%s216 + $0xf8] sm:$0xff] %v738
      $region36: #{_lambda_.28} parent=27 // pred_fallthru
        _
      %s771 = smul.u32 32, %s18
      %p772 = scmp.lt.s32.totalorder %s771, 63
      %s773 = scalar_select %p772, %s771, 63
      %p774 = scmp.lt.s32.totalorder %s19, 0
      %s775 = scalar_select %p774, %s19, 0
      %s776 = sadd.s32 %s775, %s773
      %s777 = smul.addr %s776, 8
      %s778 = scalar_lea.vmem %s2, %s777
      // Predicated region
      $region37: #{_lambda_.28} parent=27 // pred_check
        %p779 = pneg %p108
      $region38: #{_lambda_.28} parent=27 // pred_check_branch
        %781 = sbr.rel (%p779) target = $region40
      $region39: #{_lambda_.28} parent=27 // pred_region
        %s782 = smul.u32 32, %s18
      $region40: #{_lambda_.28} parent=27 // pred_fallthru
        _
    $region28: #{_lambda_.28} parent=5 // pred_fallthru
      _
    %p783 = scmp.le.s32.totalorder 2, %s8
    // Predicated region
    $region41: #{_lambda_.28} parent=5 // pred_check
      %p784 = pneg %p783
    $region42: #{_lambda_.28} parent=5 // pred_check_branch
      %786 = sbr.rel (%p784) target = $region44
    $region43: #{_lambda_.28} parent=5 // pred_region
      %s787 = ssub.s32 %s8, 2
      // Predicated region
      $region45: #{_lambda_.28} parent=43 // pred_check
        %p788 = pneg %p114
      $region46: #{_lambda_.28} parent=43 // pred_check_branch
        %790 = sbr.rel (%p788) target = $region48
      $region47: #{_lambda_.28} parent=43 // pred_region
        %s791 = smul.u32 32, %s21
        %p792 = scmp.lt.s32.totalorder %s791, 63
        %s793 = scalar_select %p792, %s791, 63
        %p794 = scmp.lt.s32.totalorder %s22, 0
        %s795 = scalar_select %p794, %s22, 0
        %s796 = sadd.s32 %s795, %s793
        %s797 = smul.addr %s796, 8
        %s798 = scalar_lea.vmem %s2, %s797
      $region48: #{_lambda_.28} parent=43 // pred_fallthru
        _
    $region44: #{_lambda_.28} parent=5 // pred_fallthru
      _
  $region6: #{_lambda_.28} parent=0 // loop_footer
    %s12 = sadd.s32 1, %s8
  $region7: #{_lambda_.28} parent=0 // loop_footer_branch
    %7 = sbr.rel target = $region3
  $region8: #{_lambda_.28} parent=0 // loop_exit
    _

// kernel: _lambda_.29
$region0: #{_lambda_.29}
  #allocation0 [shape = 'u32[]', space=smem, size = 0x4, offset = 0x4, fixed_abs, tag = 'smem constant byte address 0x4 - core index']
  #allocation1 [shape = 'u32[144,128]{1,0:T(1,128)}', space=vmem, size = 0x12000, scoped, tag = 'internal scratch']
  #allocation2 [shape = 'f32[128,128]{1,0:T(8,128)}', space=vmem, size = 0x10000, scoped, tag = 'scratch operand']
  %s0 = inlined_call_operand.vmem [shape: bf16[128,128], index: 0, kind: input, shape index: {}]
  %s1 = inlined_call_operand.vmem [shape: bf16[128,128], index: 1, kind: input, shape index: {}]
  %s2 = inlined_call_operand.vmem [shape: f32[128,128], index: 2, kind: output, shape index: {}]
  %s3 = sld [smem:[#allocation0]]
  $region26: #{_lambda_.29} parent=0
    _
  %s5 = ssub.s32 1, %s3
  %s6 = scalar_select 0, %s5, %s3
  // Predicated region
  $region2: #{_lambda_.29} parent=0 // pred_check
    _
  $region3: #{_lambda_.29} parent=0 // pred_check_branch
    %8 = sbr.rel (0) target = $region5
  $region4: #{_lambda_.29} parent=0 // pred_region
    _
  $region5: #{_lambda_.29} parent=0 // pred_fallthru
    _
  // Predicated region
  $region6: #{_lambda_.29} parent=0 // pred_check
    _
  $region7: #{_lambda_.29} parent=0 // pred_check_branch
    %10 = sbr.rel (0) target = $region9
  $region8: #{_lambda_.29} parent=0 // pred_region
    _
  $region9: #{_lambda_.29} parent=0 // pred_fallthru
    _
  %p13 = scmp.eq.s32.totalorder 0, 0
  // Predicated region
  $region10: #{_lambda_.29} parent=0 // pred_check
    %p14 = pneg %p13
  $region11: #{_lambda_.29} parent=0 // pred_check_branch
    %16 = sbr.rel (%p14) target = $region13
  $region12: #{_lambda_.29} parent=0 // pred_region
    %17 = vst [vmem:[#allocation2] sm:$0xff] 0.0
    %18 = vst [vmem:[#allocation2 + $0x8] sm:$0xff] 0.0
    %19 = vst [vmem:[#allocation2 + $0x10] sm:$0xff] 0.0
    %20 = vst [vmem:[#allocation2 + $0x18] sm:$0xff] 0.0
    %21 = vst [vmem:[#allocation2 + $0x20] sm:$0xff] 0.0
    %22 = vst [vmem:[#allocation2 + $0x28] sm:$0xff] 0.0
    %23 = vst [vmem:[#allocation2 + $0x30] sm:$0xff] 0.0
    %24 = vst [vmem:[#allocation2 + $0x38] sm:$0xff] 0.0
    %25 = vst [vmem:[#allocation2 + $0x40] sm:$0xff] 0.0
    %26 = vst [vmem:[#allocation2 + $0x48] sm:$0xff] 0.0
    %27 = vst [vmem:[#allocation2 + $0x50] sm:$0xff] 0.0
    %28 = vst [vmem:[#allocation2 + $0x58] sm:$0xff] 0.0
    %29 = vst [vmem:[#allocation2 + $0x60] sm:$0xff] 0.0
    %30 = vst [vmem:[#allocation2 + $0x68] sm:$0xff] 0.0
    %31 = vst [vmem:[#allocation2 + $0x70] sm:$0xff] 0.0
    %32 = vst [vmem:[#allocation2 + $0x78] sm:$0xff] 0.0
  $region13: #{_lambda_.29} parent=0 // pred_fallthru
    _
  %v33 = vld [vmem:[%s0] sm:$0xf]
  %v34 = vld [vmem:[%s0 + $0x4] sm:$0xf]
  %v35 = vld [vmem:[%s0 + $0x8] sm:$0xf]
  %v36 = vld [vmem:[%s0 + $0xc] sm:$0xf]
  %v37 = vld [vmem:[%s0 + $0x10] sm:$0xf]
  %v38 = vld [vmem:[%s0 + $0x14] sm:$0xf]
  %v39 = vld [vmem:[%s0 + $0x18] sm:$0xf]
  %v40 = vld [vmem:[%s0 + $0x1c] sm:$0xf]
  %v41 = vld [vmem:[%s0 + $0x20] sm:$0xf]
  %v42 = vld [vmem:[%s0 + $0x24] sm:$0xf]
  %v43 = vld [vmem:[%s0 + $0x28] sm:$0xf]
  %v44 = vld [vmem:[%s0 + $0x2c] sm:$0xf]
  %v45 = vld [vmem:[%s0 + $0x30] sm:$0xf]
  %v46 = vld [vmem:[%s0 + $0x34] sm:$0xf]
  %v47 = vld [vmem:[%s0 + $0x38] sm:$0xf]
  %v48 = vld [vmem:[%s0 + $0x3c] sm:$0xf]
  %vm49 = vcmp.gt.bf16.partialorder %v33, 0
  %vm50 = vcmp.gt.bf16.partialorder %v34, 0
  %vm51 = vcmp.gt.bf16.partialorder %v35, 0
  %vm52 = vcmp.gt.bf16.partialorder %v36, 0
  %vm53 = vcmp.gt.bf16.partialorder %v37, 0
  %vm54 = vcmp.gt.bf16.partialorder %v38, 0
  %vm55 = vcmp.gt.bf16.partialorder %v39, 0
  %vm56 = vcmp.gt.bf16.partialorder %v40, 0
  %vm57 = vcmp.gt.bf16.partialorder %v41, 0
  %vm58 = vcmp.gt.bf16.partialorder %v42, 0
  %vm59 = vcmp.gt.bf16.partialorder %v43, 0
  %vm60 = vcmp.gt.bf16.partialorder %v44, 0
  %vm61 = vcmp.gt.bf16.partialorder %v45, 0
  %vm62 = vcmp.gt.bf16.partialorder %v46, 0
  %vm63 = vcmp.gt.bf16.partialorder %v47, 0
  %vm64 = vcmp.gt.bf16.partialorder %v48, 0
  %v65 = vmul.bf16 %v33, 1045249613
  %v66 = vmul.bf16 %v34, 1045249613
  %v67 = vmul.bf16 %v35, 1045249613
  %v68 = vmul.bf16 %v36, 1045249613
  %v69 = vmul.bf16 %v37, 1045249613
  %v70 = vmul.bf16 %v38, 1045249613
  %v71 = vmul.bf16 %v39, 1045249613
  %v72 = vmul.bf16 %v40, 1045249613
  %v73 = vmul.bf16 %v41, 1045249613
  %v74 = vmul.bf16 %v42, 1045249613
  %v75 = vmul.bf16 %v43, 1045249613
  %v76 = vmul.bf16 %v44, 1045249613
  %v77 = vmul.bf16 %v45, 1045249613
  %v78 = vmul.bf16 %v46, 1045249613
  %v79 = vmul.bf16 %v47, 1045249613
  %v80 = vmul.bf16 %v48, 1045249613
  %v81 = vsel %vm49, %v33, %v65
  %v82 = vsel %vm50, %v34, %v66
  %v83 = vsel %vm51, %v35, %v67
  %v84 = vsel %vm52, %v36, %v68
  %v85 = vsel %vm53, %v37, %v69
  %v86 = vsel %vm54, %v38, %v70
  %v87 = vsel %vm55, %v39, %v71
  %v88 = vsel %vm56, %v40, %v72
  %v89 = vsel %vm57, %v41, %v73
  %v90 = vsel %vm58, %v42, %v74
  %v91 = vsel %vm59, %v43, %v75
  %v92 = vsel %vm60, %v44, %v76
  %v93 = vsel %vm61, %v45, %v77
  %v94 = vsel %vm62, %v46, %v78
  %v95 = vsel %vm63, %v47, %v79
  %v96 = vsel %vm64, %v48, %v80
  %v97 = vld [vmem:[#allocation2] sm:$0xff]
  %v98 = vld [vmem:[#allocation2 + $0x8] sm:$0xff]
  %v99 = vld [vmem:[#allocation2 + $0x10] sm:$0xff]
  %v100 = vld [vmem:[#allocation2 + $0x18] sm:$0xff]
  %v101 = vld [vmem:[#allocation2 + $0x20] sm:$0xff]
  %v102 = vld [vmem:[#allocation2 + $0x28] sm:$0xff]
  %v103 = vld [vmem:[#allocation2 + $0x30] sm:$0xff]
  %v104 = vld [vmem:[#allocation2 + $0x38] sm:$0xff]
  %v105 = vld [vmem:[#allocation2 + $0x40] sm:$0xff]
  %v106 = vld [vmem:[#allocation2 + $0x48] sm:$0xff]
  %v107 = vld [vmem:[#allocation2 + $0x50] sm:$0xff]
  %v108 = vld [vmem:[#allocation2 + $0x58] sm:$0xff]
  %v109 = vld [vmem:[#allocation2 + $0x60] sm:$0xff]
  %v110 = vld [vmem:[#allocation2 + $0x68] sm:$0xff]
  %v111 = vld [vmem:[#allocation2 + $0x70] sm:$0xff]
  %v112 = vld [vmem:[#allocation2 + $0x78] sm:$0xff]
  %v113 = vld [vmem:[%s1] sm:$0xf]
  %v114 = vld [vmem:[%s1 + $0x4] sm:$0xf]
  %v115 = vld [vmem:[%s1 + $0x8] sm:$0xf]
  %v116 = vld [vmem:[%s1 + $0xc] sm:$0xf]
  %v117 = vld [vmem:[%s1 + $0x10] sm:$0xf]
  %v118 = vld [vmem:[%s1 + $0x14] sm:$0xf]
  %v119 = vld [vmem:[%s1 + $0x18] sm:$0xf]
  %v120 = vld [vmem:[%s1 + $0x1c] sm:$0xf]
  %v121 = vld [vmem:[%s1 + $0x20] sm:$0xf]
  %v122 = vld [vmem:[%s1 + $0x24] sm:$0xf]
  %v123 = vld [vmem:[%s1 + $0x28] sm:$0xf]
  %v124 = vld [vmem:[%s1 + $0x2c] sm:$0xf]
  %v125 = vld [vmem:[%s1 + $0x30] sm:$0xf]
  %v126 = vld [vmem:[%s1 + $0x34] sm:$0xf]
  %v127 = vld [vmem:[%s1 + $0x38] sm:$0xf]
  %v128 = vld [vmem:[%s1 + $0x3c] sm:$0xf]
  %v145 = vunpack.c.l.b16 %v81
  %v146 = vunpack.c.l.b16 %v82
  %v147 = vunpack.c.l.b16 %v83
  %v148 = vunpack.c.l.b16 %v84
  %v149 = vunpack.c.l.b16 %v85
  %v150 = vunpack.c.l.b16 %v86
  %v151 = vunpack.c.l.b16 %v87
  %v152 = vunpack.c.l.b16 %v88
  %v153 = vunpack.c.l.b16 %v89
  %v154 = vunpack.c.l.b16 %v90
  %v155 = vunpack.c.l.b16 %v91
  %v156 = vunpack.c.l.b16 %v92
  %v157 = vunpack.c.l.b16 %v93
  %v158 = vunpack.c.l.b16 %v94
  %v159 = vunpack.c.l.b16 %v95
  %v160 = vunpack.c.l.b16 %v96
  %v161 = vpack.c.b16 %v146, %v145
  %v162 = vpack.c.b16 %v148, %v147
  %v163 = vpack.c.b16 %v150, %v149
  %v164 = vpack.c.b16 %v152, %v151
  %v165 = vpack.c.b16 %v154, %v153
  %v166 = vpack.c.b16 %v156, %v155
  %v167 = vpack.c.b16 %v158, %v157
  %v168 = vpack.c.b16 %v160, %v159
  %v193 = vunpack.c.l.b16 %v113
  %v194 = vunpack.c.l.b16 %v114
  %v195 = vunpack.c.l.b16 %v115
  %v196 = vunpack.c.l.b16 %v116
  %v197 = vunpack.c.l.b16 %v117
  %v198 = vunpack.c.l.b16 %v118
  %v199 = vunpack.c.l.b16 %v119
  %v200 = vunpack.c.l.b16 %v120
  %v201 = vunpack.c.l.b16 %v121
  %v202 = vunpack.c.l.b16 %v122
  %v203 = vunpack.c.l.b16 %v123
  %v204 = vunpack.c.l.b16 %v124
  %v205 = vunpack.c.l.b16 %v125
  %v206 = vunpack.c.l.b16 %v126
  %v207 = vunpack.c.l.b16 %v127
  %v208 = vunpack.c.l.b16 %v128
  %v209 = vpack.c.b16 %v194, %v193
  %v210 = vpack.c.b16 %v196, %v195
  %v211 = vpack.c.b16 %v198, %v197
  %v212 = vpack.c.b16 %v200, %v199
  %v213 = vpack.c.b16 %v202, %v201
  %v214 = vpack.c.b16 %v204, %v203
  %v215 = vpack.c.b16 %v206, %v205
  %v216 = vpack.c.b16 %v208, %v207
  %225 = vmatprep.subr.bf16.mxu0 0
  %226 = vmatpush1.bf16.msra.mxu0 %v216
  %227 = vmatprep.subr.bf16.mxu0 0
  %228 = vmatpush1.bf16.msra.mxu0 %v215
  %229 = vmatprep.subr.bf16.mxu0 0
  %230 = vmatpush1.bf16.msra.mxu0 %v214
  %231 = vmatprep.subr.bf16.mxu0 0
  %232 = vmatpush1.bf16.msra.mxu0 %v213
  %233 = vmatprep.subr.bf16.mxu0 0
  %234 = vmatpush1.bf16.msra.mxu0 %v212
  %235 = vmatprep.subr.bf16.mxu0 0
  %236 = vmatpush1.bf16.msra.mxu0 %v211
  %237 = vmatprep.subr.bf16.mxu0 0
  %238 = vmatpush1.bf16.msra.mxu0 %v210
  %239 = vmatprep.subr.bf16.mxu0 0
  %240 = vmatpush1.bf16.msra.mxu0 %v209
  %241 = vmatprep.subr.bf16.mxu0 0
  %242 = vmatpush2.bf16.msra.mxu0 0
  %243 = vmatprep.subr.bf16.mxu0 0
  %244 = vmatpush2.bf16.msra.mxu0 0
  %245 = vmatprep.subr.bf16.mxu0 0
  %246 = vmatpush2.bf16.msra.mxu0 0
  %247 = vmatprep.subr.bf16.mxu0 0
  %248 = vmatpush2.bf16.msra.mxu0 0
  %249 = vmatprep.subr.bf16.mxu0 0
  %250 = vmatpush2.bf16.msra.mxu0 0
  %251 = vmatprep.subr.bf16.mxu0 0
  %252 = vmatpush2.bf16.msra.mxu0 0
  %253 = vmatprep.subr.bf16.mxu0 0
  %254 = vmatpush2.bf16.msra.mxu0 0
  %255 = vmatprep.subr.bf16.mxu0 0
  %256 = vmatpush2.bf16.msra.mxu0 0
  %257 = vmatprep.mubr.bf16.mxu0 0
  %258 = vmatmul.mubr.bf16.gmra.mxu0 %v161
  %v259 = vpop.f32.mrf.mxu0
  %v260 = vadd.f32 0.0, %v259
  %v261 = vpop.f32.mrf.mxu0
  %v262 = vpop.f32.mrf.mxu0
  %v263 = vadd.f32 0.0, %v262
  %v264 = vpop.f32.mrf.mxu0
  %265 = vmatprep.mubr.bf16.mxu0 0
  %266 = vmatmul.mubr.bf16.gmra.mxu0 %v162
  %v267 = vpop.f32.mrf.mxu0
  %v268 = vadd.f32 0.0, %v267
  %v269 = vpop.f32.mrf.mxu0
  %v270 = vpop.f32.mrf.mxu0
  %v271 = vadd.f32 0.0, %v270
  %v272 = vpop.f32.mrf.mxu0
  %273 = vmatprep.mubr.bf16.mxu0 0
  %274 = vmatmul.mubr.bf16.gmra.mxu0 %v163
  %v275 = vpop.f32.mrf.mxu0
  %v276 = vadd.f32 0.0, %v275
  %v277 = vpop.f32.mrf.mxu0
  %v278 = vpop.f32.mrf.mxu0
  %v279 = vadd.f32 0.0, %v278
  %v280 = vpop.f32.mrf.mxu0
  %281 = vmatprep.mubr.bf16.mxu0 0
  %282 = vmatmul.mubr.bf16.gmra.mxu0 %v164
  %v283 = vpop.f32.mrf.mxu0
  %v284 = vadd.f32 0.0, %v283
  %v285 = vpop.f32.mrf.mxu0
  %v286 = vpop.f32.mrf.mxu0
  %v287 = vadd.f32 0.0, %v286
  %v288 = vpop.f32.mrf.mxu0
  %289 = vmatprep.mubr.bf16.mxu0 0
  %290 = vmatmul.mubr.bf16.gmra.mxu0 %v165
  %v291 = vpop.f32.mrf.mxu0
  %v292 = vadd.f32 0.0, %v291
  %v293 = vpop.f32.mrf.mxu0
  %v294 = vpop.f32.mrf.mxu0
  %v295 = vadd.f32 0.0, %v294
  %v296 = vpop.f32.mrf.mxu0
  %297 = vmatprep.mubr.bf16.mxu0 0
  %298 = vmatmul.mubr.bf16.gmra.mxu0 %v166
  %v299 = vpop.f32.mrf.mxu0
  %v300 = vadd.f32 0.0, %v299
  %v301 = vpop.f32.mrf.mxu0
  %v302 = vpop.f32.mrf.mxu0
  %v303 = vadd.f32 0.0, %v302
  %v304 = vpop.f32.mrf.mxu0
  %305 = vmatprep.mubr.bf16.mxu0 0
  %306 = vmatmul.mubr.bf16.gmra.mxu0 %v167
  %v307 = vpop.f32.mrf.mxu0
  %v308 = vadd.f32 0.0, %v307
  %v309 = vpop.f32.mrf.mxu0
  %v310 = vpop.f32.mrf.mxu0
  %v311 = vadd.f32 0.0, %v310
  %v312 = vpop.f32.mrf.mxu0
  %313 = vmatprep.mubr.bf16.mxu0 0
  %314 = vmatmul.mubr.bf16.gmra.mxu0 %v168
  %v315 = vpop.f32.mrf.mxu0
  %v316 = vadd.f32 0.0, %v315
  %v317 = vpop.f32.mrf.mxu0
  %v318 = vpop.f32.mrf.mxu0
  %v319 = vadd.f32 0.0, %v318
  %v320 = vpop.f32.mrf.mxu0
  %321 = vdwg.mxu0
  %v322 = vadd.f32 %v97, %v260
  %v323 = vadd.f32 %v98, %v263
  %v324 = vadd.f32 %v99, %v268
  %v325 = vadd.f32 %v100, %v271
  %v326 = vadd.f32 %v101, %v276
  %v327 = vadd.f32 %v102, %v279
  %v328 = vadd.f32 %v103, %v284
  %v329 = vadd.f32 %v104, %v287
  %v330 = vadd.f32 %v105, %v292
  %v331 = vadd.f32 %v106, %v295
  %v332 = vadd.f32 %v107, %v300
  %v333 = vadd.f32 %v108, %v303
  %v334 = vadd.f32 %v109, %v308
  %v335 = vadd.f32 %v110, %v311
  %v336 = vadd.f32 %v111, %v316
  %v337 = vadd.f32 %v112, %v319
  %338 = vst [vmem:[#allocation2] sm:$0xff] %v322
  %339 = vst [vmem:[#allocation2 + $0x8] sm:$0xff] %v323
  %340 = vst [vmem:[#allocation2 + $0x10] sm:$0xff] %v324
  %341 = vst [vmem:[#allocation2 + $0x18] sm:$0xff] %v325
  %342 = vst [vmem:[#allocation2 + $0x20] sm:$0xff] %v326
  %343 = vst [vmem:[#allocation2 + $0x28] sm:$0xff] %v327
  %344 = vst [vmem:[#allocation2 + $0x30] sm:$0xff] %v328
  %345 = vst [vmem:[#allocation2 + $0x38] sm:$0xff] %v329
  %346 = vst [vmem:[#allocation2 + $0x40] sm:$0xff] %v330
  %347 = vst [vmem:[#allocation2 + $0x48] sm:$0xff] %v331
  %348 = vst [vmem:[#allocation2 + $0x50] sm:$0xff] %v332
  %349 = vst [vmem:[#allocation2 + $0x58] sm:$0xff] %v333
  %350 = vst [vmem:[#allocation2 + $0x60] sm:$0xff] %v334
  %351 = vst [vmem:[#allocation2 + $0x68] sm:$0xff] %v335
  %352 = vst [vmem:[#allocation2 + $0x70] sm:$0xff] %v336
  %353 = vst [vmem:[#allocation2 + $0x78] sm:$0xff] %v337
  // Predicated region
  $region14: #{_lambda_.29} parent=0 // pred_check
    %p354 = pneg %p13
  $region15: #{_lambda_.29} parent=0 // pred_check_branch
    %356 = sbr.rel (%p354) target = $region17
  $region16: #{_lambda_.29} parent=0 // pred_region
    %v357 = vld [vmem:[#allocation2] sm:$0xff]
    %v358 = vld [vmem:[#allocation2 + $0x8] sm:$0xff]
    %v359 = vld [vmem:[#allocation2 + $0x10] sm:$0xff]
    %v360 = vld [vmem:[#allocation2 + $0x18] sm:$0xff]
    %v361 = vld [vmem:[#allocation2 + $0x20] sm:$0xff]
    %v362 = vld [vmem:[#allocation2 + $0x28] sm:$0xff]
    %v363 = vld [vmem:[#allocation2 + $0x30] sm:$0xff]
    %v364 = vld [vmem:[#allocation2 + $0x38] sm:$0xff]
    %v365 = vld [vmem:[#allocation2 + $0x40] sm:$0xff]
    %v366 = vld [vmem:[#allocation2 + $0x48] sm:$0xff]
    %v367 = vld [vmem:[#allocation2 + $0x50] sm:$0xff]
    %v368 = vld [vmem:[#allocation2 + $0x58] sm:$0xff]
    %v369 = vld [vmem:[#allocation2 + $0x60] sm:$0xff]
    %v370 = vld [vmem:[#allocation2 + $0x68] sm:$0xff]
    %v371 = vld [vmem:[#allocation2 + $0x70] sm:$0xff]
    %v372 = vld [vmem:[#allocation2 + $0x78] sm:$0xff]
    %373 = vst [vmem:[%s2] sm:$0xff] %v357
    %374 = vst [vmem:[%s2 + $0x8] sm:$0xff] %v358
    %375 = vst [vmem:[%s2 + $0x10] sm:$0xff] %v359
    %376 = vst [vmem:[%s2 + $0x18] sm:$0xff] %v360
    %377 = vst [vmem:[%s2 + $0x20] sm:$0xff] %v361
    %378 = vst [vmem:[%s2 + $0x28] sm:$0xff] %v362
    %379 = vst [vmem:[%s2 + $0x30] sm:$0xff] %v363
    %380 = vst [vmem:[%s2 + $0x38] sm:$0xff] %v364
    %381 = vst [vmem:[%s2 + $0x40] sm:$0xff] %v365
    %382 = vst [vmem:[%s2 + $0x48] sm:$0xff] %v366
    %383 = vst [vmem:[%s2 + $0x50] sm:$0xff] %v367
    %384 = vst [vmem:[%s2 + $0x58] sm:$0xff] %v368
    %385 = vst [vmem:[%s2 + $0x60] sm:$0xff] %v369
    %386 = vst [vmem:[%s2 + $0x68] sm:$0xff] %v370
    %387 = vst [vmem:[%s2 + $0x70] sm:$0xff] %v371
    %388 = vst [vmem:[%s2 + $0x78] sm:$0xff] %v372
  $region17: #{_lambda_.29} parent=0 // pred_fallthru
    _
  // Predicated region
  $region18: #{_lambda_.29} parent=0 // pred_check
    _
  $region19: #{_lambda_.29} parent=0 // pred_check_branch
    %390 = sbr.rel (0) target = $region21
  $region20: #{_lambda_.29} parent=0 // pred_region
    _
  $region21: #{_lambda_.29} parent=0 // pred_fallthru
    _
  // Predicated region
  $region22: #{_lambda_.29} parent=0 // pred_check
    _
  $region23: #{_lambda_.29} parent=0 // pred_check_branch
    %392 = sbr.rel (0) target = $region25
  $region24: #{_lambda_.29} parent=0 // pred_region
    _
  $region25: #{_lambda_.29} parent=0 // pred_fallthru
    _

// kernel: _lambda_.30
$region0: #{_lambda_.30}
  #allocation0 [shape = 'u32[]', space=smem, size = 0x4, offset = 0x4, fixed_abs, tag = 'smem constant byte address 0x4 - core index']
  #allocation1 [shape = 'u32[144,128]{1,0:T(1,128)}', space=vmem, size = 0x12000, scoped, tag = 'internal scratch']
  %s0 = inlined_call_operand.vmem [shape: f32[128,16], index: 0, kind: input, shape index: {}]
  %s1 = inlined_call_operand.vmem [shape: f32[1,16], index: 1, kind: input, shape index: {}]
  %s2 = inlined_call_operand.vmem [shape: f32[1,16], index: 2, kind: input, shape index: {}]
  %s3 = inlined_call_operand.vmem [shape: f32[128,16], index: 3, kind: output, shape index: {}]
  %s4 = sld [smem:[#allocation0]]
  $region22: #{_lambda_.30} parent=0
    _
  %s6 = ssub.s32 1, %s4
  %s7 = scalar_select 0, %s6, %s4
  // Predicated region
  $region2: #{_lambda_.30} parent=0 // pred_check
    _
  $region3: #{_lambda_.30} parent=0 // pred_check_branch
    %9 = sbr.rel (0) target = $region5
  $region4: #{_lambda_.30} parent=0 // pred_region
    _
  $region5: #{_lambda_.30} parent=0 // pred_fallthru
    _
  // Predicated region
  $region6: #{_lambda_.30} parent=0 // pred_check
    _
  $region7: #{_lambda_.30} parent=0 // pred_check_branch
    %11 = sbr.rel (0) target = $region9
  $region8: #{_lambda_.30} parent=0 // pred_region
    _
  $region9: #{_lambda_.30} parent=0 // pred_fallthru
    _
  // Predicated region
  $region10: #{_lambda_.30} parent=0 // pred_check
    _
  $region11: #{_lambda_.30} parent=0 // pred_check_branch
    %13 = sbr.rel (0) target = $region13
  $region12: #{_lambda_.30} parent=0 // pred_region
    _
  $region13: #{_lambda_.30} parent=0 // pred_fallthru
    _
  %v14 = vld [vmem:[%s0] sm:$0xff]
  %v15 = vld [vmem:[%s0 + $0x8] sm:$0xff]
  %v16 = vld [vmem:[%s0 + $0x10] sm:$0xff]
  %v17 = vld [vmem:[%s0 + $0x18] sm:$0xff]
  %v18 = vld [vmem:[%s0 + $0x20] sm:$0xff]
  %v19 = vld [vmem:[%s0 + $0x28] sm:$0xff]
  %v20 = vld [vmem:[%s0 + $0x30] sm:$0xff]
  %v21 = vld [vmem:[%s0 + $0x38] sm:$0xff]
  %v22 = vld [vmem:[%s0 + $0x40] sm:$0xff]
  %v23 = vld [vmem:[%s0 + $0x48] sm:$0xff]
  %v24 = vld [vmem:[%s0 + $0x50] sm:$0xff]
  %v25 = vld [vmem:[%s0 + $0x58] sm:$0xff]
  %v26 = vld [vmem:[%s0 + $0x60] sm:$0xff]
  %v27 = vld [vmem:[%s0 + $0x68] sm:$0xff]
  %v28 = vld [vmem:[%s0 + $0x70] sm:$0xff]
  %v29 = vld [vmem:[%s0 + $0x78] sm:$0xff]
  %vm30 = vcmask 130048
  %v31 = vsel %vm30, %v14, 0.0
  %v32 = vsel %vm30, %v15, 0.0
  %v33 = vadd.f32 %v31, %v32
  %v34 = vsel %vm30, %v16, 0.0
  %v35 = vadd.f32 %v33, %v34
  %v36 = vsel %vm30, %v17, 0.0
  %v37 = vadd.f32 %v35, %v36
  %v38 = vsel %vm30, %v18, 0.0
  %v39 = vadd.f32 %v37, %v38
  %v40 = vsel %vm30, %v19, 0.0
  %v41 = vadd.f32 %v39, %v40
  %v42 = vsel %vm30, %v20, 0.0
  %v43 = vadd.f32 %v41, %v42
  %v44 = vsel %vm30, %v21, 0.0
  %v45 = vadd.f32 %v43, %v44
  %v46 = vsel %vm30, %v22, 0.0
  %v47 = vadd.f32 %v45, %v46
  %v48 = vsel %vm30, %v23, 0.0
  %v49 = vadd.f32 %v47, %v48
  %v50 = vsel %vm30, %v24, 0.0
  %v51 = vadd.f32 %v49, %v50
  %v52 = vsel %vm30, %v25, 0.0
  %v53 = vadd.f32 %v51, %v52
  %v54 = vsel %vm30, %v26, 0.0
  %v55 = vadd.f32 %v53, %v54
  %v56 = vsel %vm30, %v27, 0.0
  %v57 = vadd.f32 %v55, %v56
  %v58 = vsel %vm30, %v28, 0.0
  %v59 = vadd.f32 %v57, %v58
  %v60 = vsel %vm30, %v29, 0.0
  %v61 = vadd.f32 %v59, %v60
  %v62 = vrot.slane %v61, 4
  %v63 = vadd.f32 %v61, %v62
  %v64 = vrot.slane %v63, 2
  %v65 = vadd.f32 %v63, %v64
  %v66 = vrot.slane %v65, 1
  %v67 = vadd.f32 %v65, %v66
  %v68 = vmul.f32 %v14, %v14
  %v69 = vmul.f32 %v15, %v15
  %v70 = vmul.f32 %v16, %v16
  %v71 = vmul.f32 %v17, %v17
  %v72 = vmul.f32 %v18, %v18
  %v73 = vmul.f32 %v19, %v19
  %v74 = vmul.f32 %v20, %v20
  %v75 = vmul.f32 %v21, %v21
  %v76 = vmul.f32 %v22, %v22
  %v77 = vmul.f32 %v23, %v23
  %v78 = vmul.f32 %v24, %v24
  %v79 = vmul.f32 %v25, %v25
  %v80 = vmul.f32 %v26, %v26
  %v81 = vmul.f32 %v27, %v27
  %v82 = vmul.f32 %v28, %v28
  %v83 = vmul.f32 %v29, %v29
  %v84 = vsel %vm30, %v68, 0.0
  %v85 = vsel %vm30, %v69, 0.0
  %v86 = vadd.f32 %v84, %v85
  %v87 = vsel %vm30, %v70, 0.0
  %v88 = vadd.f32 %v86, %v87
  %v89 = vsel %vm30, %v71, 0.0
  %v90 = vadd.f32 %v88, %v89
  %v91 = vsel %vm30, %v72, 0.0
  %v92 = vadd.f32 %v90, %v91
  %v93 = vsel %vm30, %v73, 0.0
  %v94 = vadd.f32 %v92, %v93
  %v95 = vsel %vm30, %v74, 0.0
  %v96 = vadd.f32 %v94, %v95
  %v97 = vsel %vm30, %v75, 0.0
  %v98 = vadd.f32 %v96, %v97
  %v99 = vsel %vm30, %v76, 0.0
  %v100 = vadd.f32 %v98, %v99
  %v101 = vsel %vm30, %v77, 0.0
  %v102 = vadd.f32 %v100, %v101
  %v103 = vsel %vm30, %v78, 0.0
  %v104 = vadd.f32 %v102, %v103
  %v105 = vsel %vm30, %v79, 0.0
  %v106 = vadd.f32 %v104, %v105
  %v107 = vsel %vm30, %v80, 0.0
  %v108 = vadd.f32 %v106, %v107
  %v109 = vsel %vm30, %v81, 0.0
  %v110 = vadd.f32 %v108, %v109
  %v111 = vsel %vm30, %v82, 0.0
  %v112 = vadd.f32 %v110, %v111
  %v113 = vsel %vm30, %v83, 0.0
  %v114 = vadd.f32 %v112, %v113
  %v115 = vrot.slane %v114, 4
  %v116 = vadd.f32 %v114, %v115
  %v117 = vrot.slane %v116, 2
  %v118 = vadd.f32 %v116, %v117
  %v119 = vrot.slane %v118, 1
  %v120 = vadd.f32 %v118, %v119
  %v121 = vmul.f32 %v67, 0.0078125
  %v122 = vmul.f32 %v120, 0.0078125
  %v123 = vmul.f32 %v121, %v121
  %v124 = vsub.f32 %v122, %v123
  %v125 = vld [vmem:[%s1] sm:$0x1]
  %v126 = vadd.f32 %v124, 1e-05
  %v127 = vrsqrt.pop %v126
  %v128 = vmul.f32 %v125, %v127
  %v129 = vld [vmem:[%s2] sm:$0x1]
  %v130 = vmul.f32 %v121, %v128
  %v131 = vsub.f32 %v129, %v130
  %v133 = vlaneseq
  %v134 = vshrl.u32 %v133, 7
  %v135 = vsub.s32 0, %v134
  %v136 = vrot.slane %v128, %v135
  %v138 = vmul.f32 %v14, %v136
  %v139 = vmul.f32 %v15, %v136
  %v140 = vmul.f32 %v16, %v136
  %v141 = vmul.f32 %v17, %v136
  %v142 = vmul.f32 %v18, %v136
  %v143 = vmul.f32 %v19, %v136
  %v144 = vmul.f32 %v20, %v136
  %v145 = vmul.f32 %v21, %v136
  %v146 = vmul.f32 %v22, %v136
  %v147 = vmul.f32 %v23, %v136
  %v148 = vmul.f32 %v24, %v136
  %v149 = vmul.f32 %v25, %v136
  %v150 = vmul.f32 %v26, %v136
  %v151 = vmul.f32 %v27, %v136
  %v152 = vmul.f32 %v28, %v136
  %v153 = vmul.f32 %v29, %v136
  %v155 = vlaneseq
  %v156 = vshrl.u32 %v155, 7
  %v157 = vsub.s32 0, %v156
  %v158 = vrot.slane %v131, %v157
  %v160 = vadd.f32 %v138, %v158
  %v161 = vadd.f32 %v139, %v158
  %v162 = vadd.f32 %v140, %v158
  %v163 = vadd.f32 %v141, %v158
  %v164 = vadd.f32 %v142, %v158
  %v165 = vadd.f32 %v143, %v158
  %v166 = vadd.f32 %v144, %v158
  %v167 = vadd.f32 %v145, %v158
  %v168 = vadd.f32 %v146, %v158
  %v169 = vadd.f32 %v147, %v158
  %v170 = vadd.f32 %v148, %v158
  %v171 = vadd.f32 %v149, %v158
  %v172 = vadd.f32 %v150, %v158
  %v173 = vadd.f32 %v151, %v158
  %v174 = vadd.f32 %v152, %v158
  %v175 = vadd.f32 %v153, %v158
  %176 = vst.msk [vmem:[%s3] sm:$0xff] %vm30, %v160
  %177 = vst.msk [vmem:[%s3 + $0x8] sm:$0xff] %vm30, %v161
  %178 = vst.msk [vmem:[%s3 + $0x10] sm:$0xff] %vm30, %v162
  %179 = vst.msk [vmem:[%s3 + $0x18] sm:$0xff] %vm30, %v163
  %180 = vst.msk [vmem:[%s3 + $0x20] sm:$0xff] %vm30, %v164
  %181 = vst.msk [vmem:[%s3 + $0x28] sm:$0xff] %vm30, %v165
  %182 = vst.msk [vmem:[%s3 + $0x30] sm:$0xff] %vm30, %v166
  %183 = vst.msk [vmem:[%s3 + $0x38] sm:$0xff] %vm30, %v167
  %184 = vst.msk [vmem:[%s3 + $0x40] sm:$0xff] %vm30, %v168
  %185 = vst.msk [vmem:[%s3 + $0x48] sm:$0xff] %vm30, %v169
  %186 = vst.msk [vmem:[%s3 + $0x50] sm:$0xff] %vm30, %v170
  %187 = vst.msk [vmem:[%s3 + $0x58] sm:$0xff] %vm30, %v171
  %188 = vst.msk [vmem:[%s3 + $0x60] sm:$0xff] %vm30, %v172
  %189 = vst.msk [vmem:[%s3 + $0x68] sm:$0xff] %vm30, %v173
  %190 = vst.msk [vmem:[%s3 + $0x70] sm:$0xff] %vm30, %v174
  %191 = vst.msk [vmem:[%s3 + $0x78] sm:$0xff] %vm30, %v175
  // Predicated region
  $region14: #{_lambda_.30} parent=0 // pred_check
    _
  $region15: #{_lambda_.30} parent=0 // pred_check_branch
    %193 = sbr.rel (0) target = $region17
  $region16: #{_lambda_.30} parent=0 // pred_region
    _
  $region17: #{_lambda_.30} parent=0 // pred_fallthru
    _
  // Predicated region
  $region18: #{_lambda_.30} parent=0 // pred_check
    _
  $region19: #{_lambda_.30} parent=0 // pred_check_branch
    %195 = sbr.rel (0) target = $region21
  $region20: #{_lambda_.30} parent=0 // pred_region
    _
  $region21: #{_lambda_.30} parent=0 // pred_fallthru
    _

// kernel: _lambda_.31
$region0: #{_lambda_.31}
  #allocation0 [shape = 'u32[]', space=smem, size = 0x4, offset = 0x4, fixed_abs, tag = 'smem constant byte address 0x4 - core index']
  #allocation1 [shape = 'u32[144,128]{1,0:T(1,128)}', space=vmem, size = 0x12000, scoped, tag = 'internal scratch']
  #allocation2 [shape = 'f32[32,128]{1,0:T(8,128)}', space=vmem, size = 0x4000, scoped, tag = 'scratch operand']
  %s0 = inlined_call_operand.vmem [shape: bf16[32,256], index: 0, kind: input, shape index: {}]
  %s1 = inlined_call_operand.vmem [shape: bf16[256,128], index: 1, kind: input, shape index: {}]
  %s2 = inlined_call_operand.vmem [shape: f32[32,128], index: 2, kind: output, shape index: {}]
  %s3 = sld [smem:[#allocation0]]
  $region26: #{_lambda_.31} parent=0
    _
  %s5 = ssub.s32 1, %s3
  %s6 = scalar_select 0, %s5, %s3
  // Predicated region
  $region2: #{_lambda_.31} parent=0 // pred_check
    _
  $region3: #{_lambda_.31} parent=0 // pred_check_branch
    %8 = sbr.rel (0) target = $region5
  $region4: #{_lambda_.31} parent=0 // pred_region
    _
  $region5: #{_lambda_.31} parent=0 // pred_fallthru
    _
  // Predicated region
  $region6: #{_lambda_.31} parent=0 // pred_check
    _
  $region7: #{_lambda_.31} parent=0 // pred_check_branch
    %10 = sbr.rel (0) target = $region9
  $region8: #{_lambda_.31} parent=0 // pred_region
    _
  $region9: #{_lambda_.31} parent=0 // pred_fallthru
    _
  %p13 = scmp.eq.s32.totalorder 0, 0
  // Predicated region
  $region10: #{_lambda_.31} parent=0 // pred_check
    %p14 = pneg %p13
  $region11: #{_lambda_.31} parent=0 // pred_check_branch
    %16 = sbr.rel (%p14) target = $region13
  $region12: #{_lambda_.31} parent=0 // pred_region
    %17 = vst [vmem:[#allocation2] sm:$0xff] 0.0
    %18 = vst [vmem:[#allocation2 + $0x8] sm:$0xff] 0.0
    %19 = vst [vmem:[#allocation2 + $0x10] sm:$0xff] 0.0
    %20 = vst [vmem:[#allocation2 + $0x18] sm:$0xff] 0.0
  $region13: #{_lambda_.31} parent=0 // pred_fallthru
    _
  %v21 = vld [vmem:[%s0] sm:$0xff]
  %v22 = vld [vmem:[%s0 + $0x8] sm:$0xff]
  %v23 = vld [vmem:[%s0 + $0x10] sm:$0xff]
  %v24 = vld [vmem:[%s0 + $0x18] sm:$0xff]
  %vm25 = vcmp.gt.bf16.partialorder %v21, 0
  %vm26 = vcmp.gt.bf16.partialorder %v22, 0
  %vm27 = vcmp.gt.bf16.partialorder %v23, 0
  %vm28 = vcmp.gt.bf16.partialorder %v24, 0
  %v29 = vmul.bf16 %v21, 1045249613
  %v30 = vmul.bf16 %v22, 1045249613
  %v31 = vmul.bf16 %v23, 1045249613
  %v32 = vmul.bf16 %v24, 1045249613
  %v33 = vsel %vm25, %v21, %v29
  %v34 = vsel %vm26, %v22, %v30
  %v35 = vsel %vm27, %v23, %v31
  %v36 = vsel %vm28, %v24, %v32
  %v37 = vld [vmem:[#allocation2] sm:$0xff]
  %v38 = vld [vmem:[#allocation2 + $0x8] sm:$0xff]
  %v39 = vld [vmem:[#allocation2 + $0x10] sm:$0xff]
  %v40 = vld [vmem:[#allocation2 + $0x18] sm:$0xff]
  %v41 = vld [vmem:[%s1] sm:$0xf]
  %v42 = vld [vmem:[%s1 + $0x4] sm:$0xf]
  %v43 = vld [vmem:[%s1 + $0x8] sm:$0xf]
  %v44 = vld [vmem:[%s1 + $0xc] sm:$0xf]
  %v45 = vld [vmem:[%s1 + $0x10] sm:$0xf]
  %v46 = vld [vmem:[%s1 + $0x14] sm:$0xf]
  %v47 = vld [vmem:[%s1 + $0x18] sm:$0xf]
  %v48 = vld [vmem:[%s1 + $0x1c] sm:$0xf]
  %v49 = vld [vmem:[%s1 + $0x20] sm:$0xf]
  %v50 = vld [vmem:[%s1 + $0x24] sm:$0xf]
  %v51 = vld [vmem:[%s1 + $0x28] sm:$0xf]
  %v52 = vld [vmem:[%s1 + $0x2c] sm:$0xf]
  %v53 = vld [vmem:[%s1 + $0x30] sm:$0xf]
  %v54 = vld [vmem:[%s1 + $0x34] sm:$0xf]
  %v55 = vld [vmem:[%s1 + $0x38] sm:$0xf]
  %v56 = vld [vmem:[%s1 + $0x3c] sm:$0xf]
  %v57 = vld [vmem:[%s1 + $0x40] sm:$0xf]
  %v58 = vld [vmem:[%s1 + $0x44] sm:$0xf]
  %v59 = vld [vmem:[%s1 + $0x48] sm:$0xf]
  %v60 = vld [vmem:[%s1 + $0x4c] sm:$0xf]
  %v61 = vld [vmem:[%s1 + $0x50] sm:$0xf]
  %v62 = vld [vmem:[%s1 + $0x54] sm:$0xf]
  %v63 = vld [vmem:[%s1 + $0x58] sm:$0xf]
  %v64 = vld [vmem:[%s1 + $0x5c] sm:$0xf]
  %v65 = vld [vmem:[%s1 + $0x60] sm:$0xf]
  %v66 = vld [vmem:[%s1 + $0x64] sm:$0xf]
  %v67 = vld [vmem:[%s1 + $0x68] sm:$0xf]
  %v68 = vld [vmem:[%s1 + $0x6c] sm:$0xf]
  %v69 = vld [vmem:[%s1 + $0x70] sm:$0xf]
  %v70 = vld [vmem:[%s1 + $0x74] sm:$0xf]
  %v71 = vld [vmem:[%s1 + $0x78] sm:$0xf]
  %v72 = vld [vmem:[%s1 + $0x7c] sm:$0xf]
  %v77 = vunpack.c.l.b16 %v33
  %v78 = vunpack.c.h.b16 %v33
  %v79 = vunpack.c.l.b16 %v34
  %v80 = vunpack.c.h.b16 %v34
  %v81 = vunpack.c.l.b16 %v35
  %v82 = vunpack.c.h.b16 %v35
  %v83 = vunpack.c.l.b16 %v36
  %v84 = vunpack.c.h.b16 %v36
  %v85 = vpack.c.b16 %v79, %v77
  %v86 = vpack.c.b16 %v80, %v78
  %v87 = vpack.c.b16 %v83, %v81
  %v88 = vpack.c.b16 %v84, %v82
  %v125 = vunpack.c.l.b16 %v41
  %v126 = vunpack.c.l.b16 %v42
  %v127 = vunpack.c.l.b16 %v43
  %v128 = vunpack.c.l.b16 %v44
  %v129 = vunpack.c.l.b16 %v45
  %v130 = vunpack.c.l.b16 %v46
  %v131 = vunpack.c.l.b16 %v47
  %v132 = vunpack.c.l.b16 %v48
  %v133 = vunpack.c.l.b16 %v49
  %v134 = vunpack.c.l.b16 %v50
  %v135 = vunpack.c.l.b16 %v51
  %v136 = vunpack.c.l.b16 %v52
  %v137 = vunpack.c.l.b16 %v53
  %v138 = vunpack.c.l.b16 %v54
  %v139 = vunpack.c.l.b16 %v55
  %v140 = vunpack.c.l.b16 %v56
  %v141 = vunpack.c.l.b16 %v57
  %v142 = vunpack.c.l.b16 %v58
  %v143 = vunpack.c.l.b16 %v59
  %v144 = vunpack.c.l.b16 %v60
  %v145 = vunpack.c.l.b16 %v61
  %v146 = vunpack.c.l.b16 %v62
  %v147 = vunpack.c.l.b16 %v63
  %v148 = vunpack.c.l.b16 %v64
  %v149 = vunpack.c.l.b16 %v65
  %v150 = vunpack.c.l.b16 %v66
  %v151 = vunpack.c.l.b16 %v67
  %v152 = vunpack.c.l.b16 %v68
  %v153 = vunpack.c.l.b16 %v69
  %v154 = vunpack.c.l.b16 %v70
  %v155 = vunpack.c.l.b16 %v71
  %v156 = vunpack.c.l.b16 %v72
  %v157 = vpack.c.b16 %v126, %v125
  %v158 = vpack.c.b16 %v128, %v127
  %v159 = vpack.c.b16 %v130, %v129
  %v160 = vpack.c.b16 %v132, %v131
  %v161 = vpack.c.b16 %v134, %v133
  %v162 = vpack.c.b16 %v136, %v135
  %v163 = vpack.c.b16 %v138, %v137
  %v164 = vpack.c.b16 %v140, %v139
  %v165 = vpack.c.b16 %v142, %v141
  %v166 = vpack.c.b16 %v144, %v143
  %v167 = vpack.c.b16 %v146, %v145
  %v168 = vpack.c.b16 %v148, %v147
  %v169 = vpack.c.b16 %v150, %v149
  %v170 = vpack.c.b16 %v152, %v151
  %v171 = vpack.c.b16 %v154, %v153
  %v172 = vpack.c.b16 %v156, %v155
  %189 = vmatprep.subr.bf16.mxu0 0
  %190 = vmatpush1.bf16.msra.mxu0 %v164
  %191 = vmatprep.subr.bf16.mxu0 0
  %192 = vmatpush1.bf16.msra.mxu0 %v163
  %193 = vmatprep.subr.bf16.mxu0 0
  %194 = vmatpush1.bf16.msra.mxu0 %v162
  %195 = vmatprep.subr.bf16.mxu0 0
  %196 = vmatpush1.bf16.msra.mxu0 %v161
  %197 = vmatprep.subr.bf16.mxu0 0
  %198 = vmatpush1.bf16.msra.mxu0 %v160
  %199 = vmatprep.subr.bf16.mxu0 0
  %200 = vmatpush1.bf16.msra.mxu0 %v159
  %201 = vmatprep.subr.bf16.mxu0 0
  %202 = vmatpush1.bf16.msra.mxu0 %v158
  %203 = vmatprep.subr.bf16.mxu0 0
  %204 = vmatpush1.bf16.msra.mxu0 %v157
  %205 = vmatprep.subr.bf16.mxu0 0
  %206 = vmatpush2.bf16.msra.mxu0 %v172
  %207 = vmatprep.subr.bf16.mxu0 0
  %208 = vmatpush2.bf16.msra.mxu0 %v171
  %209 = vmatprep.subr.bf16.mxu0 0
  %210 = vmatpush2.bf16.msra.mxu0 %v170
  %211 = vmatprep.subr.bf16.mxu0 0
  %212 = vmatpush2.bf16.msra.mxu0 %v169
  %213 = vmatprep.subr.bf16.mxu0 0
  %214 = vmatpush2.bf16.msra.mxu0 %v168
  %215 = vmatprep.subr.bf16.mxu0 0
  %216 = vmatpush2.bf16.msra.mxu0 %v167
  %217 = vmatprep.subr.bf16.mxu0 0
  %218 = vmatpush2.bf16.msra.mxu0 %v166
  %219 = vmatprep.subr.bf16.mxu0 0
  %220 = vmatpush2.bf16.msra.mxu0 %v165
  %221 = vmatprep.mubr.bf16.mxu0 %v86
  %222 = vmatmul.mubr.bf16.gmra.mxu0 %v85
  %v223 = vpop.f32.mrf.mxu0
  %v224 = vadd.f32 0.0, %v223
  %v225 = vpop.f32.mrf.mxu0
  %v226 = vpop.f32.mrf.mxu0
  %v227 = vadd.f32 0.0, %v226
  %v228 = vpop.f32.mrf.mxu0
  %229 = vmatprep.mubr.bf16.mxu0 %v88
  %230 = vmatmul.mubr.bf16.gmra.mxu0 %v87
  %v231 = vpop.f32.mrf.mxu0
  %v232 = vadd.f32 0.0, %v231
  %v233 = vpop.f32.mrf.mxu0
  %v234 = vpop.f32.mrf.mxu0
  %v235 = vadd.f32 0.0, %v234
  %v236 = vpop.f32.mrf.mxu0
  %237 = vdwg.mxu0
  %v238 = vadd.f32 %v37, %v224
  %v239 = vadd.f32 %v38, %v227
  %v240 = vadd.f32 %v39, %v232
  %v241 = vadd.f32 %v40, %v235
  %242 = vst [vmem:[#allocation2] sm:$0xff] %v238
  %243 = vst [vmem:[#allocation2 + $0x8] sm:$0xff] %v239
  %244 = vst [vmem:[#allocation2 + $0x10] sm:$0xff] %v240
  %245 = vst [vmem:[#allocation2 + $0x18] sm:$0xff] %v241
  // Predicated region
  $region14: #{_lambda_.31} parent=0 // pred_check
    %p246 = pneg %p13
  $region15: #{_lambda_.31} parent=0 // pred_check_branch
    %248 = sbr.rel (%p246) target = $region17
  $region16: #{_lambda_.31} parent=0 // pred_region
    %v249 = vld [vmem:[#allocation2] sm:$0xff]
    %v250 = vld [vmem:[#allocation2 + $0x8] sm:$0xff]
    %v251 = vld [vmem:[#allocation2 + $0x10] sm:$0xff]
    %v252 = vld [vmem:[#allocation2 + $0x18] sm:$0xff]
    %253 = vst [vmem:[%s2] sm:$0xff] %v249
    %254 = vst [vmem:[%s2 + $0x8] sm:$0xff] %v250
    %255 = vst [vmem:[%s2 + $0x10] sm:$0xff] %v251
    %256 = vst [vmem:[%s2 + $0x18] sm:$0xff] %v252
  $region17: #{_lambda_.31} parent=0 // pred_fallthru
    _
  // Predicated region
  $region18: #{_lambda_.31} parent=0 // pred_check
    _
  $region19: #{_lambda_.31} parent=0 // pred_check_branch
    %258 = sbr.rel (0) target = $region21
  $region20: #{_lambda_.31} parent=0 // pred_region
    _
  $region21: #{_lambda_.31} parent=0 // pred_fallthru
    _
  // Predicated region
  $region22: #{_lambda_.31} parent=0 // pred_check
    _
  $region23: #{_lambda_.31} parent=0 // pred_check_branch
    %260 = sbr.rel (0) target = $region25
  $region24: #{_lambda_.31} parent=0 // pred_region
    _
  $region25: #{_lambda_.31} parent=0 // pred_fallthru
    _

// kernel: _lambda_.32
$region0: #{_lambda_.32}
  #allocation0 [shape = 'u32[]', space=smem, size = 0x4, offset = 0x4, fixed_abs, tag = 'smem constant byte address 0x4 - core index']
  #allocation1 [shape = 'u32[144,128]{1,0:T(1,128)}', space=vmem, size = 0x12000, scoped, tag = 'internal scratch']
  #allocation2 [shape = 'f32[8,128]{1,0:T(8,128)}', space=vmem, size = 0x1000, scoped, tag = 'scratch operand']
  %s0 = inlined_call_operand.vmem [shape: bf16[8,512], index: 0, kind: input, shape index: {}]
  %s1 = inlined_call_operand.vmem [shape: bf16[512,128], index: 1, kind: input, shape index: {}]
  %s2 = inlined_call_operand.vmem [shape: f32[8,128], index: 2, kind: output, shape index: {}]
  %s3 = sld [smem:[#allocation0]]
  $region26: #{_lambda_.32} parent=0
    _
  %s5 = ssub.s32 1, %s3
  %s6 = scalar_select 0, %s5, %s3
  // Predicated region
  $region2: #{_lambda_.32} parent=0 // pred_check
    _
  $region3: #{_lambda_.32} parent=0 // pred_check_branch
    %8 = sbr.rel (0) target = $region5
  $region4: #{_lambda_.32} parent=0 // pred_region
    _
  $region5: #{_lambda_.32} parent=0 // pred_fallthru
    _
  // Predicated region
  $region6: #{_lambda_.32} parent=0 // pred_check
    _
  $region7: #{_lambda_.32} parent=0 // pred_check_branch
    %10 = sbr.rel (0) target = $region9
  $region8: #{_lambda_.32} parent=0 // pred_region
    _
  $region9: #{_lambda_.32} parent=0 // pred_fallthru
    _
  %p13 = scmp.eq.s32.totalorder 0, 0
  // Predicated region
  $region10: #{_lambda_.32} parent=0 // pred_check
    %p14 = pneg %p13
  $region11: #{_lambda_.32} parent=0 // pred_check_branch
    %16 = sbr.rel (%p14) target = $region13
  $region12: #{_lambda_.32} parent=0 // pred_region
    %17 = vst [vmem:[#allocation2] sm:$0xff] 0.0
  $region13: #{_lambda_.32} parent=0 // pred_fallthru
    _
  %v18 = vld [vmem:[%s0] sm:$0xff]
  %v19 = vld [vmem:[%s0 + $0x8] sm:$0xff]
  %vm20 = vcmp.gt.bf16.partialorder %v18, 0
  %vm21 = vcmp.gt.bf16.partialorder %v19, 0
  %v22 = vmul.bf16 %v18, 1045249613
  %v23 = vmul.bf16 %v19, 1045249613
  %v24 = vsel %vm20, %v18, %v22
  %v25 = vsel %vm21, %v19, %v23
  %v26 = vld [vmem:[#allocation2] sm:$0xff]
  %v27 = vld [vmem:[%s1] sm:$0xf]
  %v28 = vld [vmem:[%s1 + $0x4] sm:$0xf]
  %v29 = vld [vmem:[%s1 + $0x8] sm:$0xf]
  %v30 = vld [vmem:[%s1 + $0xc] sm:$0xf]
  %v31 = vld [vmem:[%s1 + $0x10] sm:$0xf]
  %v32 = vld [vmem:[%s1 + $0x14] sm:$0xf]
  %v33 = vld [vmem:[%s1 + $0x18] sm:$0xf]
  %v34 = vld [vmem:[%s1 + $0x1c] sm:$0xf]
  %v35 = vld [vmem:[%s1 + $0x20] sm:$0xf]
  %v36 = vld [vmem:[%s1 + $0x24] sm:$0xf]
  %v37 = vld [vmem:[%s1 + $0x28] sm:$0xf]
  %v38 = vld [vmem:[%s1 + $0x2c] sm:$0xf]
  %v39 = vld [vmem:[%s1 + $0x30] sm:$0xf]
  %v40 = vld [vmem:[%s1 + $0x34] sm:$0xf]
  %v41 = vld [vmem:[%s1 + $0x38] sm:$0xf]
  %v42 = vld [vmem:[%s1 + $0x3c] sm:$0xf]
  %v43 = vld [vmem:[%s1 + $0x40] sm:$0xf]
  %v44 = vld [vmem:[%s1 + $0x44] sm:$0xf]
  %v45 = vld [vmem:[%s1 + $0x48] sm:$0xf]
  %v46 = vld [vmem:[%s1 + $0x4c] sm:$0xf]
  %v47 = vld [vmem:[%s1 + $0x50] sm:$0xf]
  %v48 = vld [vmem:[%s1 + $0x54] sm:$0xf]
  %v49 = vld [vmem:[%s1 + $0x58] sm:$0xf]
  %v50 = vld [vmem:[%s1 + $0x5c] sm:$0xf]
  %v51 = vld [vmem:[%s1 + $0x60] sm:$0xf]
  %v52 = vld [vmem:[%s1 + $0x64] sm:$0xf]
  %v53 = vld [vmem:[%s1 + $0x68] sm:$0xf]
  %v54 = vld [vmem:[%s1 + $0x6c] sm:$0xf]
  %v55 = vld [vmem:[%s1 + $0x70] sm:$0xf]
  %v56 = vld [vmem:[%s1 + $0x74] sm:$0xf]
  %v57 = vld [vmem:[%s1 + $0x78] sm:$0xf]
  %v58 = vld [vmem:[%s1 + $0x7c] sm:$0xf]
  %v59 = vld [vmem:[%s1 + $0x80] sm:$0xf]
  %v60 = vld [vmem:[%s1 + $0x84] sm:$0xf]
  %v61 = vld [vmem:[%s1 + $0x88] sm:$0xf]
  %v62 = vld [vmem:[%s1 + $0x8c] sm:$0xf]
  %v63 = vld [vmem:[%s1 + $0x90] sm:$0xf]
  %v64 = vld [vmem:[%s1 + $0x94] sm:$0xf]
  %v65 = vld [vmem:[%s1 + $0x98] sm:$0xf]
  %v66 = vld [vmem:[%s1 + $0x9c] sm:$0xf]
  %v67 = vld [vmem:[%s1 + $0xa0] sm:$0xf]
  %v68 = vld [vmem:[%s1 + $0xa4] sm:$0xf]
  %v69 = vld [vmem:[%s1 + $0xa8] sm:$0xf]
  %v70 = vld [vmem:[%s1 + $0xac] sm:$0xf]
  %v71 = vld [vmem:[%s1 + $0xb0] sm:$0xf]
  %v72 = vld [vmem:[%s1 + $0xb4] sm:$0xf]
  %v73 = vld [vmem:[%s1 + $0xb8] sm:$0xf]
  %v74 = vld [vmem:[%s1 + $0xbc] sm:$0xf]
  %v75 = vld [vmem:[%s1 + $0xc0] sm:$0xf]
  %v76 = vld [vmem:[%s1 + $0xc4] sm:$0xf]
  %v77 = vld [vmem:[%s1 + $0xc8] sm:$0xf]
  %v78 = vld [vmem:[%s1 + $0xcc] sm:$0xf]
  %v79 = vld [vmem:[%s1 + $0xd0] sm:$0xf]
  %v80 = vld [vmem:[%s1 + $0xd4] sm:$0xf]
  %v81 = vld [vmem:[%s1 + $0xd8] sm:$0xf]
  %v82 = vld [vmem:[%s1 + $0xdc] sm:$0xf]
  %v83 = vld [vmem:[%s1 + $0xe0] sm:$0xf]
  %v84 = vld [vmem:[%s1 + $0xe4] sm:$0xf]
  %v85 = vld [vmem:[%s1 + $0xe8] sm:$0xf]
  %v86 = vld [vmem:[%s1 + $0xec] sm:$0xf]
  %v87 = vld [vmem:[%s1 + $0xf0] sm:$0xf]
  %v88 = vld [vmem:[%s1 + $0xf4] sm:$0xf]
  %v89 = vld [vmem:[%s1 + $0xf8] sm:$0xf]
  %v90 = vld [vmem:[%s1 + $0xfc] sm:$0xf]
  %v93 = vunpack.c.l.b16 %v24
  %v94 = vunpack.c.h.b16 %v24
  %v95 = vunpack.c.l.b16 %v25
  %v96 = vunpack.c.h.b16 %v25
  %v97 = vpack.c.b16 %v93, %v93
  %v98 = vpack.c.b16 %v94, %v94
  %v99 = vpack.c.b16 %v95, %v95
  %v100 = vpack.c.b16 %v96, %v96
  %v169 = vunpack.c.l.b16 %v27
  %v170 = vunpack.c.l.b16 %v28
  %v171 = vunpack.c.l.b16 %v29
  %v172 = vunpack.c.l.b16 %v30
  %v173 = vunpack.c.l.b16 %v31
  %v174 = vunpack.c.l.b16 %v32
  %v175 = vunpack.c.l.b16 %v33
  %v176 = vunpack.c.l.b16 %v34
  %v177 = vunpack.c.l.b16 %v35
  %v178 = vunpack.c.l.b16 %v36
  %v179 = vunpack.c.l.b16 %v37
  %v180 = vunpack.c.l.b16 %v38
  %v181 = vunpack.c.l.b16 %v39
  %v182 = vunpack.c.l.b16 %v40
  %v183 = vunpack.c.l.b16 %v41
  %v184 = vunpack.c.l.b16 %v42
  %v185 = vunpack.c.l.b16 %v43
  %v186 = vunpack.c.l.b16 %v44
  %v187 = vunpack.c.l.b16 %v45
  %v188 = vunpack.c.l.b16 %v46
  %v189 = vunpack.c.l.b16 %v47
  %v190 = vunpack.c.l.b16 %v48
  %v191 = vunpack.c.l.b16 %v49
  %v192 = vunpack.c.l.b16 %v50
  %v193 = vunpack.c.l.b16 %v51
  %v194 = vunpack.c.l.b16 %v52
  %v195 = vunpack.c.l.b16 %v53
  %v196 = vunpack.c.l.b16 %v54
  %v197 = vunpack.c.l.b16 %v55
  %v198 = vunpack.c.l.b16 %v56
  %v199 = vunpack.c.l.b16 %v57
  %v200 = vunpack.c.l.b16 %v58
  %v201 = vunpack.c.l.b16 %v59
  %v202 = vunpack.c.l.b16 %v60
  %v203 = vunpack.c.l.b16 %v61
  %v204 = vunpack.c.l.b16 %v62
  %v205 = vunpack.c.l.b16 %v63
  %v206 = vunpack.c.l.b16 %v64
  %v207 = vunpack.c.l.b16 %v65
  %v208 = vunpack.c.l.b16 %v66
  %v209 = vunpack.c.l.b16 %v67
  %v210 = vunpack.c.l.b16 %v68
  %v211 = vunpack.c.l.b16 %v69
  %v212 = vunpack.c.l.b16 %v70
  %v213 = vunpack.c.l.b16 %v71
  %v214 = vunpack.c.l.b16 %v72
  %v215 = vunpack.c.l.b16 %v73
  %v216 = vunpack.c.l.b16 %v74
  %v217 = vunpack.c.l.b16 %v75
  %v218 = vunpack.c.l.b16 %v76
  %v219 = vunpack.c.l.b16 %v77
  %v220 = vunpack.c.l.b16 %v78
  %v221 = vunpack.c.l.b16 %v79
  %v222 = vunpack.c.l.b16 %v80
  %v223 = vunpack.c.l.b16 %v81
  %v224 = vunpack.c.l.b16 %v82
  %v225 = vunpack.c.l.b16 %v83
  %v226 = vunpack.c.l.b16 %v84
  %v227 = vunpack.c.l.b16 %v85
  %v228 = vunpack.c.l.b16 %v86
  %v229 = vunpack.c.l.b16 %v87
  %v230 = vunpack.c.l.b16 %v88
  %v231 = vunpack.c.l.b16 %v89
  %v232 = vunpack.c.l.b16 %v90
  %v233 = vpack.c.b16 %v170, %v169
  %v234 = vpack.c.b16 %v172, %v171
  %v235 = vpack.c.b16 %v174, %v173
  %v236 = vpack.c.b16 %v176, %v175
  %v237 = vpack.c.b16 %v178, %v177
  %v238 = vpack.c.b16 %v180, %v179
  %v239 = vpack.c.b16 %v182, %v181
  %v240 = vpack.c.b16 %v184, %v183
  %v241 = vpack.c.b16 %v186, %v185
  %v242 = vpack.c.b16 %v188, %v187
  %v243 = vpack.c.b16 %v190, %v189
  %v244 = vpack.c.b16 %v192, %v191
  %v245 = vpack.c.b16 %v194, %v193
  %v246 = vpack.c.b16 %v196, %v195
  %v247 = vpack.c.b16 %v198, %v197
  %v248 = vpack.c.b16 %v200, %v199
  %v249 = vpack.c.b16 %v202, %v201
  %v250 = vpack.c.b16 %v204, %v203
  %v251 = vpack.c.b16 %v206, %v205
  %v252 = vpack.c.b16 %v208, %v207
  %v253 = vpack.c.b16 %v210, %v209
  %v254 = vpack.c.b16 %v212, %v211
  %v255 = vpack.c.b16 %v214, %v213
  %v256 = vpack.c.b16 %v216, %v215
  %v257 = vpack.c.b16 %v218, %v217
  %v258 = vpack.c.b16 %v220, %v219
  %v259 = vpack.c.b16 %v222, %v221
  %v260 = vpack.c.b16 %v224, %v223
  %v261 = vpack.c.b16 %v226, %v225
  %v262 = vpack.c.b16 %v228, %v227
  %v263 = vpack.c.b16 %v230, %v229
  %v264 = vpack.c.b16 %v232, %v231
  %297 = vmatprep.subr.bf16.mxu0 0
  %298 = vmatpush1.bf16.msra.mxu0 %v240
  %299 = vmatprep.subr.bf16.mxu0 0
  %300 = vmatpush1.bf16.msra.mxu0 %v239
  %301 = vmatprep.subr.bf16.mxu0 0
  %302 = vmatpush1.bf16.msra.mxu0 %v238
  %303 = vmatprep.subr.bf16.mxu0 0
  %304 = vmatpush1.bf16.msra.mxu0 %v237
  %305 = vmatprep.subr.bf16.mxu0 0
  %306 = vmatpush1.bf16.msra.mxu0 %v236
  %307 = vmatprep.subr.bf16.mxu0 0
  %308 = vmatpush1.bf16.msra.mxu0 %v235
  %309 = vmatprep.subr.bf16.mxu0 0
  %310 = vmatpush1.bf16.msra.mxu0 %v234
  %311 = vmatprep.subr.bf16.mxu0 0
  %312 = vmatpush1.bf16.msra.mxu0 %v233
  %313 = vmatprep.subr.bf16.mxu0 0
  %314 = vmatpush2.bf16.msra.mxu0 %v248
  %315 = vmatprep.subr.bf16.mxu0 0
  %316 = vmatpush2.bf16.msra.mxu0 %v247
  %317 = vmatprep.subr.bf16.mxu0 0
  %318 = vmatpush2.bf16.msra.mxu0 %v246
  %319 = vmatprep.subr.bf16.mxu0 0
  %320 = vmatpush2.bf16.msra.mxu0 %v245
  %321 = vmatprep.subr.bf16.mxu0 0
  %322 = vmatpush2.bf16.msra.mxu0 %v244
  %323 = vmatprep.subr.bf16.mxu0 0
  %324 = vmatpush2.bf16.msra.mxu0 %v243
  %325 = vmatprep.subr.bf16.mxu0 0
  %326 = vmatpush2.bf16.msra.mxu0 %v242
  %327 = vmatprep.subr.bf16.mxu0 0
  %328 = vmatpush2.bf16.msra.mxu0 %v241
  %329 = vmatprep.mubr.bf16.mxu0 %v98
  %330 = vmatmul.mubr.bf16.gmra.mxu0 %v97
  %v331 = vpop.f32.mrf.mxu0
  %v332 = vadd.f32 0.0, %v331
  %v333 = vpop.f32.mrf.mxu0
  %v334 = vpop.f32.mrf.mxu0
  %v335 = vpop.f32.mrf.mxu0
  %336 = vdwg.mxu0
  %337 = vmatprep.subr.bf16.mxu0 0
  %338 = vmatpush1.bf16.msra.mxu0 %v256
  %339 = vmatprep.subr.bf16.mxu0 0
  %340 = vmatpush1.bf16.msra.mxu0 %v255
  %341 = vmatprep.subr.bf16.mxu0 0
  %342 = vmatpush1.bf16.msra.mxu0 %v254
  %343 = vmatprep.subr.bf16.mxu0 0
  %344 = vmatpush1.bf16.msra.mxu0 %v253
  %345 = vmatprep.subr.bf16.mxu0 0
  %346 = vmatpush1.bf16.msra.mxu0 %v252
  %347 = vmatprep.subr.bf16.mxu0 0
  %348 = vmatpush1.bf16.msra.mxu0 %v251
  %349 = vmatprep.subr.bf16.mxu0 0
  %350 = vmatpush1.bf16.msra.mxu0 %v250
  %351 = vmatprep.subr.bf16.mxu0 0
  %352 = vmatpush1.bf16.msra.mxu0 %v249
  %353 = vmatprep.subr.bf16.mxu0 0
  %354 = vmatpush2.bf16.msra.mxu0 %v264
  %355 = vmatprep.subr.bf16.mxu0 0
  %356 = vmatpush2.bf16.msra.mxu0 %v263
  %357 = vmatprep.subr.bf16.mxu0 0
  %358 = vmatpush2.bf16.msra.mxu0 %v262
  %359 = vmatprep.subr.bf16.mxu0 0
  %360 = vmatpush2.bf16.msra.mxu0 %v261
  %361 = vmatprep.subr.bf16.mxu0 0
  %362 = vmatpush2.bf16.msra.mxu0 %v260
  %363 = vmatprep.subr.bf16.mxu0 0
  %364 = vmatpush2.bf16.msra.mxu0 %v259
  %365 = vmatprep.subr.bf16.mxu0 0
  %366 = vmatpush2.bf16.msra.mxu0 %v258
  %367 = vmatprep.subr.bf16.mxu0 0
  %368 = vmatpush2.bf16.msra.mxu0 %v257
  %369 = vmatprep.mubr.bf16.mxu0 %v100
  %370 = vmatmul.mubr.bf16.gmra.mxu0 %v99
  %v371 = vpop.f32.mrf.mxu0
  %v372 = vadd.f32 %v332, %v371
  %v373 = vpop.f32.mrf.mxu0
  %v374 = vpop.f32.mrf.mxu0
  %v375 = vpop.f32.mrf.mxu0
  %376 = vdwg.mxu0
  %v377 = vadd.f32 %v26, %v372
  %378 = vst [vmem:[#allocation2] sm:$0xff] %v377
  // Predicated region
  $region14: #{_lambda_.32} parent=0 // pred_check
    %p379 = pneg %p13
  $region15: #{_lambda_.32} parent=0 // pred_check_branch
    %381 = sbr.rel (%p379) target = $region17
  $region16: #{_lambda_.32} parent=0 // pred_region
    %v382 = vld [vmem:[#allocation2] sm:$0xff]
    %383 = vst [vmem:[%s2] sm:$0xff] %v382
  $region17: #{_lambda_.32} parent=0 // pred_fallthru
    _
  // Predicated region
  $region18: #{_lambda_.32} parent=0 // pred_check
    _
  $region19: #{_lambda_.32} parent=0 // pred_check_branch
    %385 = sbr.rel (0) target = $region21
  $region20: #{_lambda_.32} parent=0 // pred_region
    _
  $region21: #{_lambda_.32} parent=0 // pred_fallthru
    _
  // Predicated region
  $region22: #{_lambda_.32} parent=0 // pred_check
    _
  $region23: #{_lambda_.32} parent=0 // pred_check_branch
    %387 = sbr.rel (0) target = $region25
  $region24: #{_lambda_.32} parent=0 // pred_region
    _
  $region25: #{_lambda_.32} parent=0 // pred_fallthru
    _

// kernel: _lambda_.33
$region0: #{_lambda_.33}
  #allocation0 [shape = 'u32[]', space=smem, size = 0x4, offset = 0x4, fixed_abs, tag = 'smem constant byte address 0x4 - core index']
  #allocation1 [shape = 'u32[144,128]{1,0:T(1,128)}', space=vmem, size = 0x12000, scoped, tag = 'internal scratch']
  #allocation2 [shape = 'f32[8,128]{1,0:T(8,128)}', space=vmem, size = 0x1000, scoped, tag = 'scratch operand']
  %s0 = inlined_call_operand.vmem [shape: bf16[8,1024], index: 0, kind: input, shape index: {}]
  %s1 = inlined_call_operand.vmem [shape: bf16[1024,128], index: 1, kind: input, shape index: {}]
  %s2 = inlined_call_operand.vmem [shape: f32[8,128], index: 2, kind: output, shape index: {}]
  %s3 = sld [smem:[#allocation0]]
  $region49: #{_lambda_.33} parent=0
    _
  %s5 = ssub.s32 1, %s3
  %s6 = scalar_select 0, %s5, %s3
  loop: start=0, step=1, limit=4
  $region2: #{_lambda_.33} parent=0 // loop_pre_header
    _
  $region3: #{_lambda_.33} parent=0 // loop_header
    %s8 = sphi 0, %s12
    %p9 = scmp.ge.s32.totalorder %s8, 4
    %s15 = sphi 0, %s34
    %s16 = sphi 0, %s30
    %s17 = sphi 0, %s26
    %s18 = sphi 0, %s15
    %s19 = sphi 0, %s16
    %s20 = sphi 0, %s17
    %s21 = sphi 0, %s18
    %s22 = sphi 0, %s19
    %s23 = sphi 0, %s20
    %s39 = sphi 0, %s41
    %s42 = sphi 0, %s39
    %s43 = sphi 0, %s42
    %s59 = sphi 0, %s43
    %s67 = sphi 0, %s69
    %s70 = sphi 0, %s67
    %s71 = sphi 0, %s70
    %s87 = sphi 0, %s71
    %s95 = sphi 0, %s97
    %s98 = sphi 0, %s95
    %s99 = sphi 0, %s98
    %s115 = sphi 0, %s99
  $region4: #{_lambda_.33} parent=0 // loop_header_branch
    %11 = sbr.rel (%p9) target = $region8
  $region5: #{_lambda_.33} parent=0 // loop_body
    %s13 = ssub.s32 %s8, 1
    %s14 = ssub.s32 %s8, 2
    %s24 = sadd.s32 1, %s17
    %p25 = scmp.ge.s32.totalorder %s24, 2
    %s26 = scalar_select %p25, 0, %s24
    %s27 = sadd.s32 1, %s16
    %s28 = scalar_select %p25, %s27, %s16
    %p29 = scmp.ge.s32.totalorder %s28, 1
    %s30 = scalar_select %p29, 0, %s28
    %s31 = sadd.s32 1, %s15
    %s32 = scalar_select %p29, %s31, %s15
    %p33 = scmp.ge.s32.totalorder %s32, 1
    %s34 = scalar_select %p33, 0, %s32
    %s35 = ssub.s32 %s15, %s34
    %s36 = ssub.s32 %s17, %s26
    %s37 = sor.u32 %s35, %s36
    %p38 = scmp.eq.s32.totalorder %s37, 0
    %s40 = sadd.s32 %s39, 1
    %s41 = scalar_select %p38, %s39, %s40
    %p44 = pneg %p38
    %p45 = scmp.eq.s32.totalorder %s8, 1
    %p46 = por %p44, %p45
    %p47 = scmp.ne.s32.totalorder %s39, %s42
    %p48 = scmp.eq.s32.totalorder %s8, 0
    %p49 = por %p47, %p48
    %p50 = scmp.ne.s32.totalorder %s39, %s42
    %p51 = scmp.eq.s32.totalorder %s13, 1
    %p52 = por %p50, %p51
    %p53 = scmp.ne.s32.totalorder %s42, %s43
    %p54 = scmp.eq.s32.totalorder %s13, 0
    %p55 = por %p53, %p54
    %p56 = scmp.ne.s32.totalorder %s42, %s43
    %p57 = scmp.eq.s32.totalorder %s14, 1
    %p58 = por %p56, %p57
    %p60 = scmp.ne.s32.totalorder %s43, %s59
    %p61 = scmp.eq.s32.totalorder %s14, 0
    %p62 = por %p60, %p61
    %s63 = ssub.s32 %s17, %s26
    %s64 = ssub.s32 %s16, %s30
    %s65 = sor.u32 %s63, %s64
    %p66 = scmp.eq.s32.totalorder %s65, 0
    %s68 = sadd.s32 %s67, 1
    %s69 = scalar_select %p66, %s67, %s68
    %p72 = pneg %p66
    %p73 = scmp.eq.s32.totalorder %s8, 1
    %p74 = por %p72, %p73
    %p75 = scmp.ne.s32.totalorder %s67, %s70
    %p76 = scmp.eq.s32.totalorder %s8, 0
    %p77 = por %p75, %p76
    %p78 = scmp.ne.s32.totalorder %s67, %s70
    %p79 = scmp.eq.s32.totalorder %s13, 1
    %p80 = por %p78, %p79
    %p81 = scmp.ne.s32.totalorder %s70, %s71
    %p82 = scmp.eq.s32.totalorder %s13, 0
    %p83 = por %p81, %p82
    %p84 = scmp.ne.s32.totalorder %s70, %s71
    %p85 = scmp.eq.s32.totalorder %s14, 1
    %p86 = por %p84, %p85
    %p88 = scmp.ne.s32.totalorder %s71, %s87
    %p89 = scmp.eq.s32.totalorder %s14, 0
    %p90 = por %p88, %p89
    %s91 = ssub.s32 %s15, %s34
    %s92 = ssub.s32 %s16, %s30
    %s93 = sor.u32 %s91, %s92
    %p94 = scmp.eq.s32.totalorder %s93, 0
    %s96 = sadd.s32 %s95, 1
    %s97 = scalar_select %p94, %s95, %s96
    %p100 = pneg %p94
    %p101 = scmp.eq.s32.totalorder %s8, 1
    %p102 = por %p100, %p101
    %p103 = scmp.ne.s32.totalorder %s95, %s98
    %p104 = scmp.eq.s32.totalorder %s8, 0
    %p105 = por %p103, %p104
    %p106 = scmp.ne.s32.totalorder %s95, %s98
    %p107 = scmp.eq.s32.totalorder %s13, 1
    %p108 = por %p106, %p107
    %p109 = scmp.ne.s32.totalorder %s98, %s99
    %p110 = scmp.eq.s32.totalorder %s13, 0
    %p111 = por %p109, %p110
    %p112 = scmp.ne.s32.totalorder %s98, %s99
    %p113 = scmp.eq.s32.totalorder %s14, 1
    %p114 = por %p112, %p113
    %p116 = scmp.ne.s32.totalorder %s99, %s115
    %p117 = scmp.eq.s32.totalorder %s14, 0
    %p118 = por %p116, %p117
    %p119 = scmp.le.s32.totalorder 1, %s8
    %p120 = scmp.lt.s32.totalorder %s8, 3
    %p121 = pnand %p119, %p120
    %p122 = pneg %p121
    // Predicated region
    $region9: #{_lambda_.33} parent=5 // pred_check
      _
    $region10: #{_lambda_.33} parent=5 // pred_check_branch
      %124 = sbr.rel (%p121) target = $region12
    $region11: #{_lambda_.33} parent=5 // pred_region
      %s125 = ssub.s32 %s8, 1
    $region12: #{_lambda_.33} parent=5 // pred_fallthru
      _
    %p126 = scmp.lt.s32.totalorder %s8, 2
    // Predicated region
    $region13: #{_lambda_.33} parent=5 // pred_check
      %p127 = pneg %p126
    $region14: #{_lambda_.33} parent=5 // pred_check_branch
      %129 = sbr.rel (%p127) target = $region16
    $region15: #{_lambda_.33} parent=5 // pred_region
      // Predicated region
      $region17: #{_lambda_.33} parent=15 // pred_check
        %p130 = pneg %p49
      $region18: #{_lambda_.33} parent=15 // pred_check_branch
        %132 = sbr.rel (%p130) target = $region20
      $region19: #{_lambda_.33} parent=15 // pred_region
        %s133 = smul.u32 4, %s17
        %p134 = scmp.lt.s32.totalorder %s15, 0
        %s135 = scalar_select %p134, %s15, 0
        %p136 = scmp.lt.s32.totalorder %s133, 7
        %s137 = scalar_select %p136, %s133, 7
        %s138 = smul.addr %s135, 8
        %s139 = sadd.s32 %s137, %s138
        %s140 = smul.addr %s139, 4
        %s141 = scalar_lea.vmem %s0, %s140
        %s142 = smul.u32 4, %s17
      $region20: #{_lambda_.33} parent=15 // pred_fallthru
        _
      // Predicated region
      $region21: #{_lambda_.33} parent=15 // pred_check
        %p143 = pneg %p77
      $region22: #{_lambda_.33} parent=15 // pred_check_branch
        %145 = sbr.rel (%p143) target = $region24
      $region23: #{_lambda_.33} parent=15 // pred_region
        %s146 = smul.u32 64, %s17
        %p147 = scmp.lt.s32.totalorder %s146, 127
        %s148 = scalar_select %p147, %s146, 127
        %p149 = scmp.lt.s32.totalorder %s16, 0
        %s150 = scalar_select %p149, %s16, 0
        %s151 = sadd.s32 %s150, %s148
        %s152 = smul.addr %s151, 4
        %s153 = scalar_lea.vmem %s1, %s152
        %s154 = smul.u32 64, %s17
      $region24: #{_lambda_.33} parent=15 // pred_fallthru
        _
    $region16: #{_lambda_.33} parent=5 // pred_fallthru
      _
    %p155 = scmp.le.s32.totalorder 1, %s8
    %p156 = scmp.lt.s32.totalorder %s8, 3
    %p157 = pnand %p155, %p156
    %p158 = pneg %p157
    // Predicated region
    $region25: #{_lambda_.33} parent=5 // pred_check
      _
    $region26: #{_lambda_.33} parent=5 // pred_check_branch
      %160 = sbr.rel (%p157) target = $region28
    $region27: #{_lambda_.33} parent=5 // pred_region
      %s161 = ssub.s32 %s8, 1
      %s162 = smul.u32 4, %s20
      %p163 = scmp.lt.s32.totalorder %s18, 0
      %s164 = scalar_select %p163, %s18, 0
      %p165 = scmp.lt.s32.totalorder %s162, 7
      %s166 = scalar_select %p165, %s162, 7
      %s167 = smul.addr %s164, 8
      %s168 = sadd.s32 %s166, %s167
      %s169 = smul.addr %s168, 4
      %s170 = scalar_lea.vmem %s0, %s169
      %p171 = pneg %p55
      %p172 = pneg %p52
      %s173 = smul.u32 64, %s20
      %p174 = scmp.lt.s32.totalorder %s173, 127
      %s175 = scalar_select %p174, %s173, 127
      %p176 = scmp.lt.s32.totalorder %s19, 0
      %s177 = scalar_select %p176, %s19, 0
      %s178 = sadd.s32 %s177, %s175
      %s179 = smul.addr %s178, 4
      %s180 = scalar_lea.vmem %s1, %s179
      %p181 = pneg %p83
      %p182 = pneg %p80
      %p183 = pneg %p111
      %p184 = pneg %p108
      %p185 = scmp.lt.s32.totalorder %s18, 0
      %s186 = scalar_select %p185, %s18, 0
      %p187 = scmp.lt.s32.totalorder %s19, 0
      %s188 = scalar_select %p187, %s19, 0
      %s189 = sadd.s32 %s188, %s186
      %s190 = smul.addr %s189, 8
      %s191 = scalar_lea.vmem %s2, %s190
      %s192 = smul.u32 4, %s20
      %p193 = scmp.lt.s32.totalorder %s18, 0
      %s194 = scalar_select %p193, %s18, 0
      %p195 = scmp.lt.s32.totalorder %s192, 7
      %s196 = scalar_select %p195, %s192, 7
      %s197 = smul.addr %s194, 8
      %s198 = sadd.s32 %s196, %s197
      %s199 = smul.addr %s198, 4
      %s200 = scalar_lea.vmem %s0, %s199
      %s201 = smul.u32 4, %s20
      %s202 = smul.u32 64, %s20
      %p203 = scmp.lt.s32.totalorder %s202, 127
      %s204 = scalar_select %p203, %s202, 127
      %p205 = scmp.lt.s32.totalorder %s19, 0
      %s206 = scalar_select %p205, %s19, 0
      %s207 = sadd.s32 %s206, %s204
      %s208 = smul.addr %s207, 4
      %s209 = scalar_lea.vmem %s1, %s208
      %s210 = smul.u32 64, %s20
      %p211 = scmp.lt.s32.totalorder %s18, 0
      %s212 = scalar_select %p211, %s18, 0
      %p213 = scmp.lt.s32.totalorder %s19, 0
      %s214 = scalar_select %p213, %s19, 0
      %s215 = sadd.s32 %s214, %s212
      %s216 = smul.addr %s215, 8
      %s217 = scalar_lea.vmem %s2, %s216
      %p220 = scmp.eq.s32.totalorder %s20, 0
      // Predicated region
      $region29: #{_lambda_.33} parent=27 // pred_check
        %p221 = pneg %p220
      $region30: #{_lambda_.33} parent=27 // pred_check_branch
        %223 = sbr.rel (%p221) target = $region32
      $region31: #{_lambda_.33} parent=27 // pred_region
        %224 = vst [vmem:[#allocation2] sm:$0xff] 0.0
      $region32: #{_lambda_.33} parent=27 // pred_fallthru
        _
      %v225 = vld [vmem:[%s200] sm:$0xff]
      %v226 = vld [vmem:[%s200 + $0x8] sm:$0xff]
      %vm227 = vcmp.gt.bf16.partialorder %v225, 0
      %vm228 = vcmp.gt.bf16.partialorder %v226, 0
      %v229 = vmul.bf16 %v225, 1045249613
      %v230 = vmul.bf16 %v226, 1045249613
      %v231 = vsel %vm227, %v225, %v229
      %v232 = vsel %vm228, %v226, %v230
      %v233 = vld [vmem:[#allocation2] sm:$0xff]
      %v234 = vld [vmem:[%s209] sm:$0xf]
      %v235 = vld [vmem:[%s209 + $0x4] sm:$0xf]
      %v236 = vld [vmem:[%s209 + $0x8] sm:$0xf]
      %v237 = vld [vmem:[%s209 + $0xc] sm:$0xf]
      %v238 = vld [vmem:[%s209 + $0x10] sm:$0xf]
      %v239 = vld [vmem:[%s209 + $0x14] sm:$0xf]
      %v240 = vld [vmem:[%s209 + $0x18] sm:$0xf]
      %v241 = vld [vmem:[%s209 + $0x1c] sm:$0xf]
      %v242 = vld [vmem:[%s209 + $0x20] sm:$0xf]
      %v243 = vld [vmem:[%s209 + $0x24] sm:$0xf]
      %v244 = vld [vmem:[%s209 + $0x28] sm:$0xf]
      %v245 = vld [vmem:[%s209 + $0x2c] sm:$0xf]
      %v246 = vld [vmem:[%s209 + $0x30] sm:$0xf]
      %v247 = vld [vmem:[%s209 + $0x34] sm:$0xf]
      %v248 = vld [vmem:[%s209 + $0x38] sm:$0xf]
      %v249 = vld [vmem:[%s209 + $0x3c] sm:$0xf]
      %v250 = vld [vmem:[%s209 + $0x40] sm:$0xf]
      %v251 = vld [vmem:[%s209 + $0x44] sm:$0xf]
      %v252 = vld [vmem:[%s209 + $0x48] sm:$0xf]
      %v253 = vld [vmem:[%s209 + $0x4c] sm:$0xf]
      %v254 = vld [vmem:[%s209 + $0x50] sm:$0xf]
      %v255 = vld [vmem:[%s209 + $0x54] sm:$0xf]
      %v256 = vld [vmem:[%s209 + $0x58] sm:$0xf]
      %v257 = vld [vmem:[%s209 + $0x5c] sm:$0xf]
      %v258 = vld [vmem:[%s209 + $0x60] sm:$0xf]
      %v259 = vld [vmem:[%s209 + $0x64] sm:$0xf]
      %v260 = vld [vmem:[%s209 + $0x68] sm:$0xf]
      %v261 = vld [vmem:[%s209 + $0x6c] sm:$0xf]
      %v262 = vld [vmem:[%s209 + $0x70] sm:$0xf]
      %v263 = vld [vmem:[%s209 + $0x74] sm:$0xf]
      %v264 = vld [vmem:[%s209 + $0x78] sm:$0xf]
      %v265 = vld [vmem:[%s209 + $0x7c] sm:$0xf]
      %v266 = vld [vmem:[%s209 + $0x80] sm:$0xf]
      %v267 = vld [vmem:[%s209 + $0x84] sm:$0xf]
      %v268 = vld [vmem:[%s209 + $0x88] sm:$0xf]
      %v269 = vld [vmem:[%s209 + $0x8c] sm:$0xf]
      %v270 = vld [vmem:[%s209 + $0x90] sm:$0xf]
      %v271 = vld [vmem:[%s209 + $0x94] sm:$0xf]
      %v272 = vld [vmem:[%s209 + $0x98] sm:$0xf]
      %v273 = vld [vmem:[%s209 + $0x9c] sm:$0xf]
      %v274 = vld [vmem:[%s209 + $0xa0] sm:$0xf]
      %v275 = vld [vmem:[%s209 + $0xa4] sm:$0xf]
      %v276 = vld [vmem:[%s209 + $0xa8] sm:$0xf]
      %v277 = vld [vmem:[%s209 + $0xac] sm:$0xf]
      %v278 = vld [vmem:[%s209 + $0xb0] sm:$0xf]
      %v279 = vld [vmem:[%s209 + $0xb4] sm:$0xf]
      %v280 = vld [vmem:[%s209 + $0xb8] sm:$0xf]
      %v281 = vld [vmem:[%s209 + $0xbc] sm:$0xf]
      %v282 = vld [vmem:[%s209 + $0xc0] sm:$0xf]
      %v283 = vld [vmem:[%s209 + $0xc4] sm:$0xf]
      %v284 = vld [vmem:[%s209 + $0xc8] sm:$0xf]
      %v285 = vld [vmem:[%s209 + $0xcc] sm:$0xf]
      %v286 = vld [vmem:[%s209 + $0xd0] sm:$0xf]
      %v287 = vld [vmem:[%s209 + $0xd4] sm:$0xf]
      %v288 = vld [vmem:[%s209 + $0xd8] sm:$0xf]
      %v289 = vld [vmem:[%s209 + $0xdc] sm:$0xf]
      %v290 = vld [vmem:[%s209 + $0xe0] sm:$0xf]
      %v291 = vld [vmem:[%s209 + $0xe4] sm:$0xf]
      %v292 = vld [vmem:[%s209 + $0xe8] sm:$0xf]
      %v293 = vld [vmem:[%s209 + $0xec] sm:$0xf]
      %v294 = vld [vmem:[%s209 + $0xf0] sm:$0xf]
      %v295 = vld [vmem:[%s209 + $0xf4] sm:$0xf]
      %v296 = vld [vmem:[%s209 + $0xf8] sm:$0xf]
      %v297 = vld [vmem:[%s209 + $0xfc] sm:$0xf]
      %v300 = vunpack.c.l.b16 %v231
      %v301 = vunpack.c.h.b16 %v231
      %v302 = vunpack.c.l.b16 %v232
      %v303 = vunpack.c.h.b16 %v232
      %v304 = vpack.c.b16 %v300, %v300
      %v305 = vpack.c.b16 %v301, %v301
      %v306 = vpack.c.b16 %v302, %v302
      %v307 = vpack.c.b16 %v303, %v303
      %v376 = vunpack.c.l.b16 %v234
      %v377 = vunpack.c.l.b16 %v235
      %v378 = vunpack.c.l.b16 %v236
      %v379 = vunpack.c.l.b16 %v237
      %v380 = vunpack.c.l.b16 %v238
      %v381 = vunpack.c.l.b16 %v239
      %v382 = vunpack.c.l.b16 %v240
      %v383 = vunpack.c.l.b16 %v241
      %v384 = vunpack.c.l.b16 %v242
      %v385 = vunpack.c.l.b16 %v243
      %v386 = vunpack.c.l.b16 %v244
      %v387 = vunpack.c.l.b16 %v245
      %v388 = vunpack.c.l.b16 %v246
      %v389 = vunpack.c.l.b16 %v247
      %v390 = vunpack.c.l.b16 %v248
      %v391 = vunpack.c.l.b16 %v249
      %v392 = vunpack.c.l.b16 %v250
      %v393 = vunpack.c.l.b16 %v251
      %v394 = vunpack.c.l.b16 %v252
      %v395 = vunpack.c.l.b16 %v253
      %v396 = vunpack.c.l.b16 %v254
      %v397 = vunpack.c.l.b16 %v255
      %v398 = vunpack.c.l.b16 %v256
      %v399 = vunpack.c.l.b16 %v257
      %v400 = vunpack.c.l.b16 %v258
      %v401 = vunpack.c.l.b16 %v259
      %v402 = vunpack.c.l.b16 %v260
      %v403 = vunpack.c.l.b16 %v261
      %v404 = vunpack.c.l.b16 %v262
      %v405 = vunpack.c.l.b16 %v263
      %v406 = vunpack.c.l.b16 %v264
      %v407 = vunpack.c.l.b16 %v265
      %v408 = vunpack.c.l.b16 %v266
      %v409 = vunpack.c.l.b16 %v267
      %v410 = vunpack.c.l.b16 %v268
      %v411 = vunpack.c.l.b16 %v269
      %v412 = vunpack.c.l.b16 %v270
      %v413 = vunpack.c.l.b16 %v271
      %v414 = vunpack.c.l.b16 %v272
      %v415 = vunpack.c.l.b16 %v273
      %v416 = vunpack.c.l.b16 %v274
      %v417 = vunpack.c.l.b16 %v275
      %v418 = vunpack.c.l.b16 %v276
      %v419 = vunpack.c.l.b16 %v277
      %v420 = vunpack.c.l.b16 %v278
      %v421 = vunpack.c.l.b16 %v279
      %v422 = vunpack.c.l.b16 %v280
      %v423 = vunpack.c.l.b16 %v281
      %v424 = vunpack.c.l.b16 %v282
      %v425 = vunpack.c.l.b16 %v283
      %v426 = vunpack.c.l.b16 %v284
      %v427 = vunpack.c.l.b16 %v285
      %v428 = vunpack.c.l.b16 %v286
      %v429 = vunpack.c.l.b16 %v287
      %v430 = vunpack.c.l.b16 %v288
      %v431 = vunpack.c.l.b16 %v289
      %v432 = vunpack.c.l.b16 %v290
      %v433 = vunpack.c.l.b16 %v291
      %v434 = vunpack.c.l.b16 %v292
      %v435 = vunpack.c.l.b16 %v293
      %v436 = vunpack.c.l.b16 %v294
      %v437 = vunpack.c.l.b16 %v295
      %v438 = vunpack.c.l.b16 %v296
      %v439 = vunpack.c.l.b16 %v297
      %v440 = vpack.c.b16 %v377, %v376
      %v441 = vpack.c.b16 %v379, %v378
      %v442 = vpack.c.b16 %v381, %v380
      %v443 = vpack.c.b16 %v383, %v382
      %v444 = vpack.c.b16 %v385, %v384
      %v445 = vpack.c.b16 %v387, %v386
      %v446 = vpack.c.b16 %v389, %v388
      %v447 = vpack.c.b16 %v391, %v390
      %v448 = vpack.c.b16 %v393, %v392
      %v449 = vpack.c.b16 %v395, %v394
      %v450 = vpack.c.b16 %v397, %v396
      %v451 = vpack.c.b16 %v399, %v398
      %v452 = vpack.c.b16 %v401, %v400
      %v453 = vpack.c.b16 %v403, %v402
      %v454 = vpack.c.b16 %v405, %v404
      %v455 = vpack.c.b16 %v407, %v406
      %v456 = vpack.c.b16 %v409, %v408
      %v457 = vpack.c.b16 %v411, %v410
      %v458 = vpack.c.b16 %v413, %v412
      %v459 = vpack.c.b16 %v415, %v414
      %v460 = vpack.c.b16 %v417, %v416
      %v461 = vpack.c.b16 %v419, %v418
      %v462 = vpack.c.b16 %v421, %v420
      %v463 = vpack.c.b16 %v423, %v422
      %v464 = vpack.c.b16 %v425, %v424
      %v465 = vpack.c.b16 %v427, %v426
      %v466 = vpack.c.b16 %v429, %v428
      %v467 = vpack.c.b16 %v431, %v430
      %v468 = vpack.c.b16 %v433, %v432
      %v469 = vpack.c.b16 %v435, %v434
      %v470 = vpack.c.b16 %v437, %v436
      %v471 = vpack.c.b16 %v439, %v438
      %504 = vmatprep.subr.bf16.mxu0 0
      %505 = vmatpush1.bf16.msra.mxu0 %v447
      %506 = vmatprep.subr.bf16.mxu0 0
      %507 = vmatpush1.bf16.msra.mxu0 %v446
      %508 = vmatprep.subr.bf16.mxu0 0
      %509 = vmatpush1.bf16.msra.mxu0 %v445
      %510 = vmatprep.subr.bf16.mxu0 0
      %511 = vmatpush1.bf16.msra.mxu0 %v444
      %512 = vmatprep.subr.bf16.mxu0 0
      %513 = vmatpush1.bf16.msra.mxu0 %v443
      %514 = vmatprep.subr.bf16.mxu0 0
      %515 = vmatpush1.bf16.msra.mxu0 %v442
      %516 = vmatprep.subr.bf16.mxu0 0
      %517 = vmatpush1.bf16.msra.mxu0 %v441
      %518 = vmatprep.subr.bf16.mxu0 0
      %519 = vmatpush1.bf16.msra.mxu0 %v440
      %520 = vmatprep.subr.bf16.mxu0 0
      %521 = vmatpush2.bf16.msra.mxu0 %v455
      %522 = vmatprep.subr.bf16.mxu0 0
      %523 = vmatpush2.bf16.msra.mxu0 %v454
      %524 = vmatprep.subr.bf16.mxu0 0
      %525 = vmatpush2.bf16.msra.mxu0 %v453
      %526 = vmatprep.subr.bf16.mxu0 0
      %527 = vmatpush2.bf16.msra.mxu0 %v452
      %528 = vmatprep.subr.bf16.mxu0 0
      %529 = vmatpush2.bf16.msra.mxu0 %v451
      %530 = vmatprep.subr.bf16.mxu0 0
      %531 = vmatpush2.bf16.msra.mxu0 %v450
      %532 = vmatprep.subr.bf16.mxu0 0
      %533 = vmatpush2.bf16.msra.mxu0 %v449
      %534 = vmatprep.subr.bf16.mxu0 0
      %535 = vmatpush2.bf16.msra.mxu0 %v448
      %536 = vmatprep.mubr.bf16.mxu0 %v305
      %537 = vmatmul.mubr.bf16.gmra.mxu0 %v304
      %v538 = vpop.f32.mrf.mxu0
      %v539 = vadd.f32 0.0, %v538
      %v540 = vpop.f32.mrf.mxu0
      %v541 = vpop.f32.mrf.mxu0
      %v542 = vpop.f32.mrf.mxu0
      %543 = vdwg.mxu0
      %544 = vmatprep.subr.bf16.mxu0 0
      %545 = vmatpush1.bf16.msra.mxu0 %v463
      %546 = vmatprep.subr.bf16.mxu0 0
      %547 = vmatpush1.bf16.msra.mxu0 %v462
      %548 = vmatprep.subr.bf16.mxu0 0
      %549 = vmatpush1.bf16.msra.mxu0 %v461
      %550 = vmatprep.subr.bf16.mxu0 0
      %551 = vmatpush1.bf16.msra.mxu0 %v460
      %552 = vmatprep.subr.bf16.mxu0 0
      %553 = vmatpush1.bf16.msra.mxu0 %v459
      %554 = vmatprep.subr.bf16.mxu0 0
      %555 = vmatpush1.bf16.msra.mxu0 %v458
      %556 = vmatprep.subr.bf16.mxu0 0
      %557 = vmatpush1.bf16.msra.mxu0 %v457
      %558 = vmatprep.subr.bf16.mxu0 0
      %559 = vmatpush1.bf16.msra.mxu0 %v456
      %560 = vmatprep.subr.bf16.mxu0 0
      %561 = vmatpush2.bf16.msra.mxu0 %v471
      %562 = vmatprep.subr.bf16.mxu0 0
      %563 = vmatpush2.bf16.msra.mxu0 %v470
      %564 = vmatprep.subr.bf16.mxu0 0
      %565 = vmatpush2.bf16.msra.mxu0 %v469
      %566 = vmatprep.subr.bf16.mxu0 0
      %567 = vmatpush2.bf16.msra.mxu0 %v468
      %568 = vmatprep.subr.bf16.mxu0 0
      %569 = vmatpush2.bf16.msra.mxu0 %v467
      %570 = vmatprep.subr.bf16.mxu0 0
      %571 = vmatpush2.bf16.msra.mxu0 %v466
      %572 = vmatprep.subr.bf16.mxu0 0
      %573 = vmatpush2.bf16.msra.mxu0 %v465
      %574 = vmatprep.subr.bf16.mxu0 0
      %575 = vmatpush2.bf16.msra.mxu0 %v464
      %576 = vmatprep.mubr.bf16.mxu0 %v307
      %577 = vmatmul.mubr.bf16.gmra.mxu0 %v306
      %v578 = vpop.f32.mrf.mxu0
      %v579 = vadd.f32 %v539, %v578
      %v580 = vpop.f32.mrf.mxu0
      %v581 = vpop.f32.mrf.mxu0
      %v582 = vpop.f32.mrf.mxu0
      %583 = vdwg.mxu0
      %v584 = vadd.f32 %v233, %v579
      %585 = vst [vmem:[#allocation2] sm:$0xff] %v584
      %p586 = scmp.eq.s32.totalorder %s20, 1
      // Predicated region
      $region33: #{_lambda_.33} parent=27 // pred_check
        %p587 = pneg %p586
      $region34: #{_lambda_.33} parent=27 // pred_check_branch
        %589 = sbr.rel (%p587) target = $region36
      $region35: #{_lambda_.33} parent=27 // pred_region
        %v590 = vld [vmem:[#allocation2] sm:$0xff]
        %591 = vst [vmem:[%s217] sm:$0xff] %v590
      $region36: #{_lambda_.33} parent=27 // pred_fallthru
        _
      %p592 = scmp.lt.s32.totalorder %s18, 0
      %s593 = scalar_select %p592, %s18, 0
      %p594 = scmp.lt.s32.totalorder %s19, 0
      %s595 = scalar_select %p594, %s19, 0
      %s596 = sadd.s32 %s595, %s593
      %s597 = smul.addr %s596, 8
      %s598 = scalar_lea.vmem %s2, %s597
      // Predicated region
      $region37: #{_lambda_.33} parent=27 // pred_check
        %p599 = pneg %p108
      $region38: #{_lambda_.33} parent=27 // pred_check_branch
        %601 = sbr.rel (%p599) target = $region40
      $region39: #{_lambda_.33} parent=27 // pred_region
        _
      $region40: #{_lambda_.33} parent=27 // pred_fallthru
        _
      // Predicated region
      $region41: #{_lambda_.33} parent=27 // pred_check
        %p602 = pneg %p108
      $region42: #{_lambda_.33} parent=27 // pred_check_branch
        %604 = sbr.rel (%p602) target = $region44
      $region43: #{_lambda_.33} parent=27 // pred_region
        %p605 = scmp.lt.s32.totalorder %s18, 0
        %s606 = scalar_select %p605, %s18, 0
        %p607 = scmp.lt.s32.totalorder %s19, 0
        %s608 = scalar_select %p607, %s19, 0
        %s609 = sadd.s32 %s608, %s606
        %s610 = smul.addr %s609, 8
        %s611 = scalar_lea.vmem %s2, %s610
      $region44: #{_lambda_.33} parent=27 // pred_fallthru
        _
    $region28: #{_lambda_.33} parent=5 // pred_fallthru
      _
    %p612 = scmp.le.s32.totalorder 2, %s8
    // Predicated region
    $region45: #{_lambda_.33} parent=5 // pred_check
      %p613 = pneg %p612
    $region46: #{_lambda_.33} parent=5 // pred_check_branch
      %615 = sbr.rel (%p613) target = $region48
    $region47: #{_lambda_.33} parent=5 // pred_region
      %s616 = ssub.s32 %s8, 2
    $region48: #{_lambda_.33} parent=5 // pred_fallthru
      _
  $region6: #{_lambda_.33} parent=0 // loop_footer
    %s12 = sadd.s32 1, %s8
  $region7: #{_lambda_.33} parent=0 // loop_footer_branch
    %7 = sbr.rel target = $region3
  $region8: #{_lambda_.33} parent=0 // loop_exit
    _

// kernel: _lambda_.37
$region0: #{_lambda_.37}
  #allocation0 [shape = 'u32[]', space=smem, size = 0x4, offset = 0x4, fixed_abs, tag = 'smem constant byte address 0x4 - core index']
  #allocation1 [shape = 'u32[144,128]{1,0:T(1,128)}', space=vmem, size = 0x12000, scoped, tag = 'internal scratch']
  #allocation2 [shape = 'f32[8,128]{1,0:T(8,128)}', space=vmem, size = 0x1000, scoped, tag = 'scratch operand']
  %s0 = inlined_call_operand.vmem [shape: bf16[8,256], index: 0, kind: input, shape index: {}]
  %s1 = inlined_call_operand.vmem [shape: bf16[256,128], index: 1, kind: input, shape index: {}]
  %s2 = inlined_call_operand.vmem [shape: f32[8,128], index: 2, kind: output, shape index: {}]
  %s3 = sld [smem:[#allocation0]]
  $region26: #{_lambda_.37} parent=0
    _
  %s5 = ssub.s32 1, %s3
  %s6 = scalar_select 0, %s5, %s3
  // Predicated region
  $region2: #{_lambda_.37} parent=0 // pred_check
    _
  $region3: #{_lambda_.37} parent=0 // pred_check_branch
    %8 = sbr.rel (0) target = $region5
  $region4: #{_lambda_.37} parent=0 // pred_region
    _
  $region5: #{_lambda_.37} parent=0 // pred_fallthru
    _
  // Predicated region
  $region6: #{_lambda_.37} parent=0 // pred_check
    _
  $region7: #{_lambda_.37} parent=0 // pred_check_branch
    %10 = sbr.rel (0) target = $region9
  $region8: #{_lambda_.37} parent=0 // pred_region
    _
  $region9: #{_lambda_.37} parent=0 // pred_fallthru
    _
  %p12 = scmp.eq.s32.totalorder 0, 0
  // Predicated region
  $region10: #{_lambda_.37} parent=0 // pred_check
    %p13 = pneg %p12
  $region11: #{_lambda_.37} parent=0 // pred_check_branch
    %15 = sbr.rel (%p13) target = $region13
  $region12: #{_lambda_.37} parent=0 // pred_region
    %16 = vst [vmem:[#allocation2] sm:$0xff] 0.0
  $region13: #{_lambda_.37} parent=0 // pred_fallthru
    _
  %v17 = vld [vmem:[%s0] sm:$0xff]
  %v18 = vmax.bf16 %v17, 0
  %v19 = vld [vmem:[#allocation2] sm:$0xff]
  %v20 = vld [vmem:[%s1] sm:$0xf]
  %v21 = vld [vmem:[%s1 + $0x4] sm:$0xf]
  %v22 = vld [vmem:[%s1 + $0x8] sm:$0xf]
  %v23 = vld [vmem:[%s1 + $0xc] sm:$0xf]
  %v24 = vld [vmem:[%s1 + $0x10] sm:$0xf]
  %v25 = vld [vmem:[%s1 + $0x14] sm:$0xf]
  %v26 = vld [vmem:[%s1 + $0x18] sm:$0xf]
  %v27 = vld [vmem:[%s1 + $0x1c] sm:$0xf]
  %v28 = vld [vmem:[%s1 + $0x20] sm:$0xf]
  %v29 = vld [vmem:[%s1 + $0x24] sm:$0xf]
  %v30 = vld [vmem:[%s1 + $0x28] sm:$0xf]
  %v31 = vld [vmem:[%s1 + $0x2c] sm:$0xf]
  %v32 = vld [vmem:[%s1 + $0x30] sm:$0xf]
  %v33 = vld [vmem:[%s1 + $0x34] sm:$0xf]
  %v34 = vld [vmem:[%s1 + $0x38] sm:$0xf]
  %v35 = vld [vmem:[%s1 + $0x3c] sm:$0xf]
  %v36 = vld [vmem:[%s1 + $0x40] sm:$0xf]
  %v37 = vld [vmem:[%s1 + $0x44] sm:$0xf]
  %v38 = vld [vmem:[%s1 + $0x48] sm:$0xf]
  %v39 = vld [vmem:[%s1 + $0x4c] sm:$0xf]
  %v40 = vld [vmem:[%s1 + $0x50] sm:$0xf]
  %v41 = vld [vmem:[%s1 + $0x54] sm:$0xf]
  %v42 = vld [vmem:[%s1 + $0x58] sm:$0xf]
  %v43 = vld [vmem:[%s1 + $0x5c] sm:$0xf]
  %v44 = vld [vmem:[%s1 + $0x60] sm:$0xf]
  %v45 = vld [vmem:[%s1 + $0x64] sm:$0xf]
  %v46 = vld [vmem:[%s1 + $0x68] sm:$0xf]
  %v47 = vld [vmem:[%s1 + $0x6c] sm:$0xf]
  %v48 = vld [vmem:[%s1 + $0x70] sm:$0xf]
  %v49 = vld [vmem:[%s1 + $0x74] sm:$0xf]
  %v50 = vld [vmem:[%s1 + $0x78] sm:$0xf]
  %v51 = vld [vmem:[%s1 + $0x7c] sm:$0xf]
  %v53 = vunpack.c.l.b16 %v18
  %v54 = vunpack.c.h.b16 %v18
  %v55 = vpack.c.b16 %v53, %v53
  %v56 = vpack.c.b16 %v54, %v54
  %v91 = vunpack.c.l.b16 %v20
  %v92 = vunpack.c.l.b16 %v21
  %v93 = vunpack.c.l.b16 %v22
  %v94 = vunpack.c.l.b16 %v23
  %v95 = vunpack.c.l.b16 %v24
  %v96 = vunpack.c.l.b16 %v25
  %v97 = vunpack.c.l.b16 %v26
  %v98 = vunpack.c.l.b16 %v27
  %v99 = vunpack.c.l.b16 %v28
  %v100 = vunpack.c.l.b16 %v29
  %v101 = vunpack.c.l.b16 %v30
  %v102 = vunpack.c.l.b16 %v31
  %v103 = vunpack.c.l.b16 %v32
  %v104 = vunpack.c.l.b16 %v33
  %v105 = vunpack.c.l.b16 %v34
  %v106 = vunpack.c.l.b16 %v35
  %v107 = vunpack.c.l.b16 %v36
  %v108 = vunpack.c.l.b16 %v37
  %v109 = vunpack.c.l.b16 %v38
  %v110 = vunpack.c.l.b16 %v39
  %v111 = vunpack.c.l.b16 %v40
  %v112 = vunpack.c.l.b16 %v41
  %v113 = vunpack.c.l.b16 %v42
  %v114 = vunpack.c.l.b16 %v43
  %v115 = vunpack.c.l.b16 %v44
  %v116 = vunpack.c.l.b16 %v45
  %v117 = vunpack.c.l.b16 %v46
  %v118 = vunpack.c.l.b16 %v47
  %v119 = vunpack.c.l.b16 %v48
  %v120 = vunpack.c.l.b16 %v49
  %v121 = vunpack.c.l.b16 %v50
  %v122 = vunpack.c.l.b16 %v51
  %v123 = vpack.c.b16 %v92, %v91
  %v124 = vpack.c.b16 %v94, %v93
  %v125 = vpack.c.b16 %v96, %v95
  %v126 = vpack.c.b16 %v98, %v97
  %v127 = vpack.c.b16 %v100, %v99
  %v128 = vpack.c.b16 %v102, %v101
  %v129 = vpack.c.b16 %v104, %v103
  %v130 = vpack.c.b16 %v106, %v105
  %v131 = vpack.c.b16 %v108, %v107
  %v132 = vpack.c.b16 %v110, %v109
  %v133 = vpack.c.b16 %v112, %v111
  %v134 = vpack.c.b16 %v114, %v113
  %v135 = vpack.c.b16 %v116, %v115
  %v136 = vpack.c.b16 %v118, %v117
  %v137 = vpack.c.b16 %v120, %v119
  %v138 = vpack.c.b16 %v122, %v121
  %155 = vmatprep.subr.bf16.mxu0 0
  %156 = vmatpush1.bf16.msra.mxu0 %v130
  %157 = vmatprep.subr.bf16.mxu0 0
  %158 = vmatpush1.bf16.msra.mxu0 %v129
  %159 = vmatprep.subr.bf16.mxu0 0
  %160 = vmatpush1.bf16.msra.mxu0 %v128
  %161 = vmatprep.subr.bf16.mxu0 0
  %162 = vmatpush1.bf16.msra.mxu0 %v127
  %163 = vmatprep.subr.bf16.mxu0 0
  %164 = vmatpush1.bf16.msra.mxu0 %v126
  %165 = vmatprep.subr.bf16.mxu0 0
  %166 = vmatpush1.bf16.msra.mxu0 %v125
  %167 = vmatprep.subr.bf16.mxu0 0
  %168 = vmatpush1.bf16.msra.mxu0 %v124
  %169 = vmatprep.subr.bf16.mxu0 0
  %170 = vmatpush1.bf16.msra.mxu0 %v123
  %171 = vmatprep.subr.bf16.mxu0 0
  %172 = vmatpush2.bf16.msra.mxu0 %v138
  %173 = vmatprep.subr.bf16.mxu0 0
  %174 = vmatpush2.bf16.msra.mxu0 %v137
  %175 = vmatprep.subr.bf16.mxu0 0
  %176 = vmatpush2.bf16.msra.mxu0 %v136
  %177 = vmatprep.subr.bf16.mxu0 0
  %178 = vmatpush2.bf16.msra.mxu0 %v135
  %179 = vmatprep.subr.bf16.mxu0 0
  %180 = vmatpush2.bf16.msra.mxu0 %v134
  %181 = vmatprep.subr.bf16.mxu0 0
  %182 = vmatpush2.bf16.msra.mxu0 %v133
  %183 = vmatprep.subr.bf16.mxu0 0
  %184 = vmatpush2.bf16.msra.mxu0 %v132
  %185 = vmatprep.subr.bf16.mxu0 0
  %186 = vmatpush2.bf16.msra.mxu0 %v131
  %187 = vmatprep.mubr.bf16.mxu0 %v56
  %188 = vmatmul.mubr.bf16.gmra.mxu0 %v55
  %v189 = vpop.f32.mrf.mxu0
  %v190 = vadd.f32 0.0, %v189
  %v191 = vpop.f32.mrf.mxu0
  %v192 = vpop.f32.mrf.mxu0
  %v193 = vpop.f32.mrf.mxu0
  %194 = vdwg.mxu0
  %v195 = vadd.f32 %v19, %v190
  %196 = vst [vmem:[#allocation2] sm:$0xff] %v195
  // Predicated region
  $region14: #{_lambda_.37} parent=0 // pred_check
    %p197 = pneg %p12
  $region15: #{_lambda_.37} parent=0 // pred_check_branch
    %199 = sbr.rel (%p197) target = $region17
  $region16: #{_lambda_.37} parent=0 // pred_region
    %v200 = vld [vmem:[#allocation2] sm:$0xff]
    %201 = vst [vmem:[%s2] sm:$0xff] %v200
  $region17: #{_lambda_.37} parent=0 // pred_fallthru
    _
  // Predicated region
  $region18: #{_lambda_.37} parent=0 // pred_check
    _
  $region19: #{_lambda_.37} parent=0 // pred_check_branch
    %203 = sbr.rel (0) target = $region21
  $region20: #{_lambda_.37} parent=0 // pred_region
    _
  $region21: #{_lambda_.37} parent=0 // pred_fallthru
    _
  // Predicated region
  $region22: #{_lambda_.37} parent=0 // pred_check
    _
  $region23: #{_lambda_.37} parent=0 // pred_check_branch
    %205 = sbr.rel (0) target = $region25
  $region24: #{_lambda_.37} parent=0 // pred_region
    _
  $region25: #{_lambda_.37} parent=0 // pred_fallthru
    _

// kernel: _lambda_.38
$region0: #{_lambda_.38}
  #allocation0 [shape = 'u32[]', space=smem, size = 0x4, offset = 0x4, fixed_abs, tag = 'smem constant byte address 0x4 - core index']
  #allocation1 [shape = 'u32[144,128]{1,0:T(1,128)}', space=vmem, size = 0x12000, scoped, tag = 'internal scratch']
  #allocation2 [shape = 'f32[8,128]{1,0:T(8,128)}', space=vmem, size = 0x1000, scoped, tag = 'scratch operand']
  %s0 = inlined_call_operand.vmem [shape: bf16[8,512], index: 0, kind: input, shape index: {}]
  %s1 = inlined_call_operand.vmem [shape: bf16[512,128], index: 1, kind: input, shape index: {}]
  %s2 = inlined_call_operand.vmem [shape: f32[8,128], index: 2, kind: output, shape index: {}]
  %s3 = sld [smem:[#allocation0]]
  $region26: #{_lambda_.38} parent=0
    _
  %s5 = ssub.s32 1, %s3
  %s6 = scalar_select 0, %s5, %s3
  // Predicated region
  $region2: #{_lambda_.38} parent=0 // pred_check
    _
  $region3: #{_lambda_.38} parent=0 // pred_check_branch
    %8 = sbr.rel (0) target = $region5
  $region4: #{_lambda_.38} parent=0 // pred_region
    _
  $region5: #{_lambda_.38} parent=0 // pred_fallthru
    _
  // Predicated region
  $region6: #{_lambda_.38} parent=0 // pred_check
    _
  $region7: #{_lambda_.38} parent=0 // pred_check_branch
    %10 = sbr.rel (0) target = $region9
  $region8: #{_lambda_.38} parent=0 // pred_region
    _
  $region9: #{_lambda_.38} parent=0 // pred_fallthru
    _
  %p12 = scmp.eq.s32.totalorder 0, 0
  // Predicated region
  $region10: #{_lambda_.38} parent=0 // pred_check
    %p13 = pneg %p12
  $region11: #{_lambda_.38} parent=0 // pred_check_branch
    %15 = sbr.rel (%p13) target = $region13
  $region12: #{_lambda_.38} parent=0 // pred_region
    %16 = vst [vmem:[#allocation2] sm:$0xff] 0.0
  $region13: #{_lambda_.38} parent=0 // pred_fallthru
    _
  %v17 = vld [vmem:[%s0] sm:$0xff]
  %v18 = vld [vmem:[%s0 + $0x8] sm:$0xff]
  %v19 = vmax.bf16 %v17, 0
  %v20 = vmax.bf16 %v18, 0
  %v21 = vld [vmem:[#allocation2] sm:$0xff]
  %v22 = vld [vmem:[%s1] sm:$0xf]
  %v23 = vld [vmem:[%s1 + $0x4] sm:$0xf]
  %v24 = vld [vmem:[%s1 + $0x8] sm:$0xf]
  %v25 = vld [vmem:[%s1 + $0xc] sm:$0xf]
  %v26 = vld [vmem:[%s1 + $0x10] sm:$0xf]
  %v27 = vld [vmem:[%s1 + $0x14] sm:$0xf]
  %v28 = vld [vmem:[%s1 + $0x18] sm:$0xf]
  %v29 = vld [vmem:[%s1 + $0x1c] sm:$0xf]
  %v30 = vld [vmem:[%s1 + $0x20] sm:$0xf]
  %v31 = vld [vmem:[%s1 + $0x24] sm:$0xf]
  %v32 = vld [vmem:[%s1 + $0x28] sm:$0xf]
  %v33 = vld [vmem:[%s1 + $0x2c] sm:$0xf]
  %v34 = vld [vmem:[%s1 + $0x30] sm:$0xf]
  %v35 = vld [vmem:[%s1 + $0x34] sm:$0xf]
  %v36 = vld [vmem:[%s1 + $0x38] sm:$0xf]
  %v37 = vld [vmem:[%s1 + $0x3c] sm:$0xf]
  %v38 = vld [vmem:[%s1 + $0x40] sm:$0xf]
  %v39 = vld [vmem:[%s1 + $0x44] sm:$0xf]
  %v40 = vld [vmem:[%s1 + $0x48] sm:$0xf]
  %v41 = vld [vmem:[%s1 + $0x4c] sm:$0xf]
  %v42 = vld [vmem:[%s1 + $0x50] sm:$0xf]
  %v43 = vld [vmem:[%s1 + $0x54] sm:$0xf]
  %v44 = vld [vmem:[%s1 + $0x58] sm:$0xf]
  %v45 = vld [vmem:[%s1 + $0x5c] sm:$0xf]
  %v46 = vld [vmem:[%s1 + $0x60] sm:$0xf]
  %v47 = vld [vmem:[%s1 + $0x64] sm:$0xf]
  %v48 = vld [vmem:[%s1 + $0x68] sm:$0xf]
  %v49 = vld [vmem:[%s1 + $0x6c] sm:$0xf]
  %v50 = vld [vmem:[%s1 + $0x70] sm:$0xf]
  %v51 = vld [vmem:[%s1 + $0x74] sm:$0xf]
  %v52 = vld [vmem:[%s1 + $0x78] sm:$0xf]
  %v53 = vld [vmem:[%s1 + $0x7c] sm:$0xf]
  %v54 = vld [vmem:[%s1 + $0x80] sm:$0xf]
  %v55 = vld [vmem:[%s1 + $0x84] sm:$0xf]
  %v56 = vld [vmem:[%s1 + $0x88] sm:$0xf]
  %v57 = vld [vmem:[%s1 + $0x8c] sm:$0xf]
  %v58 = vld [vmem:[%s1 + $0x90] sm:$0xf]
  %v59 = vld [vmem:[%s1 + $0x94] sm:$0xf]
  %v60 = vld [vmem:[%s1 + $0x98] sm:$0xf]
  %v61 = vld [vmem:[%s1 + $0x9c] sm:$0xf]
  %v62 = vld [vmem:[%s1 + $0xa0] sm:$0xf]
  %v63 = vld [vmem:[%s1 + $0xa4] sm:$0xf]
  %v64 = vld [vmem:[%s1 + $0xa8] sm:$0xf]
  %v65 = vld [vmem:[%s1 + $0xac] sm:$0xf]
  %v66 = vld [vmem:[%s1 + $0xb0] sm:$0xf]
  %v67 = vld [vmem:[%s1 + $0xb4] sm:$0xf]
  %v68 = vld [vmem:[%s1 + $0xb8] sm:$0xf]
  %v69 = vld [vmem:[%s1 + $0xbc] sm:$0xf]
  %v70 = vld [vmem:[%s1 + $0xc0] sm:$0xf]
  %v71 = vld [vmem:[%s1 + $0xc4] sm:$0xf]
  %v72 = vld [vmem:[%s1 + $0xc8] sm:$0xf]
  %v73 = vld [vmem:[%s1 + $0xcc] sm:$0xf]
  %v74 = vld [vmem:[%s1 + $0xd0] sm:$0xf]
  %v75 = vld [vmem:[%s1 + $0xd4] sm:$0xf]
  %v76 = vld [vmem:[%s1 + $0xd8] sm:$0xf]
  %v77 = vld [vmem:[%s1 + $0xdc] sm:$0xf]
  %v78 = vld [vmem:[%s1 + $0xe0] sm:$0xf]
  %v79 = vld [vmem:[%s1 + $0xe4] sm:$0xf]
  %v80 = vld [vmem:[%s1 + $0xe8] sm:$0xf]
  %v81 = vld [vmem:[%s1 + $0xec] sm:$0xf]
  %v82 = vld [vmem:[%s1 + $0xf0] sm:$0xf]
  %v83 = vld [vmem:[%s1 + $0xf4] sm:$0xf]
  %v84 = vld [vmem:[%s1 + $0xf8] sm:$0xf]
  %v85 = vld [vmem:[%s1 + $0xfc] sm:$0xf]
  %v88 = vunpack.c.l.b16 %v19
  %v89 = vunpack.c.h.b16 %v19
  %v90 = vunpack.c.l.b16 %v20
  %v91 = vunpack.c.h.b16 %v20
  %v92 = vpack.c.b16 %v88, %v88
  %v93 = vpack.c.b16 %v89, %v89
  %v94 = vpack.c.b16 %v90, %v90
  %v95 = vpack.c.b16 %v91, %v91
  %v164 = vunpack.c.l.b16 %v22
  %v165 = vunpack.c.l.b16 %v23
  %v166 = vunpack.c.l.b16 %v24
  %v167 = vunpack.c.l.b16 %v25
  %v168 = vunpack.c.l.b16 %v26
  %v169 = vunpack.c.l.b16 %v27
  %v170 = vunpack.c.l.b16 %v28
  %v171 = vunpack.c.l.b16 %v29
  %v172 = vunpack.c.l.b16 %v30
  %v173 = vunpack.c.l.b16 %v31
  %v174 = vunpack.c.l.b16 %v32
  %v175 = vunpack.c.l.b16 %v33
  %v176 = vunpack.c.l.b16 %v34
  %v177 = vunpack.c.l.b16 %v35
  %v178 = vunpack.c.l.b16 %v36
  %v179 = vunpack.c.l.b16 %v37
  %v180 = vunpack.c.l.b16 %v38
  %v181 = vunpack.c.l.b16 %v39
  %v182 = vunpack.c.l.b16 %v40
  %v183 = vunpack.c.l.b16 %v41
  %v184 = vunpack.c.l.b16 %v42
  %v185 = vunpack.c.l.b16 %v43
  %v186 = vunpack.c.l.b16 %v44
  %v187 = vunpack.c.l.b16 %v45
  %v188 = vunpack.c.l.b16 %v46
  %v189 = vunpack.c.l.b16 %v47
  %v190 = vunpack.c.l.b16 %v48
  %v191 = vunpack.c.l.b16 %v49
  %v192 = vunpack.c.l.b16 %v50
  %v193 = vunpack.c.l.b16 %v51
  %v194 = vunpack.c.l.b16 %v52
  %v195 = vunpack.c.l.b16 %v53
  %v196 = vunpack.c.l.b16 %v54
  %v197 = vunpack.c.l.b16 %v55
  %v198 = vunpack.c.l.b16 %v56
  %v199 = vunpack.c.l.b16 %v57
  %v200 = vunpack.c.l.b16 %v58
  %v201 = vunpack.c.l.b16 %v59
  %v202 = vunpack.c.l.b16 %v60
  %v203 = vunpack.c.l.b16 %v61
  %v204 = vunpack.c.l.b16 %v62
  %v205 = vunpack.c.l.b16 %v63
  %v206 = vunpack.c.l.b16 %v64
  %v207 = vunpack.c.l.b16 %v65
  %v208 = vunpack.c.l.b16 %v66
  %v209 = vunpack.c.l.b16 %v67
  %v210 = vunpack.c.l.b16 %v68
  %v211 = vunpack.c.l.b16 %v69
  %v212 = vunpack.c.l.b16 %v70
  %v213 = vunpack.c.l.b16 %v71
  %v214 = vunpack.c.l.b16 %v72
  %v215 = vunpack.c.l.b16 %v73
  %v216 = vunpack.c.l.b16 %v74
  %v217 = vunpack.c.l.b16 %v75
  %v218 = vunpack.c.l.b16 %v76
  %v219 = vunpack.c.l.b16 %v77
  %v220 = vunpack.c.l.b16 %v78
  %v221 = vunpack.c.l.b16 %v79
  %v222 = vunpack.c.l.b16 %v80
  %v223 = vunpack.c.l.b16 %v81
  %v224 = vunpack.c.l.b16 %v82
  %v225 = vunpack.c.l.b16 %v83
  %v226 = vunpack.c.l.b16 %v84
  %v227 = vunpack.c.l.b16 %v85
  %v228 = vpack.c.b16 %v165, %v164
  %v229 = vpack.c.b16 %v167, %v166
  %v230 = vpack.c.b16 %v169, %v168
  %v231 = vpack.c.b16 %v171, %v170
  %v232 = vpack.c.b16 %v173, %v172
  %v233 = vpack.c.b16 %v175, %v174
  %v234 = vpack.c.b16 %v177, %v176
  %v235 = vpack.c.b16 %v179, %v178
  %v236 = vpack.c.b16 %v181, %v180
  %v237 = vpack.c.b16 %v183, %v182
  %v238 = vpack.c.b16 %v185, %v184
  %v239 = vpack.c.b16 %v187, %v186
  %v240 = vpack.c.b16 %v189, %v188
  %v241 = vpack.c.b16 %v191, %v190
  %v242 = vpack.c.b16 %v193, %v192
  %v243 = vpack.c.b16 %v195, %v194
  %v244 = vpack.c.b16 %v197, %v196
  %v245 = vpack.c.b16 %v199, %v198
  %v246 = vpack.c.b16 %v201, %v200
  %v247 = vpack.c.b16 %v203, %v202
  %v248 = vpack.c.b16 %v205, %v204
  %v249 = vpack.c.b16 %v207, %v206
  %v250 = vpack.c.b16 %v209, %v208
  %v251 = vpack.c.b16 %v211, %v210
  %v252 = vpack.c.b16 %v213, %v212
  %v253 = vpack.c.b16 %v215, %v214
  %v254 = vpack.c.b16 %v217, %v216
  %v255 = vpack.c.b16 %v219, %v218
  %v256 = vpack.c.b16 %v221, %v220
  %v257 = vpack.c.b16 %v223, %v222
  %v258 = vpack.c.b16 %v225, %v224
  %v259 = vpack.c.b16 %v227, %v226
  %292 = vmatprep.subr.bf16.mxu0 0
  %293 = vmatpush1.bf16.msra.mxu0 %v235
  %294 = vmatprep.subr.bf16.mxu0 0
  %295 = vmatpush1.bf16.msra.mxu0 %v234
  %296 = vmatprep.subr.bf16.mxu0 0
  %297 = vmatpush1.bf16.msra.mxu0 %v233
  %298 = vmatprep.subr.bf16.mxu0 0
  %299 = vmatpush1.bf16.msra.mxu0 %v232
  %300 = vmatprep.subr.bf16.mxu0 0
  %301 = vmatpush1.bf16.msra.mxu0 %v231
  %302 = vmatprep.subr.bf16.mxu0 0
  %303 = vmatpush1.bf16.msra.mxu0 %v230
  %304 = vmatprep.subr.bf16.mxu0 0
  %305 = vmatpush1.bf16.msra.mxu0 %v229
  %306 = vmatprep.subr.bf16.mxu0 0
  %307 = vmatpush1.bf16.msra.mxu0 %v228
  %308 = vmatprep.subr.bf16.mxu0 0
  %309 = vmatpush2.bf16.msra.mxu0 %v243
  %310 = vmatprep.subr.bf16.mxu0 0
  %311 = vmatpush2.bf16.msra.mxu0 %v242
  %312 = vmatprep.subr.bf16.mxu0 0
  %313 = vmatpush2.bf16.msra.mxu0 %v241
  %314 = vmatprep.subr.bf16.mxu0 0
  %315 = vmatpush2.bf16.msra.mxu0 %v240
  %316 = vmatprep.subr.bf16.mxu0 0
  %317 = vmatpush2.bf16.msra.mxu0 %v239
  %318 = vmatprep.subr.bf16.mxu0 0
  %319 = vmatpush2.bf16.msra.mxu0 %v238
  %320 = vmatprep.subr.bf16.mxu0 0
  %321 = vmatpush2.bf16.msra.mxu0 %v237
  %322 = vmatprep.subr.bf16.mxu0 0
  %323 = vmatpush2.bf16.msra.mxu0 %v236
  %324 = vmatprep.mubr.bf16.mxu0 %v93
  %325 = vmatmul.mubr.bf16.gmra.mxu0 %v92
  %v326 = vpop.f32.mrf.mxu0
  %v327 = vadd.f32 0.0, %v326
  %v328 = vpop.f32.mrf.mxu0
  %v329 = vpop.f32.mrf.mxu0
  %v330 = vpop.f32.mrf.mxu0
  %331 = vdwg.mxu0
  %332 = vmatprep.subr.bf16.mxu0 0
  %333 = vmatpush1.bf16.msra.mxu0 %v251
  %334 = vmatprep.subr.bf16.mxu0 0
  %335 = vmatpush1.bf16.msra.mxu0 %v250
  %336 = vmatprep.subr.bf16.mxu0 0
  %337 = vmatpush1.bf16.msra.mxu0 %v249
  %338 = vmatprep.subr.bf16.mxu0 0
  %339 = vmatpush1.bf16.msra.mxu0 %v248
  %340 = vmatprep.subr.bf16.mxu0 0
  %341 = vmatpush1.bf16.msra.mxu0 %v247
  %342 = vmatprep.subr.bf16.mxu0 0
  %343 = vmatpush1.bf16.msra.mxu0 %v246
  %344 = vmatprep.subr.bf16.mxu0 0
  %345 = vmatpush1.bf16.msra.mxu0 %v245
  %346 = vmatprep.subr.bf16.mxu0 0
  %347 = vmatpush1.bf16.msra.mxu0 %v244
  %348 = vmatprep.subr.bf16.mxu0 0
  %349 = vmatpush2.bf16.msra.mxu0 %v259
  %350 = vmatprep.subr.bf16.mxu0 0
  %351 = vmatpush2.bf16.msra.mxu0 %v258
  %352 = vmatprep.subr.bf16.mxu0 0
  %353 = vmatpush2.bf16.msra.mxu0 %v257
  %354 = vmatprep.subr.bf16.mxu0 0
  %355 = vmatpush2.bf16.msra.mxu0 %v256
  %356 = vmatprep.subr.bf16.mxu0 0
  %357 = vmatpush2.bf16.msra.mxu0 %v255
  %358 = vmatprep.subr.bf16.mxu0 0
  %359 = vmatpush2.bf16.msra.mxu0 %v254
  %360 = vmatprep.subr.bf16.mxu0 0
  %361 = vmatpush2.bf16.msra.mxu0 %v253
  %362 = vmatprep.subr.bf16.mxu0 0
  %363 = vmatpush2.bf16.msra.mxu0 %v252
  %364 = vmatprep.mubr.bf16.mxu0 %v95
  %365 = vmatmul.mubr.bf16.gmra.mxu0 %v94
  %v366 = vpop.f32.mrf.mxu0
  %v367 = vadd.f32 %v327, %v366
  %v368 = vpop.f32.mrf.mxu0
  %v369 = vpop.f32.mrf.mxu0
  %v370 = vpop.f32.mrf.mxu0
  %371 = vdwg.mxu0
  %v372 = vadd.f32 %v21, %v367
  %373 = vst [vmem:[#allocation2] sm:$0xff] %v372
  // Predicated region
  $region14: #{_lambda_.38} parent=0 // pred_check
    %p374 = pneg %p12
  $region15: #{_lambda_.38} parent=0 // pred_check_branch
    %376 = sbr.rel (%p374) target = $region17
  $region16: #{_lambda_.38} parent=0 // pred_region
    %v377 = vld [vmem:[#allocation2] sm:$0xff]
    %378 = vst [vmem:[%s2] sm:$0xff] %v377
  $region17: #{_lambda_.38} parent=0 // pred_fallthru
    _
  // Predicated region
  $region18: #{_lambda_.38} parent=0 // pred_check
    _
  $region19: #{_lambda_.38} parent=0 // pred_check_branch
    %380 = sbr.rel (0) target = $region21
  $region20: #{_lambda_.38} parent=0 // pred_region
    _
  $region21: #{_lambda_.38} parent=0 // pred_fallthru
    _
  // Predicated region
  $region22: #{_lambda_.38} parent=0 // pred_check
    _
  $region23: #{_lambda_.38} parent=0 // pred_check_branch
    %382 = sbr.rel (0) target = $region25
  $region24: #{_lambda_.38} parent=0 // pred_region
    _
  $region25: #{_lambda_.38} parent=0 // pred_fallthru
    _

// kernel: _lambda_.42
$region0: #{_lambda_.42}
  #allocation0 [shape = 'u32[]', space=smem, size = 0x4, offset = 0x4, fixed_abs, tag = 'smem constant byte address 0x4 - core index']
  #allocation1 [shape = 'u32[144,128]{1,0:T(1,128)}', space=vmem, size = 0x12000, scoped, tag = 'internal scratch']
  #allocation2 [shape = 'f32[32,128]{1,0:T(8,128)}', space=vmem, size = 0x4000, scoped, tag = 'scratch operand']
  %s0 = inlined_call_operand.vmem [shape: bf16[32,256], index: 0, kind: input, shape index: {}]
  %s1 = inlined_call_operand.vmem [shape: bf16[256,128], index: 1, kind: input, shape index: {}]
  %s2 = inlined_call_operand.vmem [shape: f32[32,128], index: 2, kind: output, shape index: {}]
  %s3 = sld [smem:[#allocation0]]
  $region26: #{_lambda_.42} parent=0
    _
  %s5 = ssub.s32 1, %s3
  %s6 = scalar_select 0, %s5, %s3
  // Predicated region
  $region2: #{_lambda_.42} parent=0 // pred_check
    _
  $region3: #{_lambda_.42} parent=0 // pred_check_branch
    %8 = sbr.rel (0) target = $region5
  $region4: #{_lambda_.42} parent=0 // pred_region
    _
  $region5: #{_lambda_.42} parent=0 // pred_fallthru
    _
  // Predicated region
  $region6: #{_lambda_.42} parent=0 // pred_check
    _
  $region7: #{_lambda_.42} parent=0 // pred_check_branch
    %10 = sbr.rel (0) target = $region9
  $region8: #{_lambda_.42} parent=0 // pred_region
    _
  $region9: #{_lambda_.42} parent=0 // pred_fallthru
    _
  %p12 = scmp.eq.s32.totalorder 0, 0
  // Predicated region
  $region10: #{_lambda_.42} parent=0 // pred_check
    %p13 = pneg %p12
  $region11: #{_lambda_.42} parent=0 // pred_check_branch
    %15 = sbr.rel (%p13) target = $region13
  $region12: #{_lambda_.42} parent=0 // pred_region
    %16 = vst [vmem:[#allocation2] sm:$0xff] 0.0
    %17 = vst [vmem:[#allocation2 + $0x8] sm:$0xff] 0.0
    %18 = vst [vmem:[#allocation2 + $0x10] sm:$0xff] 0.0
    %19 = vst [vmem:[#allocation2 + $0x18] sm:$0xff] 0.0
  $region13: #{_lambda_.42} parent=0 // pred_fallthru
    _
  %v20 = vld [vmem:[%s0] sm:$0xff]
  %v21 = vld [vmem:[%s0 + $0x8] sm:$0xff]
  %v22 = vld [vmem:[%s0 + $0x10] sm:$0xff]
  %v23 = vld [vmem:[%s0 + $0x18] sm:$0xff]
  %v24 = vmax.bf16 %v20, 0
  %v25 = vmax.bf16 %v21, 0
  %v26 = vmax.bf16 %v22, 0
  %v27 = vmax.bf16 %v23, 0
  %v28 = vld [vmem:[#allocation2] sm:$0xff]
  %v29 = vld [vmem:[#allocation2 + $0x8] sm:$0xff]
  %v30 = vld [vmem:[#allocation2 + $0x10] sm:$0xff]
  %v31 = vld [vmem:[#allocation2 + $0x18] sm:$0xff]
  %v32 = vld [vmem:[%s1] sm:$0xf]
  %v33 = vld [vmem:[%s1 + $0x4] sm:$0xf]
  %v34 = vld [vmem:[%s1 + $0x8] sm:$0xf]
  %v35 = vld [vmem:[%s1 + $0xc] sm:$0xf]
  %v36 = vld [vmem:[%s1 + $0x10] sm:$0xf]
  %v37 = vld [vmem:[%s1 + $0x14] sm:$0xf]
  %v38 = vld [vmem:[%s1 + $0x18] sm:$0xf]
  %v39 = vld [vmem:[%s1 + $0x1c] sm:$0xf]
  %v40 = vld [vmem:[%s1 + $0x20] sm:$0xf]
  %v41 = vld [vmem:[%s1 + $0x24] sm:$0xf]
  %v42 = vld [vmem:[%s1 + $0x28] sm:$0xf]
  %v43 = vld [vmem:[%s1 + $0x2c] sm:$0xf]
  %v44 = vld [vmem:[%s1 + $0x30] sm:$0xf]
  %v45 = vld [vmem:[%s1 + $0x34] sm:$0xf]
  %v46 = vld [vmem:[%s1 + $0x38] sm:$0xf]
  %v47 = vld [vmem:[%s1 + $0x3c] sm:$0xf]
  %v48 = vld [vmem:[%s1 + $0x40] sm:$0xf]
  %v49 = vld [vmem:[%s1 + $0x44] sm:$0xf]
  %v50 = vld [vmem:[%s1 + $0x48] sm:$0xf]
  %v51 = vld [vmem:[%s1 + $0x4c] sm:$0xf]
  %v52 = vld [vmem:[%s1 + $0x50] sm:$0xf]
  %v53 = vld [vmem:[%s1 + $0x54] sm:$0xf]
  %v54 = vld [vmem:[%s1 + $0x58] sm:$0xf]
  %v55 = vld [vmem:[%s1 + $0x5c] sm:$0xf]
  %v56 = vld [vmem:[%s1 + $0x60] sm:$0xf]
  %v57 = vld [vmem:[%s1 + $0x64] sm:$0xf]
  %v58 = vld [vmem:[%s1 + $0x68] sm:$0xf]
  %v59 = vld [vmem:[%s1 + $0x6c] sm:$0xf]
  %v60 = vld [vmem:[%s1 + $0x70] sm:$0xf]
  %v61 = vld [vmem:[%s1 + $0x74] sm:$0xf]
  %v62 = vld [vmem:[%s1 + $0x78] sm:$0xf]
  %v63 = vld [vmem:[%s1 + $0x7c] sm:$0xf]
  %v68 = vunpack.c.l.b16 %v24
  %v69 = vunpack.c.h.b16 %v24
  %v70 = vunpack.c.l.b16 %v25
  %v71 = vunpack.c.h.b16 %v25
  %v72 = vunpack.c.l.b16 %v26
  %v73 = vunpack.c.h.b16 %v26
  %v74 = vunpack.c.l.b16 %v27
  %v75 = vunpack.c.h.b16 %v27
  %v76 = vpack.c.b16 %v70, %v68
  %v77 = vpack.c.b16 %v71, %v69
  %v78 = vpack.c.b16 %v74, %v72
  %v79 = vpack.c.b16 %v75, %v73
  %v116 = vunpack.c.l.b16 %v32
  %v117 = vunpack.c.l.b16 %v33
  %v118 = vunpack.c.l.b16 %v34
  %v119 = vunpack.c.l.b16 %v35
  %v120 = vunpack.c.l.b16 %v36
  %v121 = vunpack.c.l.b16 %v37
  %v122 = vunpack.c.l.b16 %v38
  %v123 = vunpack.c.l.b16 %v39
  %v124 = vunpack.c.l.b16 %v40
  %v125 = vunpack.c.l.b16 %v41
  %v126 = vunpack.c.l.b16 %v42
  %v127 = vunpack.c.l.b16 %v43
  %v128 = vunpack.c.l.b16 %v44
  %v129 = vunpack.c.l.b16 %v45
  %v130 = vunpack.c.l.b16 %v46
  %v131 = vunpack.c.l.b16 %v47
  %v132 = vunpack.c.l.b16 %v48
  %v133 = vunpack.c.l.b16 %v49
  %v134 = vunpack.c.l.b16 %v50
  %v135 = vunpack.c.l.b16 %v51
  %v136 = vunpack.c.l.b16 %v52
  %v137 = vunpack.c.l.b16 %v53
  %v138 = vunpack.c.l.b16 %v54
  %v139 = vunpack.c.l.b16 %v55
  %v140 = vunpack.c.l.b16 %v56
  %v141 = vunpack.c.l.b16 %v57
  %v142 = vunpack.c.l.b16 %v58
  %v143 = vunpack.c.l.b16 %v59
  %v144 = vunpack.c.l.b16 %v60
  %v145 = vunpack.c.l.b16 %v61
  %v146 = vunpack.c.l.b16 %v62
  %v147 = vunpack.c.l.b16 %v63
  %v148 = vpack.c.b16 %v117, %v116
  %v149 = vpack.c.b16 %v119, %v118
  %v150 = vpack.c.b16 %v121, %v120
  %v151 = vpack.c.b16 %v123, %v122
  %v152 = vpack.c.b16 %v125, %v124
  %v153 = vpack.c.b16 %v127, %v126
  %v154 = vpack.c.b16 %v129, %v128
  %v155 = vpack.c.b16 %v131, %v130
  %v156 = vpack.c.b16 %v133, %v132
  %v157 = vpack.c.b16 %v135, %v134
  %v158 = vpack.c.b16 %v137, %v136
  %v159 = vpack.c.b16 %v139, %v138
  %v160 = vpack.c.b16 %v141, %v140
  %v161 = vpack.c.b16 %v143, %v142
  %v162 = vpack.c.b16 %v145, %v144
  %v163 = vpack.c.b16 %v147, %v146
  %180 = vmatprep.subr.bf16.mxu0 0
  %181 = vmatpush1.bf16.msra.mxu0 %v155
  %182 = vmatprep.subr.bf16.mxu0 0
  %183 = vmatpush1.bf16.msra.mxu0 %v154
  %184 = vmatprep.subr.bf16.mxu0 0
  %185 = vmatpush1.bf16.msra.mxu0 %v153
  %186 = vmatprep.subr.bf16.mxu0 0
  %187 = vmatpush1.bf16.msra.mxu0 %v152
  %188 = vmatprep.subr.bf16.mxu0 0
  %189 = vmatpush1.bf16.msra.mxu0 %v151
  %190 = vmatprep.subr.bf16.mxu0 0
  %191 = vmatpush1.bf16.msra.mxu0 %v150
  %192 = vmatprep.subr.bf16.mxu0 0
  %193 = vmatpush1.bf16.msra.mxu0 %v149
  %194 = vmatprep.subr.bf16.mxu0 0
  %195 = vmatpush1.bf16.msra.mxu0 %v148
  %196 = vmatprep.subr.bf16.mxu0 0
  %197 = vmatpush2.bf16.msra.mxu0 %v163
  %198 = vmatprep.subr.bf16.mxu0 0
  %199 = vmatpush2.bf16.msra.mxu0 %v162
  %200 = vmatprep.subr.bf16.mxu0 0
  %201 = vmatpush2.bf16.msra.mxu0 %v161
  %202 = vmatprep.subr.bf16.mxu0 0
  %203 = vmatpush2.bf16.msra.mxu0 %v160
  %204 = vmatprep.subr.bf16.mxu0 0
  %205 = vmatpush2.bf16.msra.mxu0 %v159
  %206 = vmatprep.subr.bf16.mxu0 0
  %207 = vmatpush2.bf16.msra.mxu0 %v158
  %208 = vmatprep.subr.bf16.mxu0 0
  %209 = vmatpush2.bf16.msra.mxu0 %v157
  %210 = vmatprep.subr.bf16.mxu0 0
  %211 = vmatpush2.bf16.msra.mxu0 %v156
  %212 = vmatprep.mubr.bf16.mxu0 %v77
  %213 = vmatmul.mubr.bf16.gmra.mxu0 %v76
  %v214 = vpop.f32.mrf.mxu0
  %v215 = vadd.f32 0.0, %v214
  %v216 = vpop.f32.mrf.mxu0
  %v217 = vpop.f32.mrf.mxu0
  %v218 = vadd.f32 0.0, %v217
  %v219 = vpop.f32.mrf.mxu0
  %220 = vmatprep.mubr.bf16.mxu0 %v79
  %221 = vmatmul.mubr.bf16.gmra.mxu0 %v78
  %v222 = vpop.f32.mrf.mxu0
  %v223 = vadd.f32 0.0, %v222
  %v224 = vpop.f32.mrf.mxu0
  %v225 = vpop.f32.mrf.mxu0
  %v226 = vadd.f32 0.0, %v225
  %v227 = vpop.f32.mrf.mxu0
  %228 = vdwg.mxu0
  %v229 = vadd.f32 %v28, %v215
  %v230 = vadd.f32 %v29, %v218
  %v231 = vadd.f32 %v30, %v223
  %v232 = vadd.f32 %v31, %v226
  %233 = vst [vmem:[#allocation2] sm:$0xff] %v229
  %234 = vst [vmem:[#allocation2 + $0x8] sm:$0xff] %v230
  %235 = vst [vmem:[#allocation2 + $0x10] sm:$0xff] %v231
  %236 = vst [vmem:[#allocation2 + $0x18] sm:$0xff] %v232
  // Predicated region
  $region14: #{_lambda_.42} parent=0 // pred_check
    %p237 = pneg %p12
  $region15: #{_lambda_.42} parent=0 // pred_check_branch
    %239 = sbr.rel (%p237) target = $region17
  $region16: #{_lambda_.42} parent=0 // pred_region
    %v240 = vld [vmem:[#allocation2] sm:$0xff]
    %v241 = vld [vmem:[#allocation2 + $0x8] sm:$0xff]
    %v242 = vld [vmem:[#allocation2 + $0x10] sm:$0xff]
    %v243 = vld [vmem:[#allocation2 + $0x18] sm:$0xff]
    %244 = vst [vmem:[%s2] sm:$0xff] %v240
    %245 = vst [vmem:[%s2 + $0x8] sm:$0xff] %v241
    %246 = vst [vmem:[%s2 + $0x10] sm:$0xff] %v242
    %247 = vst [vmem:[%s2 + $0x18] sm:$0xff] %v243
  $region17: #{_lambda_.42} parent=0 // pred_fallthru
    _
  // Predicated region
  $region18: #{_lambda_.42} parent=0 // pred_check
    _
  $region19: #{_lambda_.42} parent=0 // pred_check_branch
    %249 = sbr.rel (0) target = $region21
  $region20: #{_lambda_.42} parent=0 // pred_region
    _
  $region21: #{_lambda_.42} parent=0 // pred_fallthru
    _
  // Predicated region
  $region22: #{_lambda_.42} parent=0 // pred_check
    _
  $region23: #{_lambda_.42} parent=0 // pred_check_branch
    %251 = sbr.rel (0) target = $region25
  $region24: #{_lambda_.42} parent=0 // pred_region
    _
  $region25: #{_lambda_.42} parent=0 // pred_fallthru
    _

// kernel: _lambda_.47
$region0: #{_lambda_.47}
  #allocation0 [shape = 'u32[]', space=smem, size = 0x4, offset = 0x4, fixed_abs, tag = 'smem constant byte address 0x4 - core index']
  #allocation1 [shape = 'u32[144,128]{1,0:T(1,128)}', space=vmem, size = 0x12000, scoped, tag = 'internal scratch']
  #allocation2 [shape = 'f32[128,128]{1,0:T(8,128)}', space=vmem, size = 0x10000, scoped, tag = 'scratch operand']
  %s0 = inlined_call_operand.vmem [shape: bf16[128,128], index: 0, kind: input, shape index: {}]
  %s1 = inlined_call_operand.vmem [shape: bf16[128,128], index: 1, kind: input, shape index: {}]
  %s2 = inlined_call_operand.vmem [shape: f32[128,128], index: 2, kind: output, shape index: {}]
  %s3 = sld [smem:[#allocation0]]
  $region26: #{_lambda_.47} parent=0
    _
  %s5 = ssub.s32 1, %s3
  %s6 = scalar_select 0, %s5, %s3
  // Predicated region
  $region2: #{_lambda_.47} parent=0 // pred_check
    _
  $region3: #{_lambda_.47} parent=0 // pred_check_branch
    %8 = sbr.rel (0) target = $region5
  $region4: #{_lambda_.47} parent=0 // pred_region
    _
  $region5: #{_lambda_.47} parent=0 // pred_fallthru
    _
  // Predicated region
  $region6: #{_lambda_.47} parent=0 // pred_check
    _
  $region7: #{_lambda_.47} parent=0 // pred_check_branch
    %10 = sbr.rel (0) target = $region9
  $region8: #{_lambda_.47} parent=0 // pred_region
    _
  $region9: #{_lambda_.47} parent=0 // pred_fallthru
    _
  %p12 = scmp.eq.s32.totalorder 0, 0
  // Predicated region
  $region10: #{_lambda_.47} parent=0 // pred_check
    %p13 = pneg %p12
  $region11: #{_lambda_.47} parent=0 // pred_check_branch
    %15 = sbr.rel (%p13) target = $region13
  $region12: #{_lambda_.47} parent=0 // pred_region
    %16 = vst [vmem:[#allocation2] sm:$0xff] 0.0
    %17 = vst [vmem:[#allocation2 + $0x8] sm:$0xff] 0.0
    %18 = vst [vmem:[#allocation2 + $0x10] sm:$0xff] 0.0
    %19 = vst [vmem:[#allocation2 + $0x18] sm:$0xff] 0.0
    %20 = vst [vmem:[#allocation2 + $0x20] sm:$0xff] 0.0
    %21 = vst [vmem:[#allocation2 + $0x28] sm:$0xff] 0.0
    %22 = vst [vmem:[#allocation2 + $0x30] sm:$0xff] 0.0
    %23 = vst [vmem:[#allocation2 + $0x38] sm:$0xff] 0.0
    %24 = vst [vmem:[#allocation2 + $0x40] sm:$0xff] 0.0
    %25 = vst [vmem:[#allocation2 + $0x48] sm:$0xff] 0.0
    %26 = vst [vmem:[#allocation2 + $0x50] sm:$0xff] 0.0
    %27 = vst [vmem:[#allocation2 + $0x58] sm:$0xff] 0.0
    %28 = vst [vmem:[#allocation2 + $0x60] sm:$0xff] 0.0
    %29 = vst [vmem:[#allocation2 + $0x68] sm:$0xff] 0.0
    %30 = vst [vmem:[#allocation2 + $0x70] sm:$0xff] 0.0
    %31 = vst [vmem:[#allocation2 + $0x78] sm:$0xff] 0.0
  $region13: #{_lambda_.47} parent=0 // pred_fallthru
    _
  %v32 = vld [vmem:[%s0] sm:$0xf]
  %v33 = vld [vmem:[%s0 + $0x4] sm:$0xf]
  %v34 = vld [vmem:[%s0 + $0x8] sm:$0xf]
  %v35 = vld [vmem:[%s0 + $0xc] sm:$0xf]
  %v36 = vld [vmem:[%s0 + $0x10] sm:$0xf]
  %v37 = vld [vmem:[%s0 + $0x14] sm:$0xf]
  %v38 = vld [vmem:[%s0 + $0x18] sm:$0xf]
  %v39 = vld [vmem:[%s0 + $0x1c] sm:$0xf]
  %v40 = vld [vmem:[%s0 + $0x20] sm:$0xf]
  %v41 = vld [vmem:[%s0 + $0x24] sm:$0xf]
  %v42 = vld [vmem:[%s0 + $0x28] sm:$0xf]
  %v43 = vld [vmem:[%s0 + $0x2c] sm:$0xf]
  %v44 = vld [vmem:[%s0 + $0x30] sm:$0xf]
  %v45 = vld [vmem:[%s0 + $0x34] sm:$0xf]
  %v46 = vld [vmem:[%s0 + $0x38] sm:$0xf]
  %v47 = vld [vmem:[%s0 + $0x3c] sm:$0xf]
  %v48 = vmax.bf16 %v32, 0
  %v49 = vmax.bf16 %v33, 0
  %v50 = vmax.bf16 %v34, 0
  %v51 = vmax.bf16 %v35, 0
  %v52 = vmax.bf16 %v36, 0
  %v53 = vmax.bf16 %v37, 0
  %v54 = vmax.bf16 %v38, 0
  %v55 = vmax.bf16 %v39, 0
  %v56 = vmax.bf16 %v40, 0
  %v57 = vmax.bf16 %v41, 0
  %v58 = vmax.bf16 %v42, 0
  %v59 = vmax.bf16 %v43, 0
  %v60 = vmax.bf16 %v44, 0
  %v61 = vmax.bf16 %v45, 0
  %v62 = vmax.bf16 %v46, 0
  %v63 = vmax.bf16 %v47, 0
  %v64 = vld [vmem:[#allocation2] sm:$0xff]
  %v65 = vld [vmem:[#allocation2 + $0x8] sm:$0xff]
  %v66 = vld [vmem:[#allocation2 + $0x10] sm:$0xff]
  %v67 = vld [vmem:[#allocation2 + $0x18] sm:$0xff]
  %v68 = vld [vmem:[#allocation2 + $0x20] sm:$0xff]
  %v69 = vld [vmem:[#allocation2 + $0x28] sm:$0xff]
  %v70 = vld [vmem:[#allocation2 + $0x30] sm:$0xff]
  %v71 = vld [vmem:[#allocation2 + $0x38] sm:$0xff]
  %v72 = vld [vmem:[#allocation2 + $0x40] sm:$0xff]
  %v73 = vld [vmem:[#allocation2 + $0x48] sm:$0xff]
  %v74 = vld [vmem:[#allocation2 + $0x50] sm:$0xff]
  %v75 = vld [vmem:[#allocation2 + $0x58] sm:$0xff]
  %v76 = vld [vmem:[#allocation2 + $0x60] sm:$0xff]
  %v77 = vld [vmem:[#allocation2 + $0x68] sm:$0xff]
  %v78 = vld [vmem:[#allocation2 + $0x70] sm:$0xff]
  %v79 = vld [vmem:[#allocation2 + $0x78] sm:$0xff]
  %v80 = vld [vmem:[%s1] sm:$0xf]
  %v81 = vld [vmem:[%s1 + $0x4] sm:$0xf]
  %v82 = vld [vmem:[%s1 + $0x8] sm:$0xf]
  %v83 = vld [vmem:[%s1 + $0xc] sm:$0xf]
  %v84 = vld [vmem:[%s1 + $0x10] sm:$0xf]
  %v85 = vld [vmem:[%s1 + $0x14] sm:$0xf]
  %v86 = vld [vmem:[%s1 + $0x18] sm:$0xf]
  %v87 = vld [vmem:[%s1 + $0x1c] sm:$0xf]
  %v88 = vld [vmem:[%s1 + $0x20] sm:$0xf]
  %v89 = vld [vmem:[%s1 + $0x24] sm:$0xf]
  %v90 = vld [vmem:[%s1 + $0x28] sm:$0xf]
  %v91 = vld [vmem:[%s1 + $0x2c] sm:$0xf]
  %v92 = vld [vmem:[%s1 + $0x30] sm:$0xf]
  %v93 = vld [vmem:[%s1 + $0x34] sm:$0xf]
  %v94 = vld [vmem:[%s1 + $0x38] sm:$0xf]
  %v95 = vld [vmem:[%s1 + $0x3c] sm:$0xf]
  %v112 = vunpack.c.l.b16 %v48
  %v113 = vunpack.c.l.b16 %v49
  %v114 = vunpack.c.l.b16 %v50
  %v115 = vunpack.c.l.b16 %v51
  %v116 = vunpack.c.l.b16 %v52
  %v117 = vunpack.c.l.b16 %v53
  %v118 = vunpack.c.l.b16 %v54
  %v119 = vunpack.c.l.b16 %v55
  %v120 = vunpack.c.l.b16 %v56
  %v121 = vunpack.c.l.b16 %v57
  %v122 = vunpack.c.l.b16 %v58
  %v123 = vunpack.c.l.b16 %v59
  %v124 = vunpack.c.l.b16 %v60
  %v125 = vunpack.c.l.b16 %v61
  %v126 = vunpack.c.l.b16 %v62
  %v127 = vunpack.c.l.b16 %v63
  %v128 = vpack.c.b16 %v113, %v112
  %v129 = vpack.c.b16 %v115, %v114
  %v130 = vpack.c.b16 %v117, %v116
  %v131 = vpack.c.b16 %v119, %v118
  %v132 = vpack.c.b16 %v121, %v120
  %v133 = vpack.c.b16 %v123, %v122
  %v134 = vpack.c.b16 %v125, %v124
  %v135 = vpack.c.b16 %v127, %v126
  %v160 = vunpack.c.l.b16 %v80
  %v161 = vunpack.c.l.b16 %v81
  %v162 = vunpack.c.l.b16 %v82
  %v163 = vunpack.c.l.b16 %v83
  %v164 = vunpack.c.l.b16 %v84
  %v165 = vunpack.c.l.b16 %v85
  %v166 = vunpack.c.l.b16 %v86
  %v167 = vunpack.c.l.b16 %v87
  %v168 = vunpack.c.l.b16 %v88
  %v169 = vunpack.c.l.b16 %v89
  %v170 = vunpack.c.l.b16 %v90
  %v171 = vunpack.c.l.b16 %v91
  %v172 = vunpack.c.l.b16 %v92
  %v173 = vunpack.c.l.b16 %v93
  %v174 = vunpack.c.l.b16 %v94
  %v175 = vunpack.c.l.b16 %v95
  %v176 = vpack.c.b16 %v161, %v160
  %v177 = vpack.c.b16 %v163, %v162
  %v178 = vpack.c.b16 %v165, %v164
  %v179 = vpack.c.b16 %v167, %v166
  %v180 = vpack.c.b16 %v169, %v168
  %v181 = vpack.c.b16 %v171, %v170
  %v182 = vpack.c.b16 %v173, %v172
  %v183 = vpack.c.b16 %v175, %v174
  %192 = vmatprep.subr.bf16.mxu0 0
  %193 = vmatpush1.bf16.msra.mxu0 %v183
  %194 = vmatprep.subr.bf16.mxu0 0
  %195 = vmatpush1.bf16.msra.mxu0 %v182
  %196 = vmatprep.subr.bf16.mxu0 0
  %197 = vmatpush1.bf16.msra.mxu0 %v181
  %198 = vmatprep.subr.bf16.mxu0 0
  %199 = vmatpush1.bf16.msra.mxu0 %v180
  %200 = vmatprep.subr.bf16.mxu0 0
  %201 = vmatpush1.bf16.msra.mxu0 %v179
  %202 = vmatprep.subr.bf16.mxu0 0
  %203 = vmatpush1.bf16.msra.mxu0 %v178
  %204 = vmatprep.subr.bf16.mxu0 0
  %205 = vmatpush1.bf16.msra.mxu0 %v177
  %206 = vmatprep.subr.bf16.mxu0 0
  %207 = vmatpush1.bf16.msra.mxu0 %v176
  %208 = vmatprep.subr.bf16.mxu0 0
  %209 = vmatpush2.bf16.msra.mxu0 0
  %210 = vmatprep.subr.bf16.mxu0 0
  %211 = vmatpush2.bf16.msra.mxu0 0
  %212 = vmatprep.subr.bf16.mxu0 0
  %213 = vmatpush2.bf16.msra.mxu0 0
  %214 = vmatprep.subr.bf16.mxu0 0
  %215 = vmatpush2.bf16.msra.mxu0 0
  %216 = vmatprep.subr.bf16.mxu0 0
  %217 = vmatpush2.bf16.msra.mxu0 0
  %218 = vmatprep.subr.bf16.mxu0 0
  %219 = vmatpush2.bf16.msra.mxu0 0
  %220 = vmatprep.subr.bf16.mxu0 0
  %221 = vmatpush2.bf16.msra.mxu0 0
  %222 = vmatprep.subr.bf16.mxu0 0
  %223 = vmatpush2.bf16.msra.mxu0 0
  %224 = vmatprep.mubr.bf16.mxu0 0
  %225 = vmatmul.mubr.bf16.gmra.mxu0 %v128
  %v226 = vpop.f32.mrf.mxu0
  %v227 = vadd.f32 0.0, %v226
  %v228 = vpop.f32.mrf.mxu0
  %v229 = vpop.f32.mrf.mxu0
  %v230 = vadd.f32 0.0, %v229
  %v231 = vpop.f32.mrf.mxu0
  %232 = vmatprep.mubr.bf16.mxu0 0
  %233 = vmatmul.mubr.bf16.gmra.mxu0 %v129
  %v234 = vpop.f32.mrf.mxu0
  %v235 = vadd.f32 0.0, %v234
  %v236 = vpop.f32.mrf.mxu0
  %v237 = vpop.f32.mrf.mxu0
  %v238 = vadd.f32 0.0, %v237
  %v239 = vpop.f32.mrf.mxu0
  %240 = vmatprep.mubr.bf16.mxu0 0
  %241 = vmatmul.mubr.bf16.gmra.mxu0 %v130
  %v242 = vpop.f32.mrf.mxu0
  %v243 = vadd.f32 0.0, %v242
  %v244 = vpop.f32.mrf.mxu0
  %v245 = vpop.f32.mrf.mxu0
  %v246 = vadd.f32 0.0, %v245
  %v247 = vpop.f32.mrf.mxu0
  %248 = vmatprep.mubr.bf16.mxu0 0
  %249 = vmatmul.mubr.bf16.gmra.mxu0 %v131
  %v250 = vpop.f32.mrf.mxu0
  %v251 = vadd.f32 0.0, %v250
  %v252 = vpop.f32.mrf.mxu0
  %v253 = vpop.f32.mrf.mxu0
  %v254 = vadd.f32 0.0, %v253
  %v255 = vpop.f32.mrf.mxu0
  %256 = vmatprep.mubr.bf16.mxu0 0
  %257 = vmatmul.mubr.bf16.gmra.mxu0 %v132
  %v258 = vpop.f32.mrf.mxu0
  %v259 = vadd.f32 0.0, %v258
  %v260 = vpop.f32.mrf.mxu0
  %v261 = vpop.f32.mrf.mxu0
  %v262 = vadd.f32 0.0, %v261
  %v263 = vpop.f32.mrf.mxu0
  %264 = vmatprep.mubr.bf16.mxu0 0
  %265 = vmatmul.mubr.bf16.gmra.mxu0 %v133
  %v266 = vpop.f32.mrf.mxu0
  %v267 = vadd.f32 0.0, %v266
  %v268 = vpop.f32.mrf.mxu0
  %v269 = vpop.f32.mrf.mxu0
  %v270 = vadd.f32 0.0, %v269
  %v271 = vpop.f32.mrf.mxu0
  %272 = vmatprep.mubr.bf16.mxu0 0
  %273 = vmatmul.mubr.bf16.gmra.mxu0 %v134
  %v274 = vpop.f32.mrf.mxu0
  %v275 = vadd.f32 0.0, %v274
  %v276 = vpop.f32.mrf.mxu0
  %v277 = vpop.f32.mrf.mxu0
  %v278 = vadd.f32 0.0, %v277
  %v279 = vpop.f32.mrf.mxu0
  %280 = vmatprep.mubr.bf16.mxu0 0
  %281 = vmatmul.mubr.bf16.gmra.mxu0 %v135
  %v282 = vpop.f32.mrf.mxu0
  %v283 = vadd.f32 0.0, %v282
  %v284 = vpop.f32.mrf.mxu0
  %v285 = vpop.f32.mrf.mxu0
  %v286 = vadd.f32 0.0, %v285
  %v287 = vpop.f32.mrf.mxu0
  %288 = vdwg.mxu0
  %v289 = vadd.f32 %v64, %v227
  %v290 = vadd.f32 %v65, %v230
  %v291 = vadd.f32 %v66, %v235
  %v292 = vadd.f32 %v67, %v238
  %v293 = vadd.f32 %v68, %v243
  %v294 = vadd.f32 %v69, %v246
  %v295 = vadd.f32 %v70, %v251
  %v296 = vadd.f32 %v71, %v254
  %v297 = vadd.f32 %v72, %v259
  %v298 = vadd.f32 %v73, %v262
  %v299 = vadd.f32 %v74, %v267
  %v300 = vadd.f32 %v75, %v270
  %v301 = vadd.f32 %v76, %v275
  %v302 = vadd.f32 %v77, %v278
  %v303 = vadd.f32 %v78, %v283
  %v304 = vadd.f32 %v79, %v286
  %305 = vst [vmem:[#allocation2] sm:$0xff] %v289
  %306 = vst [vmem:[#allocation2 + $0x8] sm:$0xff] %v290
  %307 = vst [vmem:[#allocation2 + $0x10] sm:$0xff] %v291
  %308 = vst [vmem:[#allocation2 + $0x18] sm:$0xff] %v292
  %309 = vst [vmem:[#allocation2 + $0x20] sm:$0xff] %v293
  %310 = vst [vmem:[#allocation2 + $0x28] sm:$0xff] %v294
  %311 = vst [vmem:[#allocation2 + $0x30] sm:$0xff] %v295
  %312 = vst [vmem:[#allocation2 + $0x38] sm:$0xff] %v296
  %313 = vst [vmem:[#allocation2 + $0x40] sm:$0xff] %v297
  %314 = vst [vmem:[#allocation2 + $0x48] sm:$0xff] %v298
  %315 = vst [vmem:[#allocation2 + $0x50] sm:$0xff] %v299
  %316 = vst [vmem:[#allocation2 + $0x58] sm:$0xff] %v300
  %317 = vst [vmem:[#allocation2 + $0x60] sm:$0xff] %v301
  %318 = vst [vmem:[#allocation2 + $0x68] sm:$0xff] %v302
  %319 = vst [vmem:[#allocation2 + $0x70] sm:$0xff] %v303
  %320 = vst [vmem:[#allocation2 + $0x78] sm:$0xff] %v304
  // Predicated region
  $region14: #{_lambda_.47} parent=0 // pred_check
    %p321 = pneg %p12
  $region15: #{_lambda_.47} parent=0 // pred_check_branch
    %323 = sbr.rel (%p321) target = $region17
  $region16: #{_lambda_.47} parent=0 // pred_region
    %v324 = vld [vmem:[#allocation2] sm:$0xff]
    %v325 = vld [vmem:[#allocation2 + $0x8] sm:$0xff]
    %v326 = vld [vmem:[#allocation2 + $0x10] sm:$0xff]
    %v327 = vld [vmem:[#allocation2 + $0x18] sm:$0xff]
    %v328 = vld [vmem:[#allocation2 + $0x20] sm:$0xff]
    %v329 = vld [vmem:[#allocation2 + $0x28] sm:$0xff]
    %v330 = vld [vmem:[#allocation2 + $0x30] sm:$0xff]
    %v331 = vld [vmem:[#allocation2 + $0x38] sm:$0xff]
    %v332 = vld [vmem:[#allocation2 + $0x40] sm:$0xff]
    %v333 = vld [vmem:[#allocation2 + $0x48] sm:$0xff]
    %v334 = vld [vmem:[#allocation2 + $0x50] sm:$0xff]
    %v335 = vld [vmem:[#allocation2 + $0x58] sm:$0xff]
    %v336 = vld [vmem:[#allocation2 + $0x60] sm:$0xff]
    %v337 = vld [vmem:[#allocation2 + $0x68] sm:$0xff]
    %v338 = vld [vmem:[#allocation2 + $0x70] sm:$0xff]
    %v339 = vld [vmem:[#allocation2 + $0x78] sm:$0xff]
    %340 = vst [vmem:[%s2] sm:$0xff] %v324
    %341 = vst [vmem:[%s2 + $0x8] sm:$0xff] %v325
    %342 = vst [vmem:[%s2 + $0x10] sm:$0xff] %v326
    %343 = vst [vmem:[%s2 + $0x18] sm:$0xff] %v327
    %344 = vst [vmem:[%s2 + $0x20] sm:$0xff] %v328
    %345 = vst [vmem:[%s2 + $0x28] sm:$0xff] %v329
    %346 = vst [vmem:[%s2 + $0x30] sm:$0xff] %v330
    %347 = vst [vmem:[%s2 + $0x38] sm:$0xff] %v331
    %348 = vst [vmem:[%s2 + $0x40] sm:$0xff] %v332
    %349 = vst [vmem:[%s2 + $0x48] sm:$0xff] %v333
    %350 = vst [vmem:[%s2 + $0x50] sm:$0xff] %v334
    %351 = vst [vmem:[%s2 + $0x58] sm:$0xff] %v335
    %352 = vst [vmem:[%s2 + $0x60] sm:$0xff] %v336
    %353 = vst [vmem:[%s2 + $0x68] sm:$0xff] %v337
    %354 = vst [vmem:[%s2 + $0x70] sm:$0xff] %v338
    %355 = vst [vmem:[%s2 + $0x78] sm:$0xff] %v339
  $region17: #{_lambda_.47} parent=0 // pred_fallthru
    _
  // Predicated region
  $region18: #{_lambda_.47} parent=0 // pred_check
    _
  $region19: #{_lambda_.47} parent=0 // pred_check_branch
    %357 = sbr.rel (0) target = $region21
  $region20: #{_lambda_.47} parent=0 // pred_region
    _
  $region21: #{_lambda_.47} parent=0 // pred_fallthru
    _
  // Predicated region
  $region22: #{_lambda_.47} parent=0 // pred_check
    _
  $region23: #{_lambda_.47} parent=0 // pred_check_branch
    %359 = sbr.rel (0) target = $region25
  $region24: #{_lambda_.47} parent=0 // pred_region
    _
  $region25: #{_lambda_.47} parent=0 // pred_fallthru
    _

// kernel: _lambda_.51
$region0: #{_lambda_.51}
  #allocation0 [shape = 'u32[]', space=smem, size = 0x4, offset = 0x4, fixed_abs, tag = 'smem constant byte address 0x4 - core index']
  #allocation1 [shape = 'u32[144,128]{1,0:T(1,128)}', space=vmem, size = 0x12000, scoped, tag = 'internal scratch']
  %s0 = inlined_call_operand.vmem [shape: f32[512,8], index: 0, kind: input, shape index: {}]
  %s1 = inlined_call_operand.vmem [shape: f32[1,8], index: 1, kind: input, shape index: {}]
  %s2 = inlined_call_operand.vmem [shape: f32[1,8], index: 2, kind: input, shape index: {}]
  %s3 = inlined_call_operand.vmem [shape: f32[512,8], index: 3, kind: output, shape index: {}]
  %s4 = sld [smem:[#allocation0]]
  $region22: #{_lambda_.51} parent=0
    _
  %s6 = ssub.s32 1, %s4
  %s7 = scalar_select 0, %s6, %s4
  // Predicated region
  $region2: #{_lambda_.51} parent=0 // pred_check
    _
  $region3: #{_lambda_.51} parent=0 // pred_check_branch
    %9 = sbr.rel (0) target = $region5
  $region4: #{_lambda_.51} parent=0 // pred_region
    _
  $region5: #{_lambda_.51} parent=0 // pred_fallthru
    _
  // Predicated region
  $region6: #{_lambda_.51} parent=0 // pred_check
    _
  $region7: #{_lambda_.51} parent=0 // pred_check_branch
    %11 = sbr.rel (0) target = $region9
  $region8: #{_lambda_.51} parent=0 // pred_region
    _
  $region9: #{_lambda_.51} parent=0 // pred_fallthru
    _
  // Predicated region
  $region10: #{_lambda_.51} parent=0 // pred_check
    _
  $region11: #{_lambda_.51} parent=0 // pred_check_branch
    %13 = sbr.rel (0) target = $region13
  $region12: #{_lambda_.51} parent=0 // pred_region
    _
  $region13: #{_lambda_.51} parent=0 // pred_fallthru
    _
  %v14 = vld [vmem:[%s0] sm:$0xff]
  %v15 = vld [vmem:[%s0 + $0x8] sm:$0xff]
  %v16 = vld [vmem:[%s0 + $0x10] sm:$0xff]
  %v17 = vld [vmem:[%s0 + $0x18] sm:$0xff]
  %v18 = vld [vmem:[%s0 + $0x20] sm:$0xff]
  %v19 = vld [vmem:[%s0 + $0x28] sm:$0xff]
  %v20 = vld [vmem:[%s0 + $0x30] sm:$0xff]
  %v21 = vld [vmem:[%s0 + $0x38] sm:$0xff]
  %v22 = vld [vmem:[%s0 + $0x40] sm:$0xff]
  %v23 = vld [vmem:[%s0 + $0x48] sm:$0xff]
  %v24 = vld [vmem:[%s0 + $0x50] sm:$0xff]
  %v25 = vld [vmem:[%s0 + $0x58] sm:$0xff]
  %v26 = vld [vmem:[%s0 + $0x60] sm:$0xff]
  %v27 = vld [vmem:[%s0 + $0x68] sm:$0xff]
  %v28 = vld [vmem:[%s0 + $0x70] sm:$0xff]
  %v29 = vld [vmem:[%s0 + $0x78] sm:$0xff]
  %v30 = vld [vmem:[%s0 + $0x80] sm:$0xff]
  %v31 = vld [vmem:[%s0 + $0x88] sm:$0xff]
  %v32 = vld [vmem:[%s0 + $0x90] sm:$0xff]
  %v33 = vld [vmem:[%s0 + $0x98] sm:$0xff]
  %v34 = vld [vmem:[%s0 + $0xa0] sm:$0xff]
  %v35 = vld [vmem:[%s0 + $0xa8] sm:$0xff]
  %v36 = vld [vmem:[%s0 + $0xb0] sm:$0xff]
  %v37 = vld [vmem:[%s0 + $0xb8] sm:$0xff]
  %v38 = vld [vmem:[%s0 + $0xc0] sm:$0xff]
  %v39 = vld [vmem:[%s0 + $0xc8] sm:$0xff]
  %v40 = vld [vmem:[%s0 + $0xd0] sm:$0xff]
  %v41 = vld [vmem:[%s0 + $0xd8] sm:$0xff]
  %v42 = vld [vmem:[%s0 + $0xe0] sm:$0xff]
  %v43 = vld [vmem:[%s0 + $0xe8] sm:$0xff]
  %v44 = vld [vmem:[%s0 + $0xf0] sm:$0xff]
  %v45 = vld [vmem:[%s0 + $0xf8] sm:$0xff]
  %v46 = vld [vmem:[%s0 + $0x100] sm:$0xff]
  %v47 = vld [vmem:[%s0 + $0x108] sm:$0xff]
  %v48 = vld [vmem:[%s0 + $0x110] sm:$0xff]
  %v49 = vld [vmem:[%s0 + $0x118] sm:$0xff]
  %v50 = vld [vmem:[%s0 + $0x120] sm:$0xff]
  %v51 = vld [vmem:[%s0 + $0x128] sm:$0xff]
  %v52 = vld [vmem:[%s0 + $0x130] sm:$0xff]
  %v53 = vld [vmem:[%s0 + $0x138] sm:$0xff]
  %v54 = vld [vmem:[%s0 + $0x140] sm:$0xff]
  %v55 = vld [vmem:[%s0 + $0x148] sm:$0xff]
  %v56 = vld [vmem:[%s0 + $0x150] sm:$0xff]
  %v57 = vld [vmem:[%s0 + $0x158] sm:$0xff]
  %v58 = vld [vmem:[%s0 + $0x160] sm:$0xff]
  %v59 = vld [vmem:[%s0 + $0x168] sm:$0xff]
  %v60 = vld [vmem:[%s0 + $0x170] sm:$0xff]
  %v61 = vld [vmem:[%s0 + $0x178] sm:$0xff]
  %v62 = vld [vmem:[%s0 + $0x180] sm:$0xff]
  %v63 = vld [vmem:[%s0 + $0x188] sm:$0xff]
  %v64 = vld [vmem:[%s0 + $0x190] sm:$0xff]
  %v65 = vld [vmem:[%s0 + $0x198] sm:$0xff]
  %v66 = vld [vmem:[%s0 + $0x1a0] sm:$0xff]
  %v67 = vld [vmem:[%s0 + $0x1a8] sm:$0xff]
  %v68 = vld [vmem:[%s0 + $0x1b0] sm:$0xff]
  %v69 = vld [vmem:[%s0 + $0x1b8] sm:$0xff]
  %v70 = vld [vmem:[%s0 + $0x1c0] sm:$0xff]
  %v71 = vld [vmem:[%s0 + $0x1c8] sm:$0xff]
  %v72 = vld [vmem:[%s0 + $0x1d0] sm:$0xff]
  %v73 = vld [vmem:[%s0 + $0x1d8] sm:$0xff]
  %v74 = vld [vmem:[%s0 + $0x1e0] sm:$0xff]
  %v75 = vld [vmem:[%s0 + $0x1e8] sm:$0xff]
  %v76 = vld [vmem:[%s0 + $0x1f0] sm:$0xff]
  %v77 = vld [vmem:[%s0 + $0x1f8] sm:$0xff]
  %vm78 = vcmask 64512
  %v79 = vsel %vm78, %v14, 0.0
  %v80 = vsel %vm78, %v15, 0.0
  %v81 = vadd.f32 %v79, %v80
  %v82 = vsel %vm78, %v16, 0.0
  %v83 = vadd.f32 %v81, %v82
  %v84 = vsel %vm78, %v17, 0.0
  %v85 = vadd.f32 %v83, %v84
  %v86 = vsel %vm78, %v18, 0.0
  %v87 = vadd.f32 %v85, %v86
  %v88 = vsel %vm78, %v19, 0.0
  %v89 = vadd.f32 %v87, %v88
  %v90 = vsel %vm78, %v20, 0.0
  %v91 = vadd.f32 %v89, %v90
  %v92 = vsel %vm78, %v21, 0.0
  %v93 = vadd.f32 %v91, %v92
  %v94 = vsel %vm78, %v22, 0.0
  %v95 = vadd.f32 %v93, %v94
  %v96 = vsel %vm78, %v23, 0.0
  %v97 = vadd.f32 %v95, %v96
  %v98 = vsel %vm78, %v24, 0.0
  %v99 = vadd.f32 %v97, %v98
  %v100 = vsel %vm78, %v25, 0.0
  %v101 = vadd.f32 %v99, %v100
  %v102 = vsel %vm78, %v26, 0.0
  %v103 = vadd.f32 %v101, %v102
  %v104 = vsel %vm78, %v27, 0.0
  %v105 = vadd.f32 %v103, %v104
  %v106 = vsel %vm78, %v28, 0.0
  %v107 = vadd.f32 %v105, %v106
  %v108 = vsel %vm78, %v29, 0.0
  %v109 = vadd.f32 %v107, %v108
  %v110 = vsel %vm78, %v30, 0.0
  %v111 = vadd.f32 %v109, %v110
  %v112 = vsel %vm78, %v31, 0.0
  %v113 = vadd.f32 %v111, %v112
  %v114 = vsel %vm78, %v32, 0.0
  %v115 = vadd.f32 %v113, %v114
  %v116 = vsel %vm78, %v33, 0.0
  %v117 = vadd.f32 %v115, %v116
  %v118 = vsel %vm78, %v34, 0.0
  %v119 = vadd.f32 %v117, %v118
  %v120 = vsel %vm78, %v35, 0.0
  %v121 = vadd.f32 %v119, %v120
  %v122 = vsel %vm78, %v36, 0.0
  %v123 = vadd.f32 %v121, %v122
  %v124 = vsel %vm78, %v37, 0.0
  %v125 = vadd.f32 %v123, %v124
  %v126 = vsel %vm78, %v38, 0.0
  %v127 = vadd.f32 %v125, %v126
  %v128 = vsel %vm78, %v39, 0.0
  %v129 = vadd.f32 %v127, %v128
  %v130 = vsel %vm78, %v40, 0.0
  %v131 = vadd.f32 %v129, %v130
  %v132 = vsel %vm78, %v41, 0.0
  %v133 = vadd.f32 %v131, %v132
  %v134 = vsel %vm78, %v42, 0.0
  %v135 = vadd.f32 %v133, %v134
  %v136 = vsel %vm78, %v43, 0.0
  %v137 = vadd.f32 %v135, %v136
  %v138 = vsel %vm78, %v44, 0.0
  %v139 = vadd.f32 %v137, %v138
  %v140 = vsel %vm78, %v45, 0.0
  %v141 = vadd.f32 %v139, %v140
  %v142 = vsel %vm78, %v46, 0.0
  %v143 = vadd.f32 %v141, %v142
  %v144 = vsel %vm78, %v47, 0.0
  %v145 = vadd.f32 %v143, %v144
  %v146 = vsel %vm78, %v48, 0.0
  %v147 = vadd.f32 %v145, %v146
  %v148 = vsel %vm78, %v49, 0.0
  %v149 = vadd.f32 %v147, %v148
  %v150 = vsel %vm78, %v50, 0.0
  %v151 = vadd.f32 %v149, %v150
  %v152 = vsel %vm78, %v51, 0.0
  %v153 = vadd.f32 %v151, %v152
  %v154 = vsel %vm78, %v52, 0.0
  %v155 = vadd.f32 %v153, %v154
  %v156 = vsel %vm78, %v53, 0.0
  %v157 = vadd.f32 %v155, %v156
  %v158 = vsel %vm78, %v54, 0.0
  %v159 = vadd.f32 %v157, %v158
  %v160 = vsel %vm78, %v55, 0.0
  %v161 = vadd.f32 %v159, %v160
  %v162 = vsel %vm78, %v56, 0.0
  %v163 = vadd.f32 %v161, %v162
  %v164 = vsel %vm78, %v57, 0.0
  %v165 = vadd.f32 %v163, %v164
  %v166 = vsel %vm78, %v58, 0.0
  %v167 = vadd.f32 %v165, %v166
  %v168 = vsel %vm78, %v59, 0.0
  %v169 = vadd.f32 %v167, %v168
  %v170 = vsel %vm78, %v60, 0.0
  %v171 = vadd.f32 %v169, %v170
  %v172 = vsel %vm78, %v61, 0.0
  %v173 = vadd.f32 %v171, %v172
  %v174 = vsel %vm78, %v62, 0.0
  %v175 = vadd.f32 %v173, %v174
  %v176 = vsel %vm78, %v63, 0.0
  %v177 = vadd.f32 %v175, %v176
  %v178 = vsel %vm78, %v64, 0.0
  %v179 = vadd.f32 %v177, %v178
  %v180 = vsel %vm78, %v65, 0.0
  %v181 = vadd.f32 %v179, %v180
  %v182 = vsel %vm78, %v66, 0.0
  %v183 = vadd.f32 %v181, %v182
  %v184 = vsel %vm78, %v67, 0.0
  %v185 = vadd.f32 %v183, %v184
  %v186 = vsel %vm78, %v68, 0.0
  %v187 = vadd.f32 %v185, %v186
  %v188 = vsel %vm78, %v69, 0.0
  %v189 = vadd.f32 %v187, %v188
  %v190 = vsel %vm78, %v70, 0.0
  %v191 = vadd.f32 %v189, %v190
  %v192 = vsel %vm78, %v71, 0.0
  %v193 = vadd.f32 %v191, %v192
  %v194 = vsel %vm78, %v72, 0.0
  %v195 = vadd.f32 %v193, %v194
  %v196 = vsel %vm78, %v73, 0.0
  %v197 = vadd.f32 %v195, %v196
  %v198 = vsel %vm78, %v74, 0.0
  %v199 = vadd.f32 %v197, %v198
  %v200 = vsel %vm78, %v75, 0.0
  %v201 = vadd.f32 %v199, %v200
  %v202 = vsel %vm78, %v76, 0.0
  %v203 = vadd.f32 %v201, %v202
  %v204 = vsel %vm78, %v77, 0.0
  %v205 = vadd.f32 %v203, %v204
  %v206 = vrot.slane %v205, 4
  %v207 = vadd.f32 %v205, %v206
  %v208 = vrot.slane %v207, 2
  %v209 = vadd.f32 %v207, %v208
  %v210 = vrot.slane %v209, 1
  %v211 = vadd.f32 %v209, %v210
  %v212 = vmul.f32 %v14, %v14
  %v213 = vmul.f32 %v15, %v15
  %v214 = vmul.f32 %v16, %v16
  %v215 = vmul.f32 %v17, %v17
  %v216 = vmul.f32 %v18, %v18
  %v217 = vmul.f32 %v19, %v19
  %v218 = vmul.f32 %v20, %v20
  %v219 = vmul.f32 %v21, %v21
  %v220 = vmul.f32 %v22, %v22
  %v221 = vmul.f32 %v23, %v23
  %v222 = vmul.f32 %v24, %v24
  %v223 = vmul.f32 %v25, %v25
  %v224 = vmul.f32 %v26, %v26
  %v225 = vmul.f32 %v27, %v27
  %v226 = vmul.f32 %v28, %v28
  %v227 = vmul.f32 %v29, %v29
  %v228 = vmul.f32 %v30, %v30
  %v229 = vmul.f32 %v31, %v31
  %v230 = vmul.f32 %v32, %v32
  %v231 = vmul.f32 %v33, %v33
  %v232 = vmul.f32 %v34, %v34
  %v233 = vmul.f32 %v35, %v35
  %v234 = vmul.f32 %v36, %v36
  %v235 = vmul.f32 %v37, %v37
  %v236 = vmul.f32 %v38, %v38
  %v237 = vmul.f32 %v39, %v39
  %v238 = vmul.f32 %v40, %v40
  %v239 = vmul.f32 %v41, %v41
  %v240 = vmul.f32 %v42, %v42
  %v241 = vmul.f32 %v43, %v43
  %v242 = vmul.f32 %v44, %v44
  %v243 = vmul.f32 %v45, %v45
  %v244 = vmul.f32 %v46, %v46
  %v245 = vmul.f32 %v47, %v47
  %v246 = vmul.f32 %v48, %v48
  %v247 = vmul.f32 %v49, %v49
  %v248 = vmul.f32 %v50, %v50
  %v249 = vmul.f32 %v51, %v51
  %v250 = vmul.f32 %v52, %v52
  %v251 = vmul.f32 %v53, %v53
  %v252 = vmul.f32 %v54, %v54
  %v253 = vmul.f32 %v55, %v55
  %v254 = vmul.f32 %v56, %v56
  %v255 = vmul.f32 %v57, %v57
  %v256 = vmul.f32 %v58, %v58
  %v257 = vmul.f32 %v59, %v59
  %v258 = vmul.f32 %v60, %v60
  %v259 = vmul.f32 %v61, %v61
  %v260 = vmul.f32 %v62, %v62
  %v261 = vmul.f32 %v63, %v63
  %v262 = vmul.f32 %v64, %v64
  %v263 = vmul.f32 %v65, %v65
  %v264 = vmul.f32 %v66, %v66
  %v265 = vmul.f32 %v67, %v67
  %v266 = vmul.f32 %v68, %v68
  %v267 = vmul.f32 %v69, %v69
  %v268 = vmul.f32 %v70, %v70
  %v269 = vmul.f32 %v71, %v71
  %v270 = vmul.f32 %v72, %v72
  %v271 = vmul.f32 %v73, %v73
  %v272 = vmul.f32 %v74, %v74
  %v273 = vmul.f32 %v75, %v75
  %v274 = vmul.f32 %v76, %v76
  %v275 = vmul.f32 %v77, %v77
  %v276 = vsel %vm78, %v212, 0.0
  %v277 = vsel %vm78, %v213, 0.0
  %v278 = vadd.f32 %v276, %v277
  %v279 = vsel %vm78, %v214, 0.0
  %v280 = vadd.f32 %v278, %v279
  %v281 = vsel %vm78, %v215, 0.0
  %v282 = vadd.f32 %v280, %v281
  %v283 = vsel %vm78, %v216, 0.0
  %v284 = vadd.f32 %v282, %v283
  %v285 = vsel %vm78, %v217, 0.0
  %v286 = vadd.f32 %v284, %v285
  %v287 = vsel %vm78, %v218, 0.0
  %v288 = vadd.f32 %v286, %v287
  %v289 = vsel %vm78, %v219, 0.0
  %v290 = vadd.f32 %v288, %v289
  %v291 = vsel %vm78, %v220, 0.0
  %v292 = vadd.f32 %v290, %v291
  %v293 = vsel %vm78, %v221, 0.0
  %v294 = vadd.f32 %v292, %v293
  %v295 = vsel %vm78, %v222, 0.0
  %v296 = vadd.f32 %v294, %v295
  %v297 = vsel %vm78, %v223, 0.0
  %v298 = vadd.f32 %v296, %v297
  %v299 = vsel %vm78, %v224, 0.0
  %v300 = vadd.f32 %v298, %v299
  %v301 = vsel %vm78, %v225, 0.0
  %v302 = vadd.f32 %v300, %v301
  %v303 = vsel %vm78, %v226, 0.0
  %v304 = vadd.f32 %v302, %v303
  %v305 = vsel %vm78, %v227, 0.0
  %v306 = vadd.f32 %v304, %v305
  %v307 = vsel %vm78, %v228, 0.0
  %v308 = vadd.f32 %v306, %v307
  %v309 = vsel %vm78, %v229, 0.0
  %v310 = vadd.f32 %v308, %v309
  %v311 = vsel %vm78, %v230, 0.0
  %v312 = vadd.f32 %v310, %v311
  %v313 = vsel %vm78, %v231, 0.0
  %v314 = vadd.f32 %v312, %v313
  %v315 = vsel %vm78, %v232, 0.0
  %v316 = vadd.f32 %v314, %v315
  %v317 = vsel %vm78, %v233, 0.0
  %v318 = vadd.f32 %v316, %v317
  %v319 = vsel %vm78, %v234, 0.0
  %v320 = vadd.f32 %v318, %v319
  %v321 = vsel %vm78, %v235, 0.0
  %v322 = vadd.f32 %v320, %v321
  %v323 = vsel %vm78, %v236, 0.0
  %v324 = vadd.f32 %v322, %v323
  %v325 = vsel %vm78, %v237, 0.0
  %v326 = vadd.f32 %v324, %v325
  %v327 = vsel %vm78, %v238, 0.0
  %v328 = vadd.f32 %v326, %v327
  %v329 = vsel %vm78, %v239, 0.0
  %v330 = vadd.f32 %v328, %v329
  %v331 = vsel %vm78, %v240, 0.0
  %v332 = vadd.f32 %v330, %v331
  %v333 = vsel %vm78, %v241, 0.0
  %v334 = vadd.f32 %v332, %v333
  %v335 = vsel %vm78, %v242, 0.0
  %v336 = vadd.f32 %v334, %v335
  %v337 = vsel %vm78, %v243, 0.0
  %v338 = vadd.f32 %v336, %v337
  %v339 = vsel %vm78, %v244, 0.0
  %v340 = vadd.f32 %v338, %v339
  %v341 = vsel %vm78, %v245, 0.0
  %v342 = vadd.f32 %v340, %v341
  %v343 = vsel %vm78, %v246, 0.0
  %v344 = vadd.f32 %v342, %v343
  %v345 = vsel %vm78, %v247, 0.0
  %v346 = vadd.f32 %v344, %v345
  %v347 = vsel %vm78, %v248, 0.0
  %v348 = vadd.f32 %v346, %v347
  %v349 = vsel %vm78, %v249, 0.0
  %v350 = vadd.f32 %v348, %v349
  %v351 = vsel %vm78, %v250, 0.0
  %v352 = vadd.f32 %v350, %v351
  %v353 = vsel %vm78, %v251, 0.0
  %v354 = vadd.f32 %v352, %v353
  %v355 = vsel %vm78, %v252, 0.0
  %v356 = vadd.f32 %v354, %v355
  %v357 = vsel %vm78, %v253, 0.0
  %v358 = vadd.f32 %v356, %v357
  %v359 = vsel %vm78, %v254, 0.0
  %v360 = vadd.f32 %v358, %v359
  %v361 = vsel %vm78, %v255, 0.0
  %v362 = vadd.f32 %v360, %v361
  %v363 = vsel %vm78, %v256, 0.0
  %v364 = vadd.f32 %v362, %v363
  %v365 = vsel %vm78, %v257, 0.0
  %v366 = vadd.f32 %v364, %v365
  %v367 = vsel %vm78, %v258, 0.0
  %v368 = vadd.f32 %v366, %v367
  %v369 = vsel %vm78, %v259, 0.0
  %v370 = vadd.f32 %v368, %v369
  %v371 = vsel %vm78, %v260, 0.0
  %v372 = vadd.f32 %v370, %v371
  %v373 = vsel %vm78, %v261, 0.0
  %v374 = vadd.f32 %v372, %v373
  %v375 = vsel %vm78, %v262, 0.0
  %v376 = vadd.f32 %v374, %v375
  %v377 = vsel %vm78, %v263, 0.0
  %v378 = vadd.f32 %v376, %v377
  %v379 = vsel %vm78, %v264, 0.0
  %v380 = vadd.f32 %v378, %v379
  %v381 = vsel %vm78, %v265, 0.0
  %v382 = vadd.f32 %v380, %v381
  %v383 = vsel %vm78, %v266, 0.0
  %v384 = vadd.f32 %v382, %v383
  %v385 = vsel %vm78, %v267, 0.0
  %v386 = vadd.f32 %v384, %v385
  %v387 = vsel %vm78, %v268, 0.0
  %v388 = vadd.f32 %v386, %v387
  %v389 = vsel %vm78, %v269, 0.0
  %v390 = vadd.f32 %v388, %v389
  %v391 = vsel %vm78, %v270, 0.0
  %v392 = vadd.f32 %v390, %v391
  %v393 = vsel %vm78, %v271, 0.0
  %v394 = vadd.f32 %v392, %v393
  %v395 = vsel %vm78, %v272, 0.0
  %v396 = vadd.f32 %v394, %v395
  %v397 = vsel %vm78, %v273, 0.0
  %v398 = vadd.f32 %v396, %v397
  %v399 = vsel %vm78, %v274, 0.0
  %v400 = vadd.f32 %v398, %v399
  %v401 = vsel %vm78, %v275, 0.0
  %v402 = vadd.f32 %v400, %v401
  %v403 = vrot.slane %v402, 4
  %v404 = vadd.f32 %v402, %v403
  %v405 = vrot.slane %v404, 2
  %v406 = vadd.f32 %v404, %v405
  %v407 = vrot.slane %v406, 1
  %v408 = vadd.f32 %v406, %v407
  %v409 = vmul.f32 %v211, 0.001953125
  %v410 = vmul.f32 %v408, 0.001953125
  %v411 = vmul.f32 %v409, %v409
  %v412 = vsub.f32 %v410, %v411
  %v413 = vld [vmem:[%s1] sm:$0x1]
  %v414 = vadd.f32 %v412, 1e-05
  %v415 = vrsqrt.pop %v414
  %v416 = vmul.f32 %v413, %v415
  %v417 = vld [vmem:[%s2] sm:$0x1]
  %v418 = vmul.f32 %v409, %v416
  %v419 = vsub.f32 %v417, %v418
  %v421 = vlaneseq
  %v422 = vshrl.u32 %v421, 7
  %v423 = vsub.s32 0, %v422
  %v424 = vrot.slane %v416, %v423
  %v426 = vmul.f32 %v14, %v424
  %v427 = vmul.f32 %v15, %v424
  %v428 = vmul.f32 %v16, %v424
  %v429 = vmul.f32 %v17, %v424
  %v430 = vmul.f32 %v18, %v424
  %v431 = vmul.f32 %v19, %v424
  %v432 = vmul.f32 %v20, %v424
  %v433 = vmul.f32 %v21, %v424
  %v434 = vmul.f32 %v22, %v424
  %v435 = vmul.f32 %v23, %v424
  %v436 = vmul.f32 %v24, %v424
  %v437 = vmul.f32 %v25, %v424
  %v438 = vmul.f32 %v26, %v424
  %v439 = vmul.f32 %v27, %v424
  %v440 = vmul.f32 %v28, %v424
  %v441 = vmul.f32 %v29, %v424
  %v442 = vmul.f32 %v30, %v424
  %v443 = vmul.f32 %v31, %v424
  %v444 = vmul.f32 %v32, %v424
  %v445 = vmul.f32 %v33, %v424
  %v446 = vmul.f32 %v34, %v424
  %v447 = vmul.f32 %v35, %v424
  %v448 = vmul.f32 %v36, %v424
  %v449 = vmul.f32 %v37, %v424
  %v450 = vmul.f32 %v38, %v424
  %v451 = vmul.f32 %v39, %v424
  %v452 = vmul.f32 %v40, %v424
  %v453 = vmul.f32 %v41, %v424
  %v454 = vmul.f32 %v42, %v424
  %v455 = vmul.f32 %v43, %v424
  %v456 = vmul.f32 %v44, %v424
  %v457 = vmul.f32 %v45, %v424
  %v458 = vmul.f32 %v46, %v424
  %v459 = vmul.f32 %v47, %v424
  %v460 = vmul.f32 %v48, %v424
  %v461 = vmul.f32 %v49, %v424
  %v462 = vmul.f32 %v50, %v424
  %v463 = vmul.f32 %v51, %v424
  %v464 = vmul.f32 %v52, %v424
  %v465 = vmul.f32 %v53, %v424
  %v466 = vmul.f32 %v54, %v424
  %v467 = vmul.f32 %v55, %v424
  %v468 = vmul.f32 %v56, %v424
  %v469 = vmul.f32 %v57, %v424
  %v470 = vmul.f32 %v58, %v424
  %v471 = vmul.f32 %v59, %v424
  %v472 = vmul.f32 %v60, %v424
  %v473 = vmul.f32 %v61, %v424
  %v474 = vmul.f32 %v62, %v424
  %v475 = vmul.f32 %v63, %v424
  %v476 = vmul.f32 %v64, %v424
  %v477 = vmul.f32 %v65, %v424
  %v478 = vmul.f32 %v66, %v424
  %v479 = vmul.f32 %v67, %v424
  %v480 = vmul.f32 %v68, %v424
  %v481 = vmul.f32 %v69, %v424
  %v482 = vmul.f32 %v70, %v424
  %v483 = vmul.f32 %v71, %v424
  %v484 = vmul.f32 %v72, %v424
  %v485 = vmul.f32 %v73, %v424
  %v486 = vmul.f32 %v74, %v424
  %v487 = vmul.f32 %v75, %v424
  %v488 = vmul.f32 %v76, %v424
  %v489 = vmul.f32 %v77, %v424
  %v491 = vlaneseq
  %v492 = vshrl.u32 %v491, 7
  %v493 = vsub.s32 0, %v492
  %v494 = vrot.slane %v419, %v493
  %v496 = vadd.f32 %v426, %v494
  %v497 = vadd.f32 %v427, %v494
  %v498 = vadd.f32 %v428, %v494
  %v499 = vadd.f32 %v429, %v494
  %v500 = vadd.f32 %v430, %v494
  %v501 = vadd.f32 %v431, %v494
  %v502 = vadd.f32 %v432, %v494
  %v503 = vadd.f32 %v433, %v494
  %v504 = vadd.f32 %v434, %v494
  %v505 = vadd.f32 %v435, %v494
  %v506 = vadd.f32 %v436, %v494
  %v507 = vadd.f32 %v437, %v494
  %v508 = vadd.f32 %v438, %v494
  %v509 = vadd.f32 %v439, %v494
  %v510 = vadd.f32 %v440, %v494
  %v511 = vadd.f32 %v441, %v494
  %v512 = vadd.f32 %v442, %v494
  %v513 = vadd.f32 %v443, %v494
  %v514 = vadd.f32 %v444, %v494
  %v515 = vadd.f32 %v445, %v494
  %v516 = vadd.f32 %v446, %v494
  %v517 = vadd.f32 %v447, %v494
  %v518 = vadd.f32 %v448, %v494
  %v519 = vadd.f32 %v449, %v494
  %v520 = vadd.f32 %v450, %v494
  %v521 = vadd.f32 %v451, %v494
  %v522 = vadd.f32 %v452, %v494
  %v523 = vadd.f32 %v453, %v494
  %v524 = vadd.f32 %v454, %v494
  %v525 = vadd.f32 %v455, %v494
  %v526 = vadd.f32 %v456, %v494
  %v527 = vadd.f32 %v457, %v494
  %v528 = vadd.f32 %v458, %v494
  %v529 = vadd.f32 %v459, %v494
  %v530 = vadd.f32 %v460, %v494
  %v531 = vadd.f32 %v461, %v494
  %v532 = vadd.f32 %v462, %v494
  %v533 = vadd.f32 %v463, %v494
  %v534 = vadd.f32 %v464, %v494
  %v535 = vadd.f32 %v465, %v494
  %v536 = vadd.f32 %v466, %v494
  %v537 = vadd.f32 %v467, %v494
  %v538 = vadd.f32 %v468, %v494
  %v539 = vadd.f32 %v469, %v494
  %v540 = vadd.f32 %v470, %v494
  %v541 = vadd.f32 %v471, %v494
  %v542 = vadd.f32 %v472, %v494
  %v543 = vadd.f32 %v473, %v494
  %v544 = vadd.f32 %v474, %v494
  %v545 = vadd.f32 %v475, %v494
  %v546 = vadd.f32 %v476, %v494
  %v547 = vadd.f32 %v477, %v494
  %v548 = vadd.f32 %v478, %v494
  %v549 = vadd.f32 %v479, %v494
  %v550 = vadd.f32 %v480, %v494
  %v551 = vadd.f32 %v481, %v494
  %v552 = vadd.f32 %v482, %v494
  %v553 = vadd.f32 %v483, %v494
  %v554 = vadd.f32 %v484, %v494
  %v555 = vadd.f32 %v485, %v494
  %v556 = vadd.f32 %v486, %v494
  %v557 = vadd.f32 %v487, %v494
  %v558 = vadd.f32 %v488, %v494
  %v559 = vadd.f32 %v489, %v494
  %560 = vst.msk [vmem:[%s3] sm:$0xff] %vm78, %v496
  %561 = vst.msk [vmem:[%s3 + $0x8] sm:$0xff] %vm78, %v497
  %562 = vst.msk [vmem:[%s3 + $0x10] sm:$0xff] %vm78, %v498
  %563 = vst.msk [vmem:[%s3 + $0x18] sm:$0xff] %vm78, %v499
  %564 = vst.msk [vmem:[%s3 + $0x20] sm:$0xff] %vm78, %v500
  %565 = vst.msk [vmem:[%s3 + $0x28] sm:$0xff] %vm78, %v501
  %566 = vst.msk [vmem:[%s3 + $0x30] sm:$0xff] %vm78, %v502
  %567 = vst.msk [vmem:[%s3 + $0x38] sm:$0xff] %vm78, %v503
  %568 = vst.msk [vmem:[%s3 + $0x40] sm:$0xff] %vm78, %v504
  %569 = vst.msk [vmem:[%s3 + $0x48] sm:$0xff] %vm78, %v505
  %570 = vst.msk [vmem:[%s3 + $0x50] sm:$0xff] %vm78, %v506
  %571 = vst.msk [vmem:[%s3 + $0x58] sm:$0xff] %vm78, %v507
  %572 = vst.msk [vmem:[%s3 + $0x60] sm:$0xff] %vm78, %v508
  %573 = vst.msk [vmem:[%s3 + $0x68] sm:$0xff] %vm78, %v509
  %574 = vst.msk [vmem:[%s3 + $0x70] sm:$0xff] %vm78, %v510
  %575 = vst.msk [vmem:[%s3 + $0x78] sm:$0xff] %vm78, %v511
  %576 = vst.msk [vmem:[%s3 + $0x80] sm:$0xff] %vm78, %v512
  %577 = vst.msk [vmem:[%s3 + $0x88] sm:$0xff] %vm78, %v513
  %578 = vst.msk [vmem:[%s3 + $0x90] sm:$0xff] %vm78, %v514
  %579 = vst.msk [vmem:[%s3 + $0x98] sm:$0xff] %vm78, %v515
  %580 = vst.msk [vmem:[%s3 + $0xa0] sm:$0xff] %vm78, %v516
  %581 = vst.msk [vmem:[%s3 + $0xa8] sm:$0xff] %vm78, %v517
  %582 = vst.msk [vmem:[%s3 + $0xb0] sm:$0xff] %vm78, %v518
  %583 = vst.msk [vmem:[%s3 + $0xb8] sm:$0xff] %vm78, %v519
  %584 = vst.msk [vmem:[%s3 + $0xc0] sm:$0xff] %vm78, %v520
  %585 = vst.msk [vmem:[%s3 + $0xc8] sm:$0xff] %vm78, %v521
  %586 = vst.msk [vmem:[%s3 + $0xd0] sm:$0xff] %vm78, %v522
  %587 = vst.msk [vmem:[%s3 + $0xd8] sm:$0xff] %vm78, %v523
  %588 = vst.msk [vmem:[%s3 + $0xe0] sm:$0xff] %vm78, %v524
  %589 = vst.msk [vmem:[%s3 + $0xe8] sm:$0xff] %vm78, %v525
  %590 = vst.msk [vmem:[%s3 + $0xf0] sm:$0xff] %vm78, %v526
  %591 = vst.msk [vmem:[%s3 + $0xf8] sm:$0xff] %vm78, %v527
  %592 = vst.msk [vmem:[%s3 + $0x100] sm:$0xff] %vm78, %v528
  %593 = vst.msk [vmem:[%s3 + $0x108] sm:$0xff] %vm78, %v529
  %594 = vst.msk [vmem:[%s3 + $0x110] sm:$0xff] %vm78, %v530
  %595 = vst.msk [vmem:[%s3 + $0x118] sm:$0xff] %vm78, %v531
  %596 = vst.msk [vmem:[%s3 + $0x120] sm:$0xff] %vm78, %v532
  %597 = vst.msk [vmem:[%s3 + $0x128] sm:$0xff] %vm78, %v533
  %598 = vst.msk [vmem:[%s3 + $0x130] sm:$0xff] %vm78, %v534
  %599 = vst.msk [vmem:[%s3 + $0x138] sm:$0xff] %vm78, %v535
  %600 = vst.msk [vmem:[%s3 + $0x140] sm:$0xff] %vm78, %v536
  %601 = vst.msk [vmem:[%s3 + $0x148] sm:$0xff] %vm78, %v537
  %602 = vst.msk [vmem:[%s3 + $0x150] sm:$0xff] %vm78, %v538
  %603 = vst.msk [vmem:[%s3 + $0x158] sm:$0xff] %vm78, %v539
  %604 = vst.msk [vmem:[%s3 + $0x160] sm:$0xff] %vm78, %v540
  %605 = vst.msk [vmem:[%s3 + $0x168] sm:$0xff] %vm78, %v541
  %606 = vst.msk [vmem:[%s3 + $0x170] sm:$0xff] %vm78, %v542
  %607 = vst.msk [vmem:[%s3 + $0x178] sm:$0xff] %vm78, %v543
  %608 = vst.msk [vmem:[%s3 + $0x180] sm:$0xff] %vm78, %v544
  %609 = vst.msk [vmem:[%s3 + $0x188] sm:$0xff] %vm78, %v545
  %610 = vst.msk [vmem:[%s3 + $0x190] sm:$0xff] %vm78, %v546
  %611 = vst.msk [vmem:[%s3 + $0x198] sm:$0xff] %vm78, %v547
  %612 = vst.msk [vmem:[%s3 + $0x1a0] sm:$0xff] %vm78, %v548
  %613 = vst.msk [vmem:[%s3 + $0x1a8] sm:$0xff] %vm78, %v549
  %614 = vst.msk [vmem:[%s3 + $0x1b0] sm:$0xff] %vm78, %v550
  %615 = vst.msk [vmem:[%s3 + $0x1b8] sm:$0xff] %vm78, %v551
  %616 = vst.msk [vmem:[%s3 + $0x1c0] sm:$0xff] %vm78, %v552
  %617 = vst.msk [vmem:[%s3 + $0x1c8] sm:$0xff] %vm78, %v553
  %618 = vst.msk [vmem:[%s3 + $0x1d0] sm:$0xff] %vm78, %v554
  %619 = vst.msk [vmem:[%s3 + $0x1d8] sm:$0xff] %vm78, %v555
  %620 = vst.msk [vmem:[%s3 + $0x1e0] sm:$0xff] %vm78, %v556
  %621 = vst.msk [vmem:[%s3 + $0x1e8] sm:$0xff] %vm78, %v557
  %622 = vst.msk [vmem:[%s3 + $0x1f0] sm:$0xff] %vm78, %v558
  %623 = vst.msk [vmem:[%s3 + $0x1f8] sm:$0xff] %vm78, %v559
  // Predicated region
  $region14: #{_lambda_.51} parent=0 // pred_check
    _
  $region15: #{_lambda_.51} parent=0 // pred_check_branch
    %625 = sbr.rel (0) target = $region17
  $region16: #{_lambda_.51} parent=0 // pred_region
    _
  $region17: #{_lambda_.51} parent=0 // pred_fallthru
    _
  // Predicated region
  $region18: #{_lambda_.51} parent=0 // pred_check
    _
  $region19: #{_lambda_.51} parent=0 // pred_check_branch
    %627 = sbr.rel (0) target = $region21
  $region20: #{_lambda_.51} parent=0 // pred_region
    _
  $region21: #{_lambda_.51} parent=0 // pred_fallthru
    _

// kernel: _lambda_.52
$region0: #{_lambda_.52}
  #allocation0 [shape = 'u32[]', space=smem, size = 0x4, offset = 0x4, fixed_abs, tag = 'smem constant byte address 0x4 - core index']
  #allocation1 [shape = 'u32[144,128]{1,0:T(1,128)}', space=vmem, size = 0x12000, scoped, tag = 'internal scratch']
  #allocation2 [shape = 'f32[256,128]{1,0:T(8,128)}', space=vmem, size = 0x20000, scoped, tag = 'scratch operand']
  %s0 = inlined_call_operand.vmem [shape: bf16[512,128], index: 0, kind: input, shape index: {}]
  %s1 = inlined_call_operand.vmem [shape: bf16[128,128], index: 1, kind: input, shape index: {}]
  %s2 = inlined_call_operand.vmem [shape: f32[1,128], index: 2, kind: input, shape index: {}]
  %s3 = inlined_call_operand.vmem [shape: f32[512,128], index: 3, kind: output, shape index: {}]
  %s4 = sld [smem:[#allocation0]]
  $region53: #{_lambda_.52} parent=0
    _
  %s6 = ssub.s32 1, %s4
  %s7 = scalar_select 0, %s6, %s4
  loop: start=0, step=1, limit=4
  $region2: #{_lambda_.52} parent=0 // loop_pre_header
    _
  $region3: #{_lambda_.52} parent=0 // loop_header
    %s9 = sphi 0, %s13
    %p10 = scmp.ge.s32.totalorder %s9, 4
    %s16 = sphi 0, %s35
    %s17 = sphi 0, %s31
    %s18 = sphi 0, %s27
    %s19 = sphi 0, %s16
    %s20 = sphi 0, %s17
    %s21 = sphi 0, %s18
    %s22 = sphi 0, %s19
    %s23 = sphi 0, %s20
    %s24 = sphi 0, %s21
    %s40 = sphi 0, %s42
    %s43 = sphi 0, %s40
    %s44 = sphi 0, %s43
    %s60 = sphi 0, %s44
    %s68 = sphi 0, %s70
    %s71 = sphi 0, %s68
    %s72 = sphi 0, %s71
    %s88 = sphi 0, %s72
    %s94 = sphi 0, %s96
    %s97 = sphi 0, %s94
    %s98 = sphi 0, %s97
    %s114 = sphi 0, %s98
    %s122 = sphi 0, %s124
    %s125 = sphi 0, %s122
    %s126 = sphi 0, %s125
    %s142 = sphi 0, %s126
  $region4: #{_lambda_.52} parent=0 // loop_header_branch
    %12 = sbr.rel (%p10) target = $region8
  $region5: #{_lambda_.52} parent=0 // loop_body
    %s14 = ssub.s32 %s9, 1
    %s15 = ssub.s32 %s9, 2
    %s25 = sadd.s32 1, %s18
    %p26 = scmp.ge.s32.totalorder %s25, 1
    %s27 = scalar_select %p26, 0, %s25
    %s28 = sadd.s32 1, %s17
    %s29 = scalar_select %p26, %s28, %s17
    %p30 = scmp.ge.s32.totalorder %s29, 1
    %s31 = scalar_select %p30, 0, %s29
    %s32 = sadd.s32 1, %s16
    %s33 = scalar_select %p30, %s32, %s16
    %p34 = scmp.ge.s32.totalorder %s33, 2
    %s35 = scalar_select %p34, 0, %s33
    %s36 = ssub.s32 %s16, %s35
    %s37 = ssub.s32 %s18, %s27
    %s38 = sor.u32 %s36, %s37
    %p39 = scmp.eq.s32.totalorder %s38, 0
    %s41 = sadd.s32 %s40, 1
    %s42 = scalar_select %p39, %s40, %s41
    %p45 = pneg %p39
    %p46 = scmp.eq.s32.totalorder %s9, 1
    %p47 = por %p45, %p46
    %p48 = scmp.ne.s32.totalorder %s40, %s43
    %p49 = scmp.eq.s32.totalorder %s9, 0
    %p50 = por %p48, %p49
    %p51 = scmp.ne.s32.totalorder %s40, %s43
    %p52 = scmp.eq.s32.totalorder %s14, 1
    %p53 = por %p51, %p52
    %p54 = scmp.ne.s32.totalorder %s43, %s44
    %p55 = scmp.eq.s32.totalorder %s14, 0
    %p56 = por %p54, %p55
    %p57 = scmp.ne.s32.totalorder %s43, %s44
    %p58 = scmp.eq.s32.totalorder %s15, 1
    %p59 = por %p57, %p58
    %p61 = scmp.ne.s32.totalorder %s44, %s60
    %p62 = scmp.eq.s32.totalorder %s15, 0
    %p63 = por %p61, %p62
    %s64 = ssub.s32 %s18, %s27
    %s65 = ssub.s32 %s17, %s31
    %s66 = sor.u32 %s64, %s65
    %p67 = scmp.eq.s32.totalorder %s66, 0
    %s69 = sadd.s32 %s68, 1
    %s70 = scalar_select %p67, %s68, %s69
    %p73 = pneg %p67
    %p74 = scmp.eq.s32.totalorder %s9, 1
    %p75 = por %p73, %p74
    %p76 = scmp.ne.s32.totalorder %s68, %s71
    %p77 = scmp.eq.s32.totalorder %s9, 0
    %p78 = por %p76, %p77
    %p79 = scmp.ne.s32.totalorder %s68, %s71
    %p80 = scmp.eq.s32.totalorder %s14, 1
    %p81 = por %p79, %p80
    %p82 = scmp.ne.s32.totalorder %s71, %s72
    %p83 = scmp.eq.s32.totalorder %s14, 0
    %p84 = por %p82, %p83
    %p85 = scmp.ne.s32.totalorder %s71, %s72
    %p86 = scmp.eq.s32.totalorder %s15, 1
    %p87 = por %p85, %p86
    %p89 = scmp.ne.s32.totalorder %s72, %s88
    %p90 = scmp.eq.s32.totalorder %s15, 0
    %p91 = por %p89, %p90
    %s92 = ssub.s32 %s17, %s31
    %p93 = scmp.eq.s32.totalorder %s92, 0
    %s95 = sadd.s32 %s94, 1
    %s96 = scalar_select %p93, %s94, %s95
    %p99 = pneg %p93
    %p100 = scmp.eq.s32.totalorder %s9, 1
    %p101 = por %p99, %p100
    %p102 = scmp.ne.s32.totalorder %s94, %s97
    %p103 = scmp.eq.s32.totalorder %s9, 0
    %p104 = por %p102, %p103
    %p105 = scmp.ne.s32.totalorder %s94, %s97
    %p106 = scmp.eq.s32.totalorder %s14, 1
    %p107 = por %p105, %p106
    %p108 = scmp.ne.s32.totalorder %s97, %s98
    %p109 = scmp.eq.s32.totalorder %s14, 0
    %p110 = por %p108, %p109
    %p111 = scmp.ne.s32.totalorder %s97, %s98
    %p112 = scmp.eq.s32.totalorder %s15, 1
    %p113 = por %p111, %p112
    %p115 = scmp.ne.s32.totalorder %s98, %s114
    %p116 = scmp.eq.s32.totalorder %s15, 0
    %p117 = por %p115, %p116
    %s118 = ssub.s32 %s16, %s35
    %s119 = ssub.s32 %s17, %s31
    %s120 = sor.u32 %s118, %s119
    %p121 = scmp.eq.s32.totalorder %s120, 0
    %s123 = sadd.s32 %s122, 1
    %s124 = scalar_select %p121, %s122, %s123
    %p127 = pneg %p121
    %p128 = scmp.eq.s32.totalorder %s9, 1
    %p129 = por %p127, %p128
    %p130 = scmp.ne.s32.totalorder %s122, %s125
    %p131 = scmp.eq.s32.totalorder %s9, 0
    %p132 = por %p130, %p131
    %p133 = scmp.ne.s32.totalorder %s122, %s125
    %p134 = scmp.eq.s32.totalorder %s14, 1
    %p135 = por %p133, %p134
    %p136 = scmp.ne.s32.totalorder %s125, %s126
    %p137 = scmp.eq.s32.totalorder %s14, 0
    %p138 = por %p136, %p137
    %p139 = scmp.ne.s32.totalorder %s125, %s126
    %p140 = scmp.eq.s32.totalorder %s15, 1
    %p141 = por %p139, %p140
    %p143 = scmp.ne.s32.totalorder %s126, %s142
    %p144 = scmp.eq.s32.totalorder %s15, 0
    %p145 = por %p143, %p144
    %p146 = scmp.le.s32.totalorder 1, %s9
    %p147 = scmp.lt.s32.totalorder %s9, 3
    %p148 = pnand %p146, %p147
    %p149 = pneg %p148
    // Predicated region
    $region9: #{_lambda_.52} parent=5 // pred_check
      _
    $region10: #{_lambda_.52} parent=5 // pred_check_branch
      %151 = sbr.rel (%p148) target = $region12
    $region11: #{_lambda_.52} parent=5 // pred_region
      %s152 = ssub.s32 %s9, 1
      // Predicated region
      $region13: #{_lambda_.52} parent=11 // pred_check
        %p153 = pneg %p84
      $region14: #{_lambda_.52} parent=11 // pred_check_branch
        %155 = sbr.rel (%p153) target = $region16
      $region15: #{_lambda_.52} parent=11 // pred_region
        %s156 = smul.u32 16, %s21
        %p157 = scmp.lt.s32.totalorder %s156, 15
        %s158 = scalar_select %p157, %s156, 15
        %p159 = scmp.lt.s32.totalorder %s20, 0
        %s160 = scalar_select %p159, %s20, 0
        %s161 = sadd.s32 %s160, %s158
        %s162 = smul.addr %s161, 4
        %s163 = scalar_lea.vmem %s1, %s162
        %s164 = smul.u32 16, %s21
      $region16: #{_lambda_.52} parent=11 // pred_fallthru
        _
      // Predicated region
      $region17: #{_lambda_.52} parent=11 // pred_check
        %p165 = pneg %p110
      $region18: #{_lambda_.52} parent=11 // pred_check_branch
        %167 = sbr.rel (%p165) target = $region20
      $region19: #{_lambda_.52} parent=11 // pred_region
        %p168 = scmp.lt.s32.totalorder %s20, 0
        %s169 = scalar_select %p168, %s20, 0
        %s170 = scalar_lea.vmem %s2, %s169
      $region20: #{_lambda_.52} parent=11 // pred_fallthru
        _
    $region12: #{_lambda_.52} parent=5 // pred_fallthru
      _
    %p171 = scmp.lt.s32.totalorder %s9, 2
    // Predicated region
    $region21: #{_lambda_.52} parent=5 // pred_check
      %p172 = pneg %p171
    $region22: #{_lambda_.52} parent=5 // pred_check_branch
      %174 = sbr.rel (%p172) target = $region24
    $region23: #{_lambda_.52} parent=5 // pred_region
      // Predicated region
      $region25: #{_lambda_.52} parent=23 // pred_check
        %p175 = pneg %p50
      $region26: #{_lambda_.52} parent=23 // pred_check_branch
        %177 = sbr.rel (%p175) target = $region28
      $region27: #{_lambda_.52} parent=23 // pred_region
        %s178 = smul.u32 32, %s16
        %p179 = scmp.lt.s32.totalorder %s178, 63
        %s180 = scalar_select %p179, %s178, 63
        %p181 = scmp.lt.s32.totalorder %s18, 0
        %s182 = scalar_select %p181, %s18, 0
        %s183 = sadd.s32 %s182, %s180
        %s184 = smul.addr %s183, 4
        %s185 = scalar_lea.vmem %s0, %s184
        %s186 = smul.u32 32, %s16
      $region28: #{_lambda_.52} parent=23 // pred_fallthru
        _
    $region24: #{_lambda_.52} parent=5 // pred_fallthru
      _
    %p187 = scmp.le.s32.totalorder 1, %s9
    %p188 = scmp.lt.s32.totalorder %s9, 3
    %p189 = pnand %p187, %p188
    %p190 = pneg %p189
    // Predicated region
    $region29: #{_lambda_.52} parent=5 // pred_check
      _
    $region30: #{_lambda_.52} parent=5 // pred_check_branch
      %192 = sbr.rel (%p189) target = $region32
    $region31: #{_lambda_.52} parent=5 // pred_region
      %s193 = ssub.s32 %s9, 1
      %s194 = smul.u32 32, %s19
      %p195 = scmp.lt.s32.totalorder %s194, 63
      %s196 = scalar_select %p195, %s194, 63
      %p197 = scmp.lt.s32.totalorder %s21, 0
      %s198 = scalar_select %p197, %s21, 0
      %s199 = sadd.s32 %s198, %s196
      %s200 = smul.addr %s199, 4
      %s201 = scalar_lea.vmem %s0, %s200
      %p202 = pneg %p56
      %p203 = pneg %p53
      %s204 = smul.u32 16, %s21
      %p205 = scmp.lt.s32.totalorder %s204, 15
      %s206 = scalar_select %p205, %s204, 15
      %p207 = scmp.lt.s32.totalorder %s20, 0
      %s208 = scalar_select %p207, %s20, 0
      %s209 = sadd.s32 %s208, %s206
      %s210 = smul.addr %s209, 4
      %s211 = scalar_lea.vmem %s1, %s210
      %p212 = pneg %p84
      %p213 = pneg %p81
      %p214 = scmp.lt.s32.totalorder %s20, 0
      %s215 = scalar_select %p214, %s20, 0
      %s216 = scalar_lea.vmem %s2, %s215
      %p217 = pneg %p110
      %p218 = pneg %p107
      %p219 = pneg %p138
      %p220 = pneg %p135
      %s221 = smul.u32 32, %s19
      %p222 = scmp.lt.s32.totalorder %s221, 63
      %s223 = scalar_select %p222, %s221, 63
      %p224 = scmp.lt.s32.totalorder %s20, 0
      %s225 = scalar_select %p224, %s20, 0
      %s226 = sadd.s32 %s225, %s223
      %s227 = smul.addr %s226, 8
      %s228 = scalar_lea.vmem %s3, %s227
      %s229 = smul.u32 32, %s19
      %p230 = scmp.lt.s32.totalorder %s229, 63
      %s231 = scalar_select %p230, %s229, 63
      %p232 = scmp.lt.s32.totalorder %s21, 0
      %s233 = scalar_select %p232, %s21, 0
      %s234 = sadd.s32 %s233, %s231
      %s235 = smul.addr %s234, 4
      %s236 = scalar_lea.vmem %s0, %s235
      %s237 = smul.u32 32, %s19
      %s238 = smul.u32 16, %s21
      %p239 = scmp.lt.s32.totalorder %s238, 15
      %s240 = scalar_select %p239, %s238, 15
      %p241 = scmp.lt.s32.totalorder %s20, 0
      %s242 = scalar_select %p241, %s20, 0
      %s243 = sadd.s32 %s242, %s240
      %s244 = smul.addr %s243, 4
      %s245 = scalar_lea.vmem %s1, %s244
      %s246 = smul.u32 16, %s21
      %p247 = scmp.lt.s32.totalorder %s20, 0
      %s248 = scalar_select %p247, %s20, 0
      %s249 = scalar_lea.vmem %s2, %s248
      %s250 = smul.u32 32, %s19
      %p251 = scmp.lt.s32.totalorder %s250, 63
      %s252 = scalar_select %p251, %s250, 63
      %p253 = scmp.lt.s32.totalorder %s20, 0
      %s254 = scalar_select %p253, %s20, 0
      %s255 = sadd.s32 %s254, %s252
      %s256 = smul.addr %s255, 8
      %s257 = scalar_lea.vmem %s3, %s256
      %s258 = smul.u32 32, %s19
      %p260 = scmp.eq.s32.totalorder %s21, 0
      // Predicated region
      $region33: #{_lambda_.52} parent=31 // pred_check
        %p261 = pneg %p260
      $region34: #{_lambda_.52} parent=31 // pred_check_branch
        %263 = sbr.rel (%p261) target = $region36
      $region35: #{_lambda_.52} parent=31 // pred_region
        %264 = vst [vmem:[#allocation2] sm:$0xff] 0.0
        %265 = vst [vmem:[#allocation2 + $0x8] sm:$0xff] 0.0
        %266 = vst [vmem:[#allocation2 + $0x10] sm:$0xff] 0.0
        %267 = vst [vmem:[#allocation2 + $0x18] sm:$0xff] 0.0
        %268 = vst [vmem:[#allocation2 + $0x20] sm:$0xff] 0.0
        %269 = vst [vmem:[#allocation2 + $0x28] sm:$0xff] 0.0
        %270 = vst [vmem:[#allocation2 + $0x30] sm:$0xff] 0.0
        %271 = vst [vmem:[#allocation2 + $0x38] sm:$0xff] 0.0
        %272 = vst [vmem:[#allocation2 + $0x40] sm:$0xff] 0.0
        %273 = vst [vmem:[#allocation2 + $0x48] sm:$0xff] 0.0
        %274 = vst [vmem:[#allocation2 + $0x50] sm:$0xff] 0.0
        %275 = vst [vmem:[#allocation2 + $0x58] sm:$0xff] 0.0
        %276 = vst [vmem:[#allocation2 + $0x60] sm:$0xff] 0.0
        %277 = vst [vmem:[#allocation2 + $0x68] sm:$0xff] 0.0
        %278 = vst [vmem:[#allocation2 + $0x70] sm:$0xff] 0.0
        %279 = vst [vmem:[#allocation2 + $0x78] sm:$0xff] 0.0
        %280 = vst [vmem:[#allocation2 + $0x80] sm:$0xff] 0.0
        %281 = vst [vmem:[#allocation2 + $0x88] sm:$0xff] 0.0
        %282 = vst [vmem:[#allocation2 + $0x90] sm:$0xff] 0.0
        %283 = vst [vmem:[#allocation2 + $0x98] sm:$0xff] 0.0
        %284 = vst [vmem:[#allocation2 + $0xa0] sm:$0xff] 0.0
        %285 = vst [vmem:[#allocation2 + $0xa8] sm:$0xff] 0.0
        %286 = vst [vmem:[#allocation2 + $0xb0] sm:$0xff] 0.0
        %287 = vst [vmem:[#allocation2 + $0xb8] sm:$0xff] 0.0
        %288 = vst [vmem:[#allocation2 + $0xc0] sm:$0xff] 0.0
        %289 = vst [vmem:[#allocation2 + $0xc8] sm:$0xff] 0.0
        %290 = vst [vmem:[#allocation2 + $0xd0] sm:$0xff] 0.0
        %291 = vst [vmem:[#allocation2 + $0xd8] sm:$0xff] 0.0
        %292 = vst [vmem:[#allocation2 + $0xe0] sm:$0xff] 0.0
        %293 = vst [vmem:[#allocation2 + $0xe8] sm:$0xff] 0.0
        %294 = vst [vmem:[#allocation2 + $0xf0] sm:$0xff] 0.0
        %295 = vst [vmem:[#allocation2 + $0xf8] sm:$0xff] 0.0
      $region36: #{_lambda_.52} parent=31 // pred_fallthru
        _
      %v296 = vld [vmem:[%s236] sm:$0xf]
      %v297 = vld [vmem:[%s236 + $0x4] sm:$0xf]
      %v298 = vld [vmem:[%s236 + $0x8] sm:$0xf]
      %v299 = vld [vmem:[%s236 + $0xc] sm:$0xf]
      %v300 = vld [vmem:[%s236 + $0x10] sm:$0xf]
      %v301 = vld [vmem:[%s236 + $0x14] sm:$0xf]
      %v302 = vld [vmem:[%s236 + $0x18] sm:$0xf]
      %v303 = vld [vmem:[%s236 + $0x1c] sm:$0xf]
      %v304 = vld [vmem:[%s236 + $0x20] sm:$0xf]
      %v305 = vld [vmem:[%s236 + $0x24] sm:$0xf]
      %v306 = vld [vmem:[%s236 + $0x28] sm:$0xf]
      %v307 = vld [vmem:[%s236 + $0x2c] sm:$0xf]
      %v308 = vld [vmem:[%s236 + $0x30] sm:$0xf]
      %v309 = vld [vmem:[%s236 + $0x34] sm:$0xf]
      %v310 = vld [vmem:[%s236 + $0x38] sm:$0xf]
      %v311 = vld [vmem:[%s236 + $0x3c] sm:$0xf]
      %v312 = vld [vmem:[%s236 + $0x40] sm:$0xf]
      %v313 = vld [vmem:[%s236 + $0x44] sm:$0xf]
      %v314 = vld [vmem:[%s236 + $0x48] sm:$0xf]
      %v315 = vld [vmem:[%s236 + $0x4c] sm:$0xf]
      %v316 = vld [vmem:[%s236 + $0x50] sm:$0xf]
      %v317 = vld [vmem:[%s236 + $0x54] sm:$0xf]
      %v318 = vld [vmem:[%s236 + $0x58] sm:$0xf]
      %v319 = vld [vmem:[%s236 + $0x5c] sm:$0xf]
      %v320 = vld [vmem:[%s236 + $0x60] sm:$0xf]
      %v321 = vld [vmem:[%s236 + $0x64] sm:$0xf]
      %v322 = vld [vmem:[%s236 + $0x68] sm:$0xf]
      %v323 = vld [vmem:[%s236 + $0x6c] sm:$0xf]
      %v324 = vld [vmem:[%s236 + $0x70] sm:$0xf]
      %v325 = vld [vmem:[%s236 + $0x74] sm:$0xf]
      %v326 = vld [vmem:[%s236 + $0x78] sm:$0xf]
      %v327 = vld [vmem:[%s236 + $0x7c] sm:$0xf]
      %v328 = vmax.bf16 %v296, 0
      %v329 = vmax.bf16 %v297, 0
      %v330 = vmax.bf16 %v298, 0
      %v331 = vmax.bf16 %v299, 0
      %v332 = vmax.bf16 %v300, 0
      %v333 = vmax.bf16 %v301, 0
      %v334 = vmax.bf16 %v302, 0
      %v335 = vmax.bf16 %v303, 0
      %v336 = vmax.bf16 %v304, 0
      %v337 = vmax.bf16 %v305, 0
      %v338 = vmax.bf16 %v306, 0
      %v339 = vmax.bf16 %v307, 0
      %v340 = vmax.bf16 %v308, 0
      %v341 = vmax.bf16 %v309, 0
      %v342 = vmax.bf16 %v310, 0
      %v343 = vmax.bf16 %v311, 0
      %v344 = vmax.bf16 %v312, 0
      %v345 = vmax.bf16 %v313, 0
      %v346 = vmax.bf16 %v314, 0
      %v347 = vmax.bf16 %v315, 0
      %v348 = vmax.bf16 %v316, 0
      %v349 = vmax.bf16 %v317, 0
      %v350 = vmax.bf16 %v318, 0
      %v351 = vmax.bf16 %v319, 0
      %v352 = vmax.bf16 %v320, 0
      %v353 = vmax.bf16 %v321, 0
      %v354 = vmax.bf16 %v322, 0
      %v355 = vmax.bf16 %v323, 0
      %v356 = vmax.bf16 %v324, 0
      %v357 = vmax.bf16 %v325, 0
      %v358 = vmax.bf16 %v326, 0
      %v359 = vmax.bf16 %v327, 0
      %v360 = vld [vmem:[#allocation2] sm:$0xff]
      %v361 = vld [vmem:[#allocation2 + $0x8] sm:$0xff]
      %v362 = vld [vmem:[#allocation2 + $0x10] sm:$0xff]
      %v363 = vld [vmem:[#allocation2 + $0x18] sm:$0xff]
      %v364 = vld [vmem:[#allocation2 + $0x20] sm:$0xff]
      %v365 = vld [vmem:[#allocation2 + $0x28] sm:$0xff]
      %v366 = vld [vmem:[#allocation2 + $0x30] sm:$0xff]
      %v367 = vld [vmem:[#allocation2 + $0x38] sm:$0xff]
      %v368 = vld [vmem:[#allocation2 + $0x40] sm:$0xff]
      %v369 = vld [vmem:[#allocation2 + $0x48] sm:$0xff]
      %v370 = vld [vmem:[#allocation2 + $0x50] sm:$0xff]
      %v371 = vld [vmem:[#allocation2 + $0x58] sm:$0xff]
      %v372 = vld [vmem:[#allocation2 + $0x60] sm:$0xff]
      %v373 = vld [vmem:[#allocation2 + $0x68] sm:$0xff]
      %v374 = vld [vmem:[#allocation2 + $0x70] sm:$0xff]
      %v375 = vld [vmem:[#allocation2 + $0x78] sm:$0xff]
      %v376 = vld [vmem:[#allocation2 + $0x80] sm:$0xff]
      %v377 = vld [vmem:[#allocation2 + $0x88] sm:$0xff]
      %v378 = vld [vmem:[#allocation2 + $0x90] sm:$0xff]
      %v379 = vld [vmem:[#allocation2 + $0x98] sm:$0xff]
      %v380 = vld [vmem:[#allocation2 + $0xa0] sm:$0xff]
      %v381 = vld [vmem:[#allocation2 + $0xa8] sm:$0xff]
      %v382 = vld [vmem:[#allocation2 + $0xb0] sm:$0xff]
      %v383 = vld [vmem:[#allocation2 + $0xb8] sm:$0xff]
      %v384 = vld [vmem:[#allocation2 + $0xc0] sm:$0xff]
      %v385 = vld [vmem:[#allocation2 + $0xc8] sm:$0xff]
      %v386 = vld [vmem:[#allocation2 + $0xd0] sm:$0xff]
      %v387 = vld [vmem:[#allocation2 + $0xd8] sm:$0xff]
      %v388 = vld [vmem:[#allocation2 + $0xe0] sm:$0xff]
      %v389 = vld [vmem:[#allocation2 + $0xe8] sm:$0xff]
      %v390 = vld [vmem:[#allocation2 + $0xf0] sm:$0xff]
      %v391 = vld [vmem:[#allocation2 + $0xf8] sm:$0xff]
      %v392 = vld [vmem:[%s245] sm:$0xf]
      %v393 = vld [vmem:[%s245 + $0x4] sm:$0xf]
      %v394 = vld [vmem:[%s245 + $0x8] sm:$0xf]
      %v395 = vld [vmem:[%s245 + $0xc] sm:$0xf]
      %v396 = vld [vmem:[%s245 + $0x10] sm:$0xf]
      %v397 = vld [vmem:[%s245 + $0x14] sm:$0xf]
      %v398 = vld [vmem:[%s245 + $0x18] sm:$0xf]
      %v399 = vld [vmem:[%s245 + $0x1c] sm:$0xf]
      %v400 = vld [vmem:[%s245 + $0x20] sm:$0xf]
      %v401 = vld [vmem:[%s245 + $0x24] sm:$0xf]
      %v402 = vld [vmem:[%s245 + $0x28] sm:$0xf]
      %v403 = vld [vmem:[%s245 + $0x2c] sm:$0xf]
      %v404 = vld [vmem:[%s245 + $0x30] sm:$0xf]
      %v405 = vld [vmem:[%s245 + $0x34] sm:$0xf]
      %v406 = vld [vmem:[%s245 + $0x38] sm:$0xf]
      %v407 = vld [vmem:[%s245 + $0x3c] sm:$0xf]
      %v440 = vunpack.c.l.b16 %v328
      %v441 = vunpack.c.l.b16 %v329
      %v442 = vunpack.c.l.b16 %v330
      %v443 = vunpack.c.l.b16 %v331
      %v444 = vunpack.c.l.b16 %v332
      %v445 = vunpack.c.l.b16 %v333
      %v446 = vunpack.c.l.b16 %v334
      %v447 = vunpack.c.l.b16 %v335
      %v448 = vunpack.c.l.b16 %v336
      %v449 = vunpack.c.l.b16 %v337
      %v450 = vunpack.c.l.b16 %v338
      %v451 = vunpack.c.l.b16 %v339
      %v452 = vunpack.c.l.b16 %v340
      %v453 = vunpack.c.l.b16 %v341
      %v454 = vunpack.c.l.b16 %v342
      %v455 = vunpack.c.l.b16 %v343
      %v456 = vunpack.c.l.b16 %v344
      %v457 = vunpack.c.l.b16 %v345
      %v458 = vunpack.c.l.b16 %v346
      %v459 = vunpack.c.l.b16 %v347
      %v460 = vunpack.c.l.b16 %v348
      %v461 = vunpack.c.l.b16 %v349
      %v462 = vunpack.c.l.b16 %v350
      %v463 = vunpack.c.l.b16 %v351
      %v464 = vunpack.c.l.b16 %v352
      %v465 = vunpack.c.l.b16 %v353
      %v466 = vunpack.c.l.b16 %v354
      %v467 = vunpack.c.l.b16 %v355
      %v468 = vunpack.c.l.b16 %v356
      %v469 = vunpack.c.l.b16 %v357
      %v470 = vunpack.c.l.b16 %v358
      %v471 = vunpack.c.l.b16 %v359
      %v472 = vpack.c.b16 %v441, %v440
      %v473 = vpack.c.b16 %v443, %v442
      %v474 = vpack.c.b16 %v445, %v444
      %v475 = vpack.c.b16 %v447, %v446
      %v476 = vpack.c.b16 %v449, %v448
      %v477 = vpack.c.b16 %v451, %v450
      %v478 = vpack.c.b16 %v453, %v452
      %v479 = vpack.c.b16 %v455, %v454
      %v480 = vpack.c.b16 %v457, %v456
      %v481 = vpack.c.b16 %v459, %v458
      %v482 = vpack.c.b16 %v461, %v460
      %v483 = vpack.c.b16 %v463, %v462
      %v484 = vpack.c.b16 %v465, %v464
      %v485 = vpack.c.b16 %v467, %v466
      %v486 = vpack.c.b16 %v469, %v468
      %v487 = vpack.c.b16 %v471, %v470
      %v520 = vunpack.c.l.b16 %v392
      %v521 = vunpack.c.l.b16 %v393
      %v522 = vunpack.c.l.b16 %v394
      %v523 = vunpack.c.l.b16 %v395
      %v524 = vunpack.c.l.b16 %v396
      %v525 = vunpack.c.l.b16 %v397
      %v526 = vunpack.c.l.b16 %v398
      %v527 = vunpack.c.l.b16 %v399
      %v528 = vunpack.c.l.b16 %v400
      %v529 = vunpack.c.l.b16 %v401
      %v530 = vunpack.c.l.b16 %v402
      %v531 = vunpack.c.l.b16 %v403
      %v532 = vunpack.c.l.b16 %v404
      %v533 = vunpack.c.l.b16 %v405
      %v534 = vunpack.c.l.b16 %v406
      %v535 = vunpack.c.l.b16 %v407
      %v536 = vpack.c.b16 %v521, %v520
      %v537 = vpack.c.b16 %v523, %v522
      %v538 = vpack.c.b16 %v525, %v524
      %v539 = vpack.c.b16 %v527, %v526
      %v540 = vpack.c.b16 %v529, %v528
      %v541 = vpack.c.b16 %v531, %v530
      %v542 = vpack.c.b16 %v533, %v532
      %v543 = vpack.c.b16 %v535, %v534
      %552 = vmatprep.subr.bf16.mxu0 0
      %553 = vmatpush1.bf16.msra.mxu0 %v543
      %554 = vmatprep.subr.bf16.mxu0 0
      %555 = vmatpush1.bf16.msra.mxu0 %v542
      %556 = vmatprep.subr.bf16.mxu0 0
      %557 = vmatpush1.bf16.msra.mxu0 %v541
      %558 = vmatprep.subr.bf16.mxu0 0
      %559 = vmatpush1.bf16.msra.mxu0 %v540
      %560 = vmatprep.subr.bf16.mxu0 0
      %561 = vmatpush1.bf16.msra.mxu0 %v539
      %562 = vmatprep.subr.bf16.mxu0 0
      %563 = vmatpush1.bf16.msra.mxu0 %v538
      %564 = vmatprep.subr.bf16.mxu0 0
      %565 = vmatpush1.bf16.msra.mxu0 %v537
      %566 = vmatprep.subr.bf16.mxu0 0
      %567 = vmatpush1.bf16.msra.mxu0 %v536
      %568 = vmatprep.subr.bf16.mxu0 0
      %569 = vmatpush2.bf16.msra.mxu0 0
      %570 = vmatprep.subr.bf16.mxu0 0
      %571 = vmatpush2.bf16.msra.mxu0 0
      %572 = vmatprep.subr.bf16.mxu0 0
      %573 = vmatpush2.bf16.msra.mxu0 0
      %574 = vmatprep.subr.bf16.mxu0 0
      %575 = vmatpush2.bf16.msra.mxu0 0
      %576 = vmatprep.subr.bf16.mxu0 0
      %577 = vmatpush2.bf16.msra.mxu0 0
      %578 = vmatprep.subr.bf16.mxu0 0
      %579 = vmatpush2.bf16.msra.mxu0 0
      %580 = vmatprep.subr.bf16.mxu0 0
      %581 = vmatpush2.bf16.msra.mxu0 0
      %582 = vmatprep.subr.bf16.mxu0 0
      %583 = vmatpush2.bf16.msra.mxu0 0
      %584 = vmatprep.mubr.bf16.mxu0 0
      %585 = vmatmul.mubr.bf16.gmra.mxu0 %v472
      %v586 = vpop.f32.mrf.mxu0
      %v587 = vadd.f32 0.0, %v586
      %v588 = vpop.f32.mrf.mxu0
      %v589 = vpop.f32.mrf.mxu0
      %v590 = vadd.f32 0.0, %v589
      %v591 = vpop.f32.mrf.mxu0
      %592 = vmatprep.mubr.bf16.mxu0 0
      %593 = vmatmul.mubr.bf16.gmra.mxu0 %v473
      %v594 = vpop.f32.mrf.mxu0
      %v595 = vadd.f32 0.0, %v594
      %v596 = vpop.f32.mrf.mxu0
      %v597 = vpop.f32.mrf.mxu0
      %v598 = vadd.f32 0.0, %v597
      %v599 = vpop.f32.mrf.mxu0
      %600 = vmatprep.mubr.bf16.mxu0 0
      %601 = vmatmul.mubr.bf16.gmra.mxu0 %v474
      %v602 = vpop.f32.mrf.mxu0
      %v603 = vadd.f32 0.0, %v602
      %v604 = vpop.f32.mrf.mxu0
      %v605 = vpop.f32.mrf.mxu0
      %v606 = vadd.f32 0.0, %v605
      %v607 = vpop.f32.mrf.mxu0
      %608 = vmatprep.mubr.bf16.mxu0 0
      %609 = vmatmul.mubr.bf16.gmra.mxu0 %v475
      %v610 = vpop.f32.mrf.mxu0
      %v611 = vadd.f32 0.0, %v610
      %v612 = vpop.f32.mrf.mxu0
      %v613 = vpop.f32.mrf.mxu0
      %v614 = vadd.f32 0.0, %v613
      %v615 = vpop.f32.mrf.mxu0
      %616 = vmatprep.mubr.bf16.mxu0 0
      %617 = vmatmul.mubr.bf16.gmra.mxu0 %v476
      %v618 = vpop.f32.mrf.mxu0
      %v619 = vadd.f32 0.0, %v618
      %v620 = vpop.f32.mrf.mxu0
      %v621 = vpop.f32.mrf.mxu0
      %v622 = vadd.f32 0.0, %v621
      %v623 = vpop.f32.mrf.mxu0
      %624 = vmatprep.mubr.bf16.mxu0 0
      %625 = vmatmul.mubr.bf16.gmra.mxu0 %v477
      %v626 = vpop.f32.mrf.mxu0
      %v627 = vadd.f32 0.0, %v626
      %v628 = vpop.f32.mrf.mxu0
      %v629 = vpop.f32.mrf.mxu0
      %v630 = vadd.f32 0.0, %v629
      %v631 = vpop.f32.mrf.mxu0
      %632 = vmatprep.mubr.bf16.mxu0 0
      %633 = vmatmul.mubr.bf16.gmra.mxu0 %v478
      %v634 = vpop.f32.mrf.mxu0
      %v635 = vadd.f32 0.0, %v634
      %v636 = vpop.f32.mrf.mxu0
      %v637 = vpop.f32.mrf.mxu0
      %v638 = vadd.f32 0.0, %v637
      %v639 = vpop.f32.mrf.mxu0
      %640 = vmatprep.mubr.bf16.mxu0 0
      %641 = vmatmul.mubr.bf16.gmra.mxu0 %v479
      %v642 = vpop.f32.mrf.mxu0
      %v643 = vadd.f32 0.0, %v642
      %v644 = vpop.f32.mrf.mxu0
      %v645 = vpop.f32.mrf.mxu0
      %v646 = vadd.f32 0.0, %v645
      %v647 = vpop.f32.mrf.mxu0
      %648 = vmatprep.mubr.bf16.mxu0 0
      %649 = vmatmul.mubr.bf16.gmra.mxu0 %v480
      %v650 = vpop.f32.mrf.mxu0
      %v651 = vadd.f32 0.0, %v650
      %v652 = vpop.f32.mrf.mxu0
      %v653 = vpop.f32.mrf.mxu0
      %v654 = vadd.f32 0.0, %v653
      %v655 = vpop.f32.mrf.mxu0
      %656 = vmatprep.mubr.bf16.mxu0 0
      %657 = vmatmul.mubr.bf16.gmra.mxu0 %v481
      %v658 = vpop.f32.mrf.mxu0
      %v659 = vadd.f32 0.0, %v658
      %v660 = vpop.f32.mrf.mxu0
      %v661 = vpop.f32.mrf.mxu0
      %v662 = vadd.f32 0.0, %v661
      %v663 = vpop.f32.mrf.mxu0
      %664 = vmatprep.mubr.bf16.mxu0 0
      %665 = vmatmul.mubr.bf16.gmra.mxu0 %v482
      %v666 = vpop.f32.mrf.mxu0
      %v667 = vadd.f32 0.0, %v666
      %v668 = vpop.f32.mrf.mxu0
      %v669 = vpop.f32.mrf.mxu0
      %v670 = vadd.f32 0.0, %v669
      %v671 = vpop.f32.mrf.mxu0
      %672 = vmatprep.mubr.bf16.mxu0 0
      %673 = vmatmul.mubr.bf16.gmra.mxu0 %v483
      %v674 = vpop.f32.mrf.mxu0
      %v675 = vadd.f32 0.0, %v674
      %v676 = vpop.f32.mrf.mxu0
      %v677 = vpop.f32.mrf.mxu0
      %v678 = vadd.f32 0.0, %v677
      %v679 = vpop.f32.mrf.mxu0
      %680 = vmatprep.mubr.bf16.mxu0 0
      %681 = vmatmul.mubr.bf16.gmra.mxu0 %v484
      %v682 = vpop.f32.mrf.mxu0
      %v683 = vadd.f32 0.0, %v682
      %v684 = vpop.f32.mrf.mxu0
      %v685 = vpop.f32.mrf.mxu0
      %v686 = vadd.f32 0.0, %v685
      %v687 = vpop.f32.mrf.mxu0
      %688 = vmatprep.mubr.bf16.mxu0 0
      %689 = vmatmul.mubr.bf16.gmra.mxu0 %v485
      %v690 = vpop.f32.mrf.mxu0
      %v691 = vadd.f32 0.0, %v690
      %v692 = vpop.f32.mrf.mxu0
      %v693 = vpop.f32.mrf.mxu0
      %v694 = vadd.f32 0.0, %v693
      %v695 = vpop.f32.mrf.mxu0
      %696 = vmatprep.mubr.bf16.mxu0 0
      %697 = vmatmul.mubr.bf16.gmra.mxu0 %v486
      %v698 = vpop.f32.mrf.mxu0
      %v699 = vadd.f32 0.0, %v698
      %v700 = vpop.f32.mrf.mxu0
      %v701 = vpop.f32.mrf.mxu0
      %v702 = vadd.f32 0.0, %v701
      %v703 = vpop.f32.mrf.mxu0
      %704 = vmatprep.mubr.bf16.mxu0 0
      %705 = vmatmul.mubr.bf16.gmra.mxu0 %v487
      %v706 = vpop.f32.mrf.mxu0
      %v707 = vadd.f32 0.0, %v706
      %v708 = vpop.f32.mrf.mxu0
      %v709 = vpop.f32.mrf.mxu0
      %v710 = vadd.f32 0.0, %v709
      %v711 = vpop.f32.mrf.mxu0
      %712 = vdwg.mxu0
      %v713 = vadd.f32 %v360, %v587
      %v714 = vadd.f32 %v361, %v590
      %v715 = vadd.f32 %v362, %v595
      %v716 = vadd.f32 %v363, %v598
      %v717 = vadd.f32 %v364, %v603
      %v718 = vadd.f32 %v365, %v606
      %v719 = vadd.f32 %v366, %v611
      %v720 = vadd.f32 %v367, %v614
      %v721 = vadd.f32 %v368, %v619
      %v722 = vadd.f32 %v369, %v622
      %v723 = vadd.f32 %v370, %v627
      %v724 = vadd.f32 %v371, %v630
      %v725 = vadd.f32 %v372, %v635
      %v726 = vadd.f32 %v373, %v638
      %v727 = vadd.f32 %v374, %v643
      %v728 = vadd.f32 %v375, %v646
      %v729 = vadd.f32 %v376, %v651
      %v730 = vadd.f32 %v377, %v654
      %v731 = vadd.f32 %v378, %v659
      %v732 = vadd.f32 %v379, %v662
      %v733 = vadd.f32 %v380, %v667
      %v734 = vadd.f32 %v381, %v670
      %v735 = vadd.f32 %v382, %v675
      %v736 = vadd.f32 %v383, %v678
      %v737 = vadd.f32 %v384, %v683
      %v738 = vadd.f32 %v385, %v686
      %v739 = vadd.f32 %v386, %v691
      %v740 = vadd.f32 %v387, %v694
      %v741 = vadd.f32 %v388, %v699
      %v742 = vadd.f32 %v389, %v702
      %v743 = vadd.f32 %v390, %v707
      %v744 = vadd.f32 %v391, %v710
      %745 = vst [vmem:[#allocation2] sm:$0xff] %v713
      %746 = vst [vmem:[#allocation2 + $0x8] sm:$0xff] %v714
      %747 = vst [vmem:[#allocation2 + $0x10] sm:$0xff] %v715
      %748 = vst [vmem:[#allocation2 + $0x18] sm:$0xff] %v716
      %749 = vst [vmem:[#allocation2 + $0x20] sm:$0xff] %v717
      %750 = vst [vmem:[#allocation2 + $0x28] sm:$0xff] %v718
      %751 = vst [vmem:[#allocation2 + $0x30] sm:$0xff] %v719
      %752 = vst [vmem:[#allocation2 + $0x38] sm:$0xff] %v720
      %753 = vst [vmem:[#allocation2 + $0x40] sm:$0xff] %v721
      %754 = vst [vmem:[#allocation2 + $0x48] sm:$0xff] %v722
      %755 = vst [vmem:[#allocation2 + $0x50] sm:$0xff] %v723
      %756 = vst [vmem:[#allocation2 + $0x58] sm:$0xff] %v724
      %757 = vst [vmem:[#allocation2 + $0x60] sm:$0xff] %v725
      %758 = vst [vmem:[#allocation2 + $0x68] sm:$0xff] %v726
      %759 = vst [vmem:[#allocation2 + $0x70] sm:$0xff] %v727
      %760 = vst [vmem:[#allocation2 + $0x78] sm:$0xff] %v728
      %761 = vst [vmem:[#allocation2 + $0x80] sm:$0xff] %v729
      %762 = vst [vmem:[#allocation2 + $0x88] sm:$0xff] %v730
      %763 = vst [vmem:[#allocation2 + $0x90] sm:$0xff] %v731
      %764 = vst [vmem:[#allocation2 + $0x98] sm:$0xff] %v732
      %765 = vst [vmem:[#allocation2 + $0xa0] sm:$0xff] %v733
      %766 = vst [vmem:[#allocation2 + $0xa8] sm:$0xff] %v734
      %767 = vst [vmem:[#allocation2 + $0xb0] sm:$0xff] %v735
      %768 = vst [vmem:[#allocation2 + $0xb8] sm:$0xff] %v736
      %769 = vst [vmem:[#allocation2 + $0xc0] sm:$0xff] %v737
      %770 = vst [vmem:[#allocation2 + $0xc8] sm:$0xff] %v738
      %771 = vst [vmem:[#allocation2 + $0xd0] sm:$0xff] %v739
      %772 = vst [vmem:[#allocation2 + $0xd8] sm:$0xff] %v740
      %773 = vst [vmem:[#allocation2 + $0xe0] sm:$0xff] %v741
      %774 = vst [vmem:[#allocation2 + $0xe8] sm:$0xff] %v742
      %775 = vst [vmem:[#allocation2 + $0xf0] sm:$0xff] %v743
      %776 = vst [vmem:[#allocation2 + $0xf8] sm:$0xff] %v744
      // Predicated region
      $region37: #{_lambda_.52} parent=31 // pred_check
        %p777 = pneg %p260
      $region38: #{_lambda_.52} parent=31 // pred_check_branch
        %779 = sbr.rel (%p777) target = $region40
      $region39: #{_lambda_.52} parent=31 // pred_region
        %v780 = vld [vmem:[#allocation2] sm:$0xff]
        %v781 = vld [vmem:[#allocation2 + $0x8] sm:$0xff]
        %v782 = vld [vmem:[#allocation2 + $0x10] sm:$0xff]
        %v783 = vld [vmem:[#allocation2 + $0x18] sm:$0xff]
        %v784 = vld [vmem:[#allocation2 + $0x20] sm:$0xff]
        %v785 = vld [vmem:[#allocation2 + $0x28] sm:$0xff]
        %v786 = vld [vmem:[#allocation2 + $0x30] sm:$0xff]
        %v787 = vld [vmem:[#allocation2 + $0x38] sm:$0xff]
        %v788 = vld [vmem:[#allocation2 + $0x40] sm:$0xff]
        %v789 = vld [vmem:[#allocation2 + $0x48] sm:$0xff]
        %v790 = vld [vmem:[#allocation2 + $0x50] sm:$0xff]
        %v791 = vld [vmem:[#allocation2 + $0x58] sm:$0xff]
        %v792 = vld [vmem:[#allocation2 + $0x60] sm:$0xff]
        %v793 = vld [vmem:[#allocation2 + $0x68] sm:$0xff]
        %v794 = vld [vmem:[#allocation2 + $0x70] sm:$0xff]
        %v795 = vld [vmem:[#allocation2 + $0x78] sm:$0xff]
        %v796 = vld [vmem:[#allocation2 + $0x80] sm:$0xff]
        %v797 = vld [vmem:[#allocation2 + $0x88] sm:$0xff]
        %v798 = vld [vmem:[#allocation2 + $0x90] sm:$0xff]
        %v799 = vld [vmem:[#allocation2 + $0x98] sm:$0xff]
        %v800 = vld [vmem:[#allocation2 + $0xa0] sm:$0xff]
        %v801 = vld [vmem:[#allocation2 + $0xa8] sm:$0xff]
        %v802 = vld [vmem:[#allocation2 + $0xb0] sm:$0xff]
        %v803 = vld [vmem:[#allocation2 + $0xb8] sm:$0xff]
        %v804 = vld [vmem:[#allocation2 + $0xc0] sm:$0xff]
        %v805 = vld [vmem:[#allocation2 + $0xc8] sm:$0xff]
        %v806 = vld [vmem:[#allocation2 + $0xd0] sm:$0xff]
        %v807 = vld [vmem:[#allocation2 + $0xd8] sm:$0xff]
        %v808 = vld [vmem:[#allocation2 + $0xe0] sm:$0xff]
        %v809 = vld [vmem:[#allocation2 + $0xe8] sm:$0xff]
        %v810 = vld [vmem:[#allocation2 + $0xf0] sm:$0xff]
        %v811 = vld [vmem:[#allocation2 + $0xf8] sm:$0xff]
        %v812 = vld [vmem:[%s249] sm:$0x1]
        %v814 = vlaneseq
        %v815 = vshrl.u32 %v814, 7
        %v816 = vsub.s32 0, %v815
        %v817 = vrot.slane %v812, %v816
        %v819 = vadd.f32 %v780, %v817
        %v820 = vadd.f32 %v781, %v817
        %v821 = vadd.f32 %v782, %v817
        %v822 = vadd.f32 %v783, %v817
        %v823 = vadd.f32 %v784, %v817
        %v824 = vadd.f32 %v785, %v817
        %v825 = vadd.f32 %v786, %v817
        %v826 = vadd.f32 %v787, %v817
        %v827 = vadd.f32 %v788, %v817
        %v828 = vadd.f32 %v789, %v817
        %v829 = vadd.f32 %v790, %v817
        %v830 = vadd.f32 %v791, %v817
        %v831 = vadd.f32 %v792, %v817
        %v832 = vadd.f32 %v793, %v817
        %v833 = vadd.f32 %v794, %v817
        %v834 = vadd.f32 %v795, %v817
        %v835 = vadd.f32 %v796, %v817
        %v836 = vadd.f32 %v797, %v817
        %v837 = vadd.f32 %v798, %v817
        %v838 = vadd.f32 %v799, %v817
        %v839 = vadd.f32 %v800, %v817
        %v840 = vadd.f32 %v801, %v817
        %v841 = vadd.f32 %v802, %v817
        %v842 = vadd.f32 %v803, %v817
        %v843 = vadd.f32 %v804, %v817
        %v844 = vadd.f32 %v805, %v817
        %v845 = vadd.f32 %v806, %v817
        %v846 = vadd.f32 %v807, %v817
        %v847 = vadd.f32 %v808, %v817
        %v848 = vadd.f32 %v809, %v817
        %v849 = vadd.f32 %v810, %v817
        %v850 = vadd.f32 %v811, %v817
        %v851 = vtanh.pop %v819
        %v852 = vtanh.pop %v820
        %v853 = vtanh.pop %v821
        %v854 = vtanh.pop %v822
        %v855 = vtanh.pop %v823
        %v856 = vtanh.pop %v824
        %v857 = vtanh.pop %v825
        %v858 = vtanh.pop %v826
        %v859 = vtanh.pop %v827
        %v860 = vtanh.pop %v828
        %v861 = vtanh.pop %v829
        %v862 = vtanh.pop %v830
        %v863 = vtanh.pop %v831
        %v864 = vtanh.pop %v832
        %v865 = vtanh.pop %v833
        %v866 = vtanh.pop %v834
        %v867 = vtanh.pop %v835
        %v868 = vtanh.pop %v836
        %v869 = vtanh.pop %v837
        %v870 = vtanh.pop %v838
        %v871 = vtanh.pop %v839
        %v872 = vtanh.pop %v840
        %v873 = vtanh.pop %v841
        %v874 = vtanh.pop %v842
        %v875 = vtanh.pop %v843
        %v876 = vtanh.pop %v844
        %v877 = vtanh.pop %v845
        %v878 = vtanh.pop %v846
        %v879 = vtanh.pop %v847
        %v880 = vtanh.pop %v848
        %v881 = vtanh.pop %v849
        %v882 = vtanh.pop %v850
        %883 = vst [vmem:[%s257] sm:$0xff] %v851
        %884 = vst [vmem:[%s257 + $0x8] sm:$0xff] %v852
        %885 = vst [vmem:[%s257 + $0x10] sm:$0xff] %v853
        %886 = vst [vmem:[%s257 + $0x18] sm:$0xff] %v854
        %887 = vst [vmem:[%s257 + $0x20] sm:$0xff] %v855
        %888 = vst [vmem:[%s257 + $0x28] sm:$0xff] %v856
        %889 = vst [vmem:[%s257 + $0x30] sm:$0xff] %v857
        %890 = vst [vmem:[%s257 + $0x38] sm:$0xff] %v858
        %891 = vst [vmem:[%s257 + $0x40] sm:$0xff] %v859
        %892 = vst [vmem:[%s257 + $0x48] sm:$0xff] %v860
        %893 = vst [vmem:[%s257 + $0x50] sm:$0xff] %v861
        %894 = vst [vmem:[%s257 + $0x58] sm:$0xff] %v862
        %895 = vst [vmem:[%s257 + $0x60] sm:$0xff] %v863
        %896 = vst [vmem:[%s257 + $0x68] sm:$0xff] %v864
        %897 = vst [vmem:[%s257 + $0x70] sm:$0xff] %v865
        %898 = vst [vmem:[%s257 + $0x78] sm:$0xff] %v866
        %899 = vst [vmem:[%s257 + $0x80] sm:$0xff] %v867
        %900 = vst [vmem:[%s257 + $0x88] sm:$0xff] %v868
        %901 = vst [vmem:[%s257 + $0x90] sm:$0xff] %v869
        %902 = vst [vmem:[%s257 + $0x98] sm:$0xff] %v870
        %903 = vst [vmem:[%s257 + $0xa0] sm:$0xff] %v871
        %904 = vst [vmem:[%s257 + $0xa8] sm:$0xff] %v872
        %905 = vst [vmem:[%s257 + $0xb0] sm:$0xff] %v873
        %906 = vst [vmem:[%s257 + $0xb8] sm:$0xff] %v874
        %907 = vst [vmem:[%s257 + $0xc0] sm:$0xff] %v875
        %908 = vst [vmem:[%s257 + $0xc8] sm:$0xff] %v876
        %909 = vst [vmem:[%s257 + $0xd0] sm:$0xff] %v877
        %910 = vst [vmem:[%s257 + $0xd8] sm:$0xff] %v878
        %911 = vst [vmem:[%s257 + $0xe0] sm:$0xff] %v879
        %912 = vst [vmem:[%s257 + $0xe8] sm:$0xff] %v880
        %913 = vst [vmem:[%s257 + $0xf0] sm:$0xff] %v881
        %914 = vst [vmem:[%s257 + $0xf8] sm:$0xff] %v882
      $region40: #{_lambda_.52} parent=31 // pred_fallthru
        _
      %s915 = smul.u32 32, %s19
      %p916 = scmp.lt.s32.totalorder %s915, 63
      %s917 = scalar_select %p916, %s915, 63
      %p918 = scmp.lt.s32.totalorder %s20, 0
      %s919 = scalar_select %p918, %s20, 0
      %s920 = sadd.s32 %s919, %s917
      %s921 = smul.addr %s920, 8
      %s922 = scalar_lea.vmem %s3, %s921
      // Predicated region
      $region41: #{_lambda_.52} parent=31 // pred_check
        %p923 = pneg %p135
      $region42: #{_lambda_.52} parent=31 // pred_check_branch
        %925 = sbr.rel (%p923) target = $region44
      $region43: #{_lambda_.52} parent=31 // pred_region
        %s926 = smul.u32 32, %s19
      $region44: #{_lambda_.52} parent=31 // pred_fallthru
        _
    $region32: #{_lambda_.52} parent=5 // pred_fallthru
      _
    %p927 = scmp.le.s32.totalorder 2, %s9
    // Predicated region
    $region45: #{_lambda_.52} parent=5 // pred_check
      %p928 = pneg %p927
    $region46: #{_lambda_.52} parent=5 // pred_check_branch
      %930 = sbr.rel (%p928) target = $region48
    $region47: #{_lambda_.52} parent=5 // pred_region
      %s931 = ssub.s32 %s9, 2
      // Predicated region
      $region49: #{_lambda_.52} parent=47 // pred_check
        %p932 = pneg %p141
      $region50: #{_lambda_.52} parent=47 // pred_check_branch
        %934 = sbr.rel (%p932) target = $region52
      $region51: #{_lambda_.52} parent=47 // pred_region
        %s935 = smul.u32 32, %s22
        %p936 = scmp.lt.s32.totalorder %s935, 63
        %s937 = scalar_select %p936, %s935, 63
        %p938 = scmp.lt.s32.totalorder %s23, 0
        %s939 = scalar_select %p938, %s23, 0
        %s940 = sadd.s32 %s939, %s937
        %s941 = smul.addr %s940, 8
        %s942 = scalar_lea.vmem %s3, %s941
      $region52: #{_lambda_.52} parent=47 // pred_fallthru
        _
    $region48: #{_lambda_.52} parent=5 // pred_fallthru
      _
  $region6: #{_lambda_.52} parent=0 // loop_footer
    %s13 = sadd.s32 1, %s9
  $region7: #{_lambda_.52} parent=0 // loop_footer_branch
    %8 = sbr.rel target = $region3
  $region8: #{_lambda_.52} parent=0 // loop_exit
    _

</llo_original>
